<compile_context>
chip_gen: v5e
topology: v5e:2x2
jax: 0.10.0
libtpu: 0.0.40
codegen_flags: <defaults>
</compile_context>

<pallas_src>
import functools

import jax
import jax.numpy as jnp
from jax.experimental import pallas as pl
from jax.experimental.pallas import tpu as pltpu


def _fused_lstm_kernel(x_ref, wih_ref, whh_ref, b_ref, out_ref,
                       xbuf, gbuf, *, seq_len, batch, hidden, stages):
    """Fused multi-layer LSTM forward.

    x_ref:   (S*B, H)      flattened input sequence (time-major)
    wih_ref: (L, H, 4H)    W_ih^T per layer
    whh_ref: (L, H, 4H)    W_hh^T per layer
    b_ref:   (L, 1, 4H)    b_ih + b_hh per layer
    out_ref: (B, H)        sigmoid(h_T of last layer)
    xbuf:    (S*B, H) f32  scratch holding the current layer's output sequence
    gbuf:    (S*B, 4H) f32 scratch holding the hoisted input projection
    """
    S, B, H = seq_len, batch, hidden

    # Zero initial state for layer 0; thereafter (h, c) chain across layers,
    # exactly as the PyTorch forward passes (h, c) from block i-1 to block i.
    h = jnp.zeros((B, H), jnp.float32)
    c = jnp.zeros((B, H), jnp.float32)

    for l in range(stages):
        wih = wih_ref[l]           # (H, 4H)
        whh = whh_ref[l]           # (H, 4H)
        bias = b_ref[l]            # (1, 4H)

        # Hoisted (non-recurrent) input projection + bias for the whole
        # sequence: one (S*B, H) x (H, 4H) MXU pass per layer.
        src = x_ref[...].astype(jnp.float32) if l == 0 else xbuf[...]
        gbuf[...] = jnp.dot(src, wih, preferred_element_type=jnp.float32) + bias

        last_layer = (l == stages - 1)

        # Sequential recurrence, fully unrolled (S is small and static).
        for t in range(S):
            g = gbuf[t * B:(t + 1) * B, :] + jnp.dot(
                h, whh, preferred_element_type=jnp.float32)      # (B, 4H)

            i_g = jax.nn.sigmoid(g[:, 0 * H:1 * H])
            f_g = jax.nn.sigmoid(g[:, 1 * H:2 * H])
            g_g = jnp.tanh(g[:, 2 * H:3 * H])
            o_g = jax.nn.sigmoid(g[:, 3 * H:4 * H])

            c = f_g * c + i_g * g_g
            h = o_g * jnp.tanh(c)

            if not last_layer:
                # Next layer's input sequence; not needed for the last layer.
                xbuf[t * B:(t + 1) * B, :] = h

    # out = sigmoid(lstm_out[:, -1, :]) == sigmoid(h_T of the last layer).
    out_ref[...] = jax.nn.sigmoid(h).astype(out_ref.dtype)


def lstm_model(inputs, params, seq_len, height, width):
    """Forward pass matching the PyTorch LSTM module."""
    bs = inputs.shape[0]
    H = height * width
    stages = len(params)

    # (B, S, h, w) -> (S, B, H) -> (S*B, H): each timestep is one contiguous
    # (B=8 sublane, H=128 lane) dense block.
    x = inputs.reshape(bs, seq_len, H).transpose(1, 0, 2).reshape(seq_len * bs, H)

    wih = jnp.stack([p[0] for p in params])   # (L, H, 4H)
    whh = jnp.stack([p[1] for p in params])   # (L, H, 4H)
    b = jnp.stack([p[2] for p in params])     # (L, 1, 4H)

    kernel = functools.partial(_fused_lstm_kernel, seq_len=seq_len, batch=bs,
                               hidden=H, stages=stages)

    out = pl.pallas_call(
        kernel,
        out_shape=jax.ShapeDtypeStruct((bs, H), inputs.dtype),
        in_specs=[pl.BlockSpec(memory_space=pltpu.MemorySpace.VMEM)] * 4,
        out_specs=pl.BlockSpec(memory_space=pltpu.MemorySpace.VMEM),
        scratch_shapes=[
            pltpu.VMEM((seq_len * bs, H), jnp.float32),       # layer output seq
            pltpu.VMEM((seq_len * bs, 4 * H), jnp.float32),   # hoisted gates
        ],
        compiler_params=pltpu.CompilerParams(
            vmem_limit_bytes=32 * 1024 * 1024),
    )(x, wih, whh, b)

    return out.reshape(bs, height, width)


def init_params(key, hidden, stages_num):
    """PyTorch-style uniform(-1/sqrt(H), 1/sqrt(H)) init for each nn.LSTM layer."""
    k = 1.0 / jnp.sqrt(jnp.float32(hidden))
    params = []
    for _ in range(stages_num):
        key, k1, k2, k3, k4 = jax.random.split(key, 5)
        w_ih = jax.random.uniform(k1, (4 * hidden, hidden), jnp.float32, -k, k)
        w_hh = jax.random.uniform(k2, (4 * hidden, hidden), jnp.float32, -k, k)
        b_ih = jax.random.uniform(k3, (4 * hidden,), jnp.float32, -k, k)
        b_hh = jax.random.uniform(k4, (4 * hidden,), jnp.float32, -k, k)
        params.append((w_ih.T, w_hh.T, (b_ih + b_hh).reshape(1, 4 * hidden)))
    return params


def lstm_model_ref(inputs, params, seq_len, height, width):
    """Pure-JAX reference (lax.scan) for correctness checking."""
    bs = inputs.shape[0]
    H = height * width
    x = inputs.reshape(bs, seq_len, H).transpose(1, 0, 2)
    h = jnp.zeros((bs, H), jnp.float32)
    c = jnp.zeros((bs, H), jnp.float32)

    def step(carry, x_t, wih_t, whh_t, b):
        h, c = carry
        g = x_t @ wih_t + h @ whh_t + b
        i = jax.nn.sigmoid(g[:, 0 * H:1 * H])
        f = jax.nn.sigmoid(g[:, 1 * H:2 * H])
        gg = jnp.tanh(g[:, 2 * H:3 * H])
        o = jax.nn.sigmoid(g[:, 3 * H:4 * H])
        c = f * c + i * gg
        h = o * jnp.tanh(c)
        return (h, c), h

    for (wih_t, whh_t, b) in params:
        (h, c), x = jax.lax.scan(
            lambda carry, xt: step(carry, xt, wih_t, whh_t, b), (h, c), x)
    out = jax.nn.sigmoid(x[-1])
    return out.reshape(bs, height, width)


if __name__ == "__main__":
    seq_len, height, width, stages_num = 8, 8, 16, 2
    batch = 8
    hidden = height * width  # 128

    key = jax.random.PRNGKey(0)
    k_in, k_par = jax.random.split(key)
    inputs = jax.random.normal(k_in, (batch, seq_len, height, width), jnp.float32)
    params = init_params(k_par, hidden, stages_num)

    out = jax.block_until_ready(
        lstm_model(inputs, params, seq_len, height, width))
    ref = jax.block_until_ready(
        lstm_model_ref(inputs, params, seq_len, height, width))

    assert out.shape == (batch, height, width), out.shape
    assert jnp.allclose(out, ref, atol=2e-3, rtol=2e-3), float(
        jnp.max(jnp.abs(out - ref)))
    print("KERNEL_OK")
</pallas_src>

<mosaic_0001>
module attributes {stable_mosaic.version = 11 : i64} {
  func.func @_fused_lstm_kernel(%arg0: memref<64x128xf32, #tpu.memory_space<vmem>>, %arg1: memref<2x128x512xf32, #tpu.memory_space<vmem>>, %arg2: memref<2x128x512xf32, #tpu.memory_space<vmem>>, %arg3: memref<2x1x512xf32, #tpu.memory_space<vmem>>, %arg4: memref<8x128xf32, #tpu.memory_space<vmem>>, %arg5: memref<64x128xf32, #tpu.memory_space<vmem>>, %arg6: memref<64x512xf32, #tpu.memory_space<vmem>>) attributes {dimension_semantics = [], scalar_prefetch = 0 : i64, scratch_operands = 2 : i64, tpu.core_type = #tpu.core_type<tc>} {
    %cst = arith.constant 0.000000e+00 : f32
    %0 = vector.broadcast %cst : f32 to vector<8x128xf32>
    %cst_0 = arith.constant 0.000000e+00 : f32
    %1 = vector.broadcast %cst_0 : f32 to vector<8x128xf32>
    %c0 = arith.constant 0 : index
    %c0_1 = arith.constant 0 : index
    %c0_2 = arith.constant 0 : index
    %2 = vector.load %arg1[%c0, %c0_1, %c0_2] : memref<2x128x512xf32, #tpu.memory_space<vmem>>, vector<1x128x512xf32>
    %3 = vector.shape_cast %2 : vector<1x128x512xf32> to vector<128x512xf32>
    %c0_3 = arith.constant 0 : index
    %c0_4 = arith.constant 0 : index
    %c0_5 = arith.constant 0 : index
    %4 = vector.load %arg2[%c0_3, %c0_4, %c0_5] : memref<2x128x512xf32, #tpu.memory_space<vmem>>, vector<1x128x512xf32>
    %5 = vector.shape_cast %4 : vector<1x128x512xf32> to vector<128x512xf32>
    %c0_6 = arith.constant 0 : index
    %c0_7 = arith.constant 0 : index
    %c0_8 = arith.constant 0 : index
    %6 = vector.load %arg3[%c0_6, %c0_7, %c0_8] : memref<2x1x512xf32, #tpu.memory_space<vmem>>, vector<1x1x512xf32>
    %7 = vector.shape_cast %6 : vector<1x1x512xf32> to vector<1x512xf32>
    %c0_9 = arith.constant 0 : index
    %c0_10 = arith.constant 0 : index
    %8 = vector.load %arg0[%c0_9, %c0_10] : memref<64x128xf32, #tpu.memory_space<vmem>>, vector<64x128xf32>
    %cst_11 = arith.constant dense<0.000000e+00> : vector<64x512xf32>
    %9 = tpu.matmul %8, %3, %cst_11 {dimension_numbers = #tpu.dot_dimension_numbers<[1], [0], [0], [1], [0, 0, 1, 1], [], []>} : vector<64x128xf32>, vector<128x512xf32>, vector<64x512xf32> -> vector<64x512xf32>
    %10 = vector.broadcast %7 : vector<1x512xf32> to vector<64x512xf32>
    %11 = arith.addf %9, %10 : vector<64x512xf32>
    %c0_12 = arith.constant 0 : index
    %c0_13 = arith.constant 0 : index
    %12 = vector.load %arg6[%c0_12, %c0_13] : memref<64x512xf32, #tpu.memory_space<vmem>>, vector<64x512xf32>
    tpu.vector_store %arg6[%c0_12, %c0_13], %11 {strides = array<i32>} : memref<64x512xf32, #tpu.memory_space<vmem>>, vector<64x512xf32>,
    %c0_14 = arith.constant 0 : index
    %c0_15 = arith.constant 0 : index
    %13 = vector.load %arg6[%c0_14, %c0_15] : memref<64x512xf32, #tpu.memory_space<vmem>>, vector<8x512xf32>
    %cst_16 = arith.constant dense<0.000000e+00> : vector<8x512xf32>
    %14 = tpu.matmul %0, %5, %cst_16 {dimension_numbers = #tpu.dot_dimension_numbers<[1], [0], [0], [1], [0, 0, 1, 1], [], []>} : vector<8x128xf32>, vector<128x512xf32>, vector<8x512xf32> -> vector<8x512xf32>
    %15 = arith.addf %13, %14 : vector<8x512xf32>
    %16 = vector.extract_strided_slice %15 {offsets = [0, 0], sizes = [8, 128], strides = [1, 1]} : vector<8x512xf32> to vector<8x128xf32>
    %17 = arith.negf %16 : vector<8x128xf32>
    %18 = math.exp %17 : vector<8x128xf32>
    %cst_17 = arith.constant 1.000000e+00 : f32
    %19 = vector.broadcast %cst_17 : f32 to vector<8x128xf32>
    %20 = arith.addf %19, %18 : vector<8x128xf32>
    %21 = arith.divf %19, %20 : vector<8x128xf32>
    %22 = vector.extract_strided_slice %15 {offsets = [0, 128], sizes = [8, 128], strides = [1, 1]} : vector<8x512xf32> to vector<8x128xf32>
    %23 = arith.negf %22 : vector<8x128xf32>
    %24 = math.exp %23 : vector<8x128xf32>
    %cst_18 = arith.constant 1.000000e+00 : f32
    %25 = vector.broadcast %cst_18 : f32 to vector<8x128xf32>
    %26 = arith.addf %25, %24 : vector<8x128xf32>
    %27 = arith.divf %25, %26 : vector<8x128xf32>
    %28 = vector.extract_strided_slice %15 {offsets = [0, 256], sizes = [8, 128], strides = [1, 1]} : vector<8x512xf32> to vector<8x128xf32>
    %29 = math.tanh %28 : vector<8x128xf32>
    %30 = vector.extract_strided_slice %15 {offsets = [0, 384], sizes = [8, 128], strides = [1, 1]} : vector<8x512xf32> to vector<8x128xf32>
    %31 = arith.negf %30 : vector<8x128xf32>
    %32 = math.exp %31 : vector<8x128xf32>
    %cst_19 = arith.constant 1.000000e+00 : f32
    %33 = vector.broadcast %cst_19 : f32 to vector<8x128xf32>
    %34 = arith.addf %33, %32 : vector<8x128xf32>
    %35 = arith.divf %33, %34 : vector<8x128xf32>
    %36 = arith.mulf %27, %1 : vector<8x128xf32>
    %37 = arith.mulf %21, %29 : vector<8x128xf32>
    %38 = arith.addf %36, %37 : vector<8x128xf32>
    %39 = math.tanh %38 : vector<8x128xf32>
    %40 = arith.mulf %35, %39 : vector<8x128xf32>
    %c0_20 = arith.constant 0 : index
    %c0_21 = arith.constant 0 : index
    %41 = vector.load %arg5[%c0_20, %c0_21] : memref<64x128xf32, #tpu.memory_space<vmem>>, vector<8x128xf32>
    tpu.vector_store %arg5[%c0_20, %c0_21], %40 {strides = array<i32>} : memref<64x128xf32, #tpu.memory_space<vmem>>, vector<8x128xf32>,
    %c8 = arith.constant 8 : index
    %c0_22 = arith.constant 0 : index
    %42 = vector.load %arg6[%c8, %c0_22] : memref<64x512xf32, #tpu.memory_space<vmem>>, vector<8x512xf32>
    %cst_23 = arith.constant dense<0.000000e+00> : vector<8x512xf32>
    %43 = tpu.matmul %40, %5, %cst_23 {dimension_numbers = #tpu.dot_dimension_numbers<[1], [0], [0], [1], [0, 0, 1, 1], [], []>} : vector<8x128xf32>, vector<128x512xf32>, vector<8x512xf32> -> vector<8x512xf32>
    %44 = arith.addf %42, %43 : vector<8x512xf32>
    %45 = vector.extract_strided_slice %44 {offsets = [0, 0], sizes = [8, 128], strides = [1, 1]} : vector<8x512xf32> to vector<8x128xf32>
    %46 = arith.negf %45 : vector<8x128xf32>
    %47 = math.exp %46 : vector<8x128xf32>
    %cst_24 = arith.constant 1.000000e+00 : f32
    %48 = vector.broadcast %cst_24 : f32 to vector<8x128xf32>
    %49 = arith.addf %48, %47 : vector<8x128xf32>
    %50 = arith.divf %48, %49 : vector<8x128xf32>
    %51 = vector.extract_strided_slice %44 {offsets = [0, 128], sizes = [8, 128], strides = [1, 1]} : vector<8x512xf32> to vector<8x128xf32>
    %52 = arith.negf %51 : vector<8x128xf32>
    %53 = math.exp %52 : vector<8x128xf32>
    %cst_25 = arith.constant 1.000000e+00 : f32
    %54 = vector.broadcast %cst_25 : f32 to vector<8x128xf32>
    %55 = arith.addf %54, %53 : vector<8x128xf32>
    %56 = arith.divf %54, %55 : vector<8x128xf32>
    %57 = vector.extract_strided_slice %44 {offsets = [0, 256], sizes = [8, 128], strides = [1, 1]} : vector<8x512xf32> to vector<8x128xf32>
    %58 = math.tanh %57 : vector<8x128xf32>
    %59 = vector.extract_strided_slice %44 {offsets = [0, 384], sizes = [8, 128], strides = [1, 1]} : vector<8x512xf32> to vector<8x128xf32>
    %60 = arith.negf %59 : vector<8x128xf32>
    %61 = math.exp %60 : vector<8x128xf32>
    %cst_26 = arith.constant 1.000000e+00 : f32
    %62 = vector.broadcast %cst_26 : f32 to vector<8x128xf32>
    %63 = arith.addf %62, %61 : vector<8x128xf32>
    %64 = arith.divf %62, %63 : vector<8x128xf32>
    %65 = arith.mulf %56, %38 : vector<8x128xf32>
    %66 = arith.mulf %50, %58 : vector<8x128xf32>
    %67 = arith.addf %65, %66 : vector<8x128xf32>
    %68 = math.tanh %67 : vector<8x128xf32>
    %69 = arith.mulf %64, %68 : vector<8x128xf32>
    %c8_27 = arith.constant 8 : index
    %c0_28 = arith.constant 0 : index
    %70 = vector.load %arg5[%c8_27, %c0_28] : memref<64x128xf32, #tpu.memory_space<vmem>>, vector<8x128xf32>
    tpu.vector_store %arg5[%c8_27, %c0_28], %69 {strides = array<i32>} : memref<64x128xf32, #tpu.memory_space<vmem>>, vector<8x128xf32>,
    %c16 = arith.constant 16 : index
    %c0_29 = arith.constant 0 : index
    %71 = vector.load %arg6[%c16, %c0_29] : memref<64x512xf32, #tpu.memory_space<vmem>>, vector<8x512xf32>
    %cst_30 = arith.constant dense<0.000000e+00> : vector<8x512xf32>
    %72 = tpu.matmul %69, %5, %cst_30 {dimension_numbers = #tpu.dot_dimension_numbers<[1], [0], [0], [1], [0, 0, 1, 1], [], []>} : vector<8x128xf32>, vector<128x512xf32>, vector<8x512xf32> -> vector<8x512xf32>
    %73 = arith.addf %71, %72 : vector<8x512xf32>
    %74 = vector.extract_strided_slice %73 {offsets = [0, 0], sizes = [8, 128], strides = [1, 1]} : vector<8x512xf32> to vector<8x128xf32>
    %75 = arith.negf %74 : vector<8x128xf32>
    %76 = math.exp %75 : vector<8x128xf32>
    %cst_31 = arith.constant 1.000000e+00 : f32
    %77 = vector.broadcast %cst_31 : f32 to vector<8x128xf32>
    %78 = arith.addf %77, %76 : vector<8x128xf32>
    %79 = arith.divf %77, %78 : vector<8x128xf32>
    %80 = vector.extract_strided_slice %73 {offsets = [0, 128], sizes = [8, 128], strides = [1, 1]} : vector<8x512xf32> to vector<8x128xf32>
    %81 = arith.negf %80 : vector<8x128xf32>
    %82 = math.exp %81 : vector<8x128xf32>
    %cst_32 = arith.constant 1.000000e+00 : f32
    %83 = vector.broadcast %cst_32 : f32 to vector<8x128xf32>
    %84 = arith.addf %83, %82 : vector<8x128xf32>
    %85 = arith.divf %83, %84 : vector<8x128xf32>
    %86 = vector.extract_strided_slice %73 {offsets = [0, 256], sizes = [8, 128], strides = [1, 1]} : vector<8x512xf32> to vector<8x128xf32>
    %87 = math.tanh %86 : vector<8x128xf32>
    %88 = vector.extract_strided_slice %73 {offsets = [0, 384], sizes = [8, 128], strides = [1, 1]} : vector<8x512xf32> to vector<8x128xf32>
    %89 = arith.negf %88 : vector<8x128xf32>
    %90 = math.exp %89 : vector<8x128xf32>
    %cst_33 = arith.constant 1.000000e+00 : f32
    %91 = vector.broadcast %cst_33 : f32 to vector<8x128xf32>
    %92 = arith.addf %91, %90 : vector<8x128xf32>
    %93 = arith.divf %91, %92 : vector<8x128xf32>
    %94 = arith.mulf %85, %67 : vector<8x128xf32>
    %95 = arith.mulf %79, %87 : vector<8x128xf32>
    %96 = arith.addf %94, %95 : vector<8x128xf32>
    %97 = math.tanh %96 : vector<8x128xf32>
    %98 = arith.mulf %93, %97 : vector<8x128xf32>
    %c16_34 = arith.constant 16 : index
    %c0_35 = arith.constant 0 : index
    %99 = vector.load %arg5[%c16_34, %c0_35] : memref<64x128xf32, #tpu.memory_space<vmem>>, vector<8x128xf32>
    tpu.vector_store %arg5[%c16_34, %c0_35], %98 {strides = array<i32>} : memref<64x128xf32, #tpu.memory_space<vmem>>, vector<8x128xf32>,
    %c24 = arith.constant 24 : index
    %c0_36 = arith.constant 0 : index
    %100 = vector.load %arg6[%c24, %c0_36] : memref<64x512xf32, #tpu.memory_space<vmem>>, vector<8x512xf32>
    %cst_37 = arith.constant dense<0.000000e+00> : vector<8x512xf32>
    %101 = tpu.matmul %98, %5, %cst_37 {dimension_numbers = #tpu.dot_dimension_numbers<[1], [0], [0], [1], [0, 0, 1, 1], [], []>} : vector<8x128xf32>, vector<128x512xf32>, vector<8x512xf32> -> vector<8x512xf32>
    %102 = arith.addf %100, %101 : vector<8x512xf32>
    %103 = vector.extract_strided_slice %102 {offsets = [0, 0], sizes = [8, 128], strides = [1, 1]} : vector<8x512xf32> to vector<8x128xf32>
    %104 = arith.negf %103 : vector<8x128xf32>
    %105 = math.exp %104 : vector<8x128xf32>
    %cst_38 = arith.constant 1.000000e+00 : f32
    %106 = vector.broadcast %cst_38 : f32 to vector<8x128xf32>
    %107 = arith.addf %106, %105 : vector<8x128xf32>
    %108 = arith.divf %106, %107 : vector<8x128xf32>
    %109 = vector.extract_strided_slice %102 {offsets = [0, 128], sizes = [8, 128], strides = [1, 1]} : vector<8x512xf32> to vector<8x128xf32>
    %110 = arith.negf %109 : vector<8x128xf32>
    %111 = math.exp %110 : vector<8x128xf32>
    %cst_39 = arith.constant 1.000000e+00 : f32
    %112 = vector.broadcast %cst_39 : f32 to vector<8x128xf32>
    %113 = arith.addf %112, %111 : vector<8x128xf32>
    %114 = arith.divf %112, %113 : vector<8x128xf32>
    %115 = vector.extract_strided_slice %102 {offsets = [0, 256], sizes = [8, 128], strides = [1, 1]} : vector<8x512xf32> to vector<8x128xf32>
    %116 = math.tanh %115 : vector<8x128xf32>
    %117 = vector.extract_strided_slice %102 {offsets = [0, 384], sizes = [8, 128], strides = [1, 1]} : vector<8x512xf32> to vector<8x128xf32>
    %118 = arith.negf %117 : vector<8x128xf32>
    %119 = math.exp %118 : vector<8x128xf32>
    %cst_40 = arith.constant 1.000000e+00 : f32
    %120 = vector.broadcast %cst_40 : f32 to vector<8x128xf32>
    %121 = arith.addf %120, %119 : vector<8x128xf32>
    %122 = arith.divf %120, %121 : vector<8x128xf32>
    %123 = arith.mulf %114, %96 : vector<8x128xf32>
    %124 = arith.mulf %108, %116 : vector<8x128xf32>
    %125 = arith.addf %123, %124 : vector<8x128xf32>
    %126 = math.tanh %125 : vector<8x128xf32>
    %127 = arith.mulf %122, %126 : vector<8x128xf32>
    %c24_41 = arith.constant 24 : index
    %c0_42 = arith.constant 0 : index
    %128 = vector.load %arg5[%c24_41, %c0_42] : memref<64x128xf32, #tpu.memory_space<vmem>>, vector<8x128xf32>
    tpu.vector_store %arg5[%c24_41, %c0_42], %127 {strides = array<i32>} : memref<64x128xf32, #tpu.memory_space<vmem>>, vector<8x128xf32>,
    %c32 = arith.constant 32 : index
    %c0_43 = arith.constant 0 : index
    %129 = vector.load %arg6[%c32, %c0_43] : memref<64x512xf32, #tpu.memory_space<vmem>>, vector<8x512xf32>
    %cst_44 = arith.constant dense<0.000000e+00> : vector<8x512xf32>
    %130 = tpu.matmul %127, %5, %cst_44 {dimension_numbers = #tpu.dot_dimension_numbers<[1], [0], [0], [1], [0, 0, 1, 1], [], []>} : vector<8x128xf32>, vector<128x512xf32>, vector<8x512xf32> -> vector<8x512xf32>
    %131 = arith.addf %129, %130 : vector<8x512xf32>
    %132 = vector.extract_strided_slice %131 {offsets = [0, 0], sizes = [8, 128], strides = [1, 1]} : vector<8x512xf32> to vector<8x128xf32>
    %133 = arith.negf %132 : vector<8x128xf32>
    %134 = math.exp %133 : vector<8x128xf32>
    %cst_45 = arith.constant 1.000000e+00 : f32
    %135 = vector.broadcast %cst_45 : f32 to vector<8x128xf32>
    %136 = arith.addf %135, %134 : vector<8x128xf32>
    %137 = arith.divf %135, %136 : vector<8x128xf32>
    %138 = vector.extract_strided_slice %131 {offsets = [0, 128], sizes = [8, 128], strides = [1, 1]} : vector<8x512xf32> to vector<8x128xf32>
    %139 = arith.negf %138 : vector<8x128xf32>
    %140 = math.exp %139 : vector<8x128xf32>
    %cst_46 = arith.constant 1.000000e+00 : f32
    %141 = vector.broadcast %cst_46 : f32 to vector<8x128xf32>
    %142 = arith.addf %141, %140 : vector<8x128xf32>
    %143 = arith.divf %141, %142 : vector<8x128xf32>
    %144 = vector.extract_strided_slice %131 {offsets = [0, 256], sizes = [8, 128], strides = [1, 1]} : vector<8x512xf32> to vector<8x128xf32>
    %145 = math.tanh %144 : vector<8x128xf32>
    %146 = vector.extract_strided_slice %131 {offsets = [0, 384], sizes = [8, 128], strides = [1, 1]} : vector<8x512xf32> to vector<8x128xf32>
    %147 = arith.negf %146 : vector<8x128xf32>
    %148 = math.exp %147 : vector<8x128xf32>
    %cst_47 = arith.constant 1.000000e+00 : f32
    %149 = vector.broadcast %cst_47 : f32 to vector<8x128xf32>
    %150 = arith.addf %149, %148 : vector<8x128xf32>
    %151 = arith.divf %149, %150 : vector<8x128xf32>
    %152 = arith.mulf %143, %125 : vector<8x128xf32>
    %153 = arith.mulf %137, %145 : vector<8x128xf32>
    %154 = arith.addf %152, %153 : vector<8x128xf32>
    %155 = math.tanh %154 : vector<8x128xf32>
    %156 = arith.mulf %151, %155 : vector<8x128xf32>
    %c32_48 = arith.constant 32 : index
    %c0_49 = arith.constant 0 : index
    %157 = vector.load %arg5[%c32_48, %c0_49] : memref<64x128xf32, #tpu.memory_space<vmem>>, vector<8x128xf32>
    tpu.vector_store %arg5[%c32_48, %c0_49], %156 {strides = array<i32>} : memref<64x128xf32, #tpu.memory_space<vmem>>, vector<8x128xf32>,
    %c40 = arith.constant 40 : index
    %c0_50 = arith.constant 0 : index
    %158 = vector.load %arg6[%c40, %c0_50] : memref<64x512xf32, #tpu.memory_space<vmem>>, vector<8x512xf32>
    %cst_51 = arith.constant dense<0.000000e+00> : vector<8x512xf32>
    %159 = tpu.matmul %156, %5, %cst_51 {dimension_numbers = #tpu.dot_dimension_numbers<[1], [0], [0], [1], [0, 0, 1, 1], [], []>} : vector<8x128xf32>, vector<128x512xf32>, vector<8x512xf32> -> vector<8x512xf32>
    %160 = arith.addf %158, %159 : vector<8x512xf32>
    %161 = vector.extract_strided_slice %160 {offsets = [0, 0], sizes = [8, 128], strides = [1, 1]} : vector<8x512xf32> to vector<8x128xf32>
    %162 = arith.negf %161 : vector<8x128xf32>
    %163 = math.exp %162 : vector<8x128xf32>
    %cst_52 = arith.constant 1.000000e+00 : f32
    %164 = vector.broadcast %cst_52 : f32 to vector<8x128xf32>
    %165 = arith.addf %164, %163 : vector<8x128xf32>
    %166 = arith.divf %164, %165 : vector<8x128xf32>
    %167 = vector.extract_strided_slice %160 {offsets = [0, 128], sizes = [8, 128], strides = [1, 1]} : vector<8x512xf32> to vector<8x128xf32>
    %168 = arith.negf %167 : vector<8x128xf32>
    %169 = math.exp %168 : vector<8x128xf32>
    %cst_53 = arith.constant 1.000000e+00 : f32
    %170 = vector.broadcast %cst_53 : f32 to vector<8x128xf32>
    %171 = arith.addf %170, %169 : vector<8x128xf32>
    %172 = arith.divf %170, %171 : vector<8x128xf32>
    %173 = vector.extract_strided_slice %160 {offsets = [0, 256], sizes = [8, 128], strides = [1, 1]} : vector<8x512xf32> to vector<8x128xf32>
    %174 = math.tanh %173 : vector<8x128xf32>
    %175 = vector.extract_strided_slice %160 {offsets = [0, 384], sizes = [8, 128], strides = [1, 1]} : vector<8x512xf32> to vector<8x128xf32>
    %176 = arith.negf %175 : vector<8x128xf32>
    %177 = math.exp %176 : vector<8x128xf32>
    %cst_54 = arith.constant 1.000000e+00 : f32
    %178 = vector.broadcast %cst_54 : f32 to vector<8x128xf32>
    %179 = arith.addf %178, %177 : vector<8x128xf32>
    %180 = arith.divf %178, %179 : vector<8x128xf32>
    %181 = arith.mulf %172, %154 : vector<8x128xf32>
    %182 = arith.mulf %166, %174 : vector<8x128xf32>
    %183 = arith.addf %181, %182 : vector<8x128xf32>
    %184 = math.tanh %183 : vector<8x128xf32>
    %185 = arith.mulf %180, %184 : vector<8x128xf32>
    %c40_55 = arith.constant 40 : index
    %c0_56 = arith.constant 0 : index
    %186 = vector.load %arg5[%c40_55, %c0_56] : memref<64x128xf32, #tpu.memory_space<vmem>>, vector<8x128xf32>
    tpu.vector_store %arg5[%c40_55, %c0_56], %185 {strides = array<i32>} : memref<64x128xf32, #tpu.memory_space<vmem>>, vector<8x128xf32>,
    %c48 = arith.constant 48 : index
    %c0_57 = arith.constant 0 : index
    %187 = vector.load %arg6[%c48, %c0_57] : memref<64x512xf32, #tpu.memory_space<vmem>>, vector<8x512xf32>
    %cst_58 = arith.constant dense<0.000000e+00> : vector<8x512xf32>
    %188 = tpu.matmul %185, %5, %cst_58 {dimension_numbers = #tpu.dot_dimension_numbers<[1], [0], [0], [1], [0, 0, 1, 1], [], []>} : vector<8x128xf32>, vector<128x512xf32>, vector<8x512xf32> -> vector<8x512xf32>
    %189 = arith.addf %187, %188 : vector<8x512xf32>
    %190 = vector.extract_strided_slice %189 {offsets = [0, 0], sizes = [8, 128], strides = [1, 1]} : vector<8x512xf32> to vector<8x128xf32>
    %191 = arith.negf %190 : vector<8x128xf32>
    %192 = math.exp %191 : vector<8x128xf32>
    %cst_59 = arith.constant 1.000000e+00 : f32
    %193 = vector.broadcast %cst_59 : f32 to vector<8x128xf32>
    %194 = arith.addf %193, %192 : vector<8x128xf32>
    %195 = arith.divf %193, %194 : vector<8x128xf32>
    %196 = vector.extract_strided_slice %189 {offsets = [0, 128], sizes = [8, 128], strides = [1, 1]} : vector<8x512xf32> to vector<8x128xf32>
    %197 = arith.negf %196 : vector<8x128xf32>
    %198 = math.exp %197 : vector<8x128xf32>
    %cst_60 = arith.constant 1.000000e+00 : f32
    %199 = vector.broadcast %cst_60 : f32 to vector<8x128xf32>
    %200 = arith.addf %199, %198 : vector<8x128xf32>
    %201 = arith.divf %199, %200 : vector<8x128xf32>
    %202 = vector.extract_strided_slice %189 {offsets = [0, 256], sizes = [8, 128], strides = [1, 1]} : vector<8x512xf32> to vector<8x128xf32>
    %203 = math.tanh %202 : vector<8x128xf32>
    %204 = vector.extract_strided_slice %189 {offsets = [0, 384], sizes = [8, 128], strides = [1, 1]} : vector<8x512xf32> to vector<8x128xf32>
    %205 = arith.negf %204 : vector<8x128xf32>
    %206 = math.exp %205 : vector<8x128xf32>
    %cst_61 = arith.constant 1.000000e+00 : f32
    %207 = vector.broadcast %cst_61 : f32 to vector<8x128xf32>
    %208 = arith.addf %207, %206 : vector<8x128xf32>
    %209 = arith.divf %207, %208 : vector<8x128xf32>
    %210 = arith.mulf %201, %183 : vector<8x128xf32>
    %211 = arith.mulf %195, %203 : vector<8x128xf32>
    %212 = arith.addf %210, %211 : vector<8x128xf32>
    %213 = math.tanh %212 : vector<8x128xf32>
    %214 = arith.mulf %209, %213 : vector<8x128xf32>
    %c48_62 = arith.constant 48 : index
    %c0_63 = arith.constant 0 : index
    %215 = vector.load %arg5[%c48_62, %c0_63] : memref<64x128xf32, #tpu.memory_space<vmem>>, vector<8x128xf32>
    tpu.vector_store %arg5[%c48_62, %c0_63], %214 {strides = array<i32>} : memref<64x128xf32, #tpu.memory_space<vmem>>, vector<8x128xf32>,
    %c56 = arith.constant 56 : index
    %c0_64 = arith.constant 0 : index
    %216 = vector.load %arg6[%c56, %c0_64] : memref<64x512xf32, #tpu.memory_space<vmem>>, vector<8x512xf32>
    %cst_65 = arith.constant dense<0.000000e+00> : vector<8x512xf32>
    %217 = tpu.matmul %214, %5, %cst_65 {dimension_numbers = #tpu.dot_dimension_numbers<[1], [0], [0], [1], [0, 0, 1, 1], [], []>} : vector<8x128xf32>, vector<128x512xf32>, vector<8x512xf32> -> vector<8x512xf32>
    %218 = arith.addf %216, %217 : vector<8x512xf32>
    %219 = vector.extract_strided_slice %218 {offsets = [0, 0], sizes = [8, 128], strides = [1, 1]} : vector<8x512xf32> to vector<8x128xf32>
    %220 = arith.negf %219 : vector<8x128xf32>
    %221 = math.exp %220 : vector<8x128xf32>
    %cst_66 = arith.constant 1.000000e+00 : f32
    %222 = vector.broadcast %cst_66 : f32 to vector<8x128xf32>
    %223 = arith.addf %222, %221 : vector<8x128xf32>
    %224 = arith.divf %222, %223 : vector<8x128xf32>
    %225 = vector.extract_strided_slice %218 {offsets = [0, 128], sizes = [8, 128], strides = [1, 1]} : vector<8x512xf32> to vector<8x128xf32>
    %226 = arith.negf %225 : vector<8x128xf32>
    %227 = math.exp %226 : vector<8x128xf32>
    %cst_67 = arith.constant 1.000000e+00 : f32
    %228 = vector.broadcast %cst_67 : f32 to vector<8x128xf32>
    %229 = arith.addf %228, %227 : vector<8x128xf32>
    %230 = arith.divf %228, %229 : vector<8x128xf32>
    %231 = vector.extract_strided_slice %218 {offsets = [0, 256], sizes = [8, 128], strides = [1, 1]} : vector<8x512xf32> to vector<8x128xf32>
    %232 = math.tanh %231 : vector<8x128xf32>
    %233 = vector.extract_strided_slice %218 {offsets = [0, 384], sizes = [8, 128], strides = [1, 1]} : vector<8x512xf32> to vector<8x128xf32>
    %234 = arith.negf %233 : vector<8x128xf32>
    %235 = math.exp %234 : vector<8x128xf32>
    %cst_68 = arith.constant 1.000000e+00 : f32
    %236 = vector.broadcast %cst_68 : f32 to vector<8x128xf32>
    %237 = arith.addf %236, %235 : vector<8x128xf32>
    %238 = arith.divf %236, %237 : vector<8x128xf32>
    %239 = arith.mulf %230, %212 : vector<8x128xf32>
    %240 = arith.mulf %224, %232 : vector<8x128xf32>
    %241 = arith.addf %239, %240 : vector<8x128xf32>
    %242 = math.tanh %241 : vector<8x128xf32>
    %243 = arith.mulf %238, %242 : vector<8x128xf32>
    %c56_69 = arith.constant 56 : index
    %c0_70 = arith.constant 0 : index
    %244 = vector.load %arg5[%c56_69, %c0_70] : memref<64x128xf32, #tpu.memory_space<vmem>>, vector<8x128xf32>
    tpu.vector_store %arg5[%c56_69, %c0_70], %243 {strides = array<i32>} : memref<64x128xf32, #tpu.memory_space<vmem>>, vector<8x128xf32>,
    %c1 = arith.constant 1 : index
    %c0_71 = arith.constant 0 : index
    %c0_72 = arith.constant 0 : index
    %245 = vector.load %arg1[%c1, %c0_71, %c0_72] : memref<2x128x512xf32, #tpu.memory_space<vmem>>, vector<1x128x512xf32>
    %246 = vector.shape_cast %245 : vector<1x128x512xf32> to vector<128x512xf32>
    %c1_73 = arith.constant 1 : index
    %c0_74 = arith.constant 0 : index
    %c0_75 = arith.constant 0 : index
    %247 = vector.load %arg2[%c1_73, %c0_74, %c0_75] : memref<2x128x512xf32, #tpu.memory_space<vmem>>, vector<1x128x512xf32>
    %248 = vector.shape_cast %247 : vector<1x128x512xf32> to vector<128x512xf32>
    %c1_76 = arith.constant 1 : index
    %c0_77 = arith.constant 0 : index
    %c0_78 = arith.constant 0 : index
    %249 = vector.load %arg3[%c1_76, %c0_77, %c0_78] : memref<2x1x512xf32, #tpu.memory_space<vmem>>, vector<1x1x512xf32>
    %250 = vector.shape_cast %249 : vector<1x1x512xf32> to vector<1x512xf32>
    %c0_79 = arith.constant 0 : index
    %c0_80 = arith.constant 0 : index
    %251 = vector.load %arg5[%c0_79, %c0_80] : memref<64x128xf32, #tpu.memory_space<vmem>>, vector<64x128xf32>
    %cst_81 = arith.constant dense<0.000000e+00> : vector<64x512xf32>
    %252 = tpu.matmul %251, %246, %cst_81 {dimension_numbers = #tpu.dot_dimension_numbers<[1], [0], [0], [1], [0, 0, 1, 1], [], []>} : vector<64x128xf32>, vector<128x512xf32>, vector<64x512xf32> -> vector<64x512xf32>
    %253 = vector.broadcast %250 : vector<1x512xf32> to vector<64x512xf32>
    %254 = arith.addf %252, %253 : vector<64x512xf32>
    %c0_82 = arith.constant 0 : index
    %c0_83 = arith.constant 0 : index
    %255 = vector.load %arg6[%c0_82, %c0_83] : memref<64x512xf32, #tpu.memory_space<vmem>>, vector<64x512xf32>
    tpu.vector_store %arg6[%c0_82, %c0_83], %254 {strides = array<i32>} : memref<64x512xf32, #tpu.memory_space<vmem>>, vector<64x512xf32>,
    %c0_84 = arith.constant 0 : index
    %c0_85 = arith.constant 0 : index
    %256 = vector.load %arg6[%c0_84, %c0_85] : memref<64x512xf32, #tpu.memory_space<vmem>>, vector<8x512xf32>
    %cst_86 = arith.constant dense<0.000000e+00> : vector<8x512xf32>
    %257 = tpu.matmul %243, %248, %cst_86 {dimension_numbers = #tpu.dot_dimension_numbers<[1], [0], [0], [1], [0, 0, 1, 1], [], []>} : vector<8x128xf32>, vector<128x512xf32>, vector<8x512xf32> -> vector<8x512xf32>
    %258 = arith.addf %256, %257 : vector<8x512xf32>
    %259 = vector.extract_strided_slice %258 {offsets = [0, 0], sizes = [8, 128], strides = [1, 1]} : vector<8x512xf32> to vector<8x128xf32>
    %260 = arith.negf %259 : vector<8x128xf32>
    %261 = math.exp %260 : vector<8x128xf32>
    %cst_87 = arith.constant 1.000000e+00 : f32
    %262 = vector.broadcast %cst_87 : f32 to vector<8x128xf32>
    %263 = arith.addf %262, %261 : vector<8x128xf32>
    %264 = arith.divf %262, %263 : vector<8x128xf32>
    %265 = vector.extract_strided_slice %258 {offsets = [0, 128], sizes = [8, 128], strides = [1, 1]} : vector<8x512xf32> to vector<8x128xf32>
    %266 = arith.negf %265 : vector<8x128xf32>
    %267 = math.exp %266 : vector<8x128xf32>
    %cst_88 = arith.constant 1.000000e+00 : f32
    %268 = vector.broadcast %cst_88 : f32 to vector<8x128xf32>
    %269 = arith.addf %268, %267 : vector<8x128xf32>
    %270 = arith.divf %268, %269 : vector<8x128xf32>
    %271 = vector.extract_strided_slice %258 {offsets = [0, 256], sizes = [8, 128], strides = [1, 1]} : vector<8x512xf32> to vector<8x128xf32>
    %272 = math.tanh %271 : vector<8x128xf32>
    %273 = vector.extract_strided_slice %258 {offsets = [0, 384], sizes = [8, 128], strides = [1, 1]} : vector<8x512xf32> to vector<8x128xf32>
    %274 = arith.negf %273 : vector<8x128xf32>
    %275 = math.exp %274 : vector<8x128xf32>
    %cst_89 = arith.constant 1.000000e+00 : f32
    %276 = vector.broadcast %cst_89 : f32 to vector<8x128xf32>
    %277 = arith.addf %276, %275 : vector<8x128xf32>
    %278 = arith.divf %276, %277 : vector<8x128xf32>
    %279 = arith.mulf %270, %241 : vector<8x128xf32>
    %280 = arith.mulf %264, %272 : vector<8x128xf32>
    %281 = arith.addf %279, %280 : vector<8x128xf32>
    %282 = math.tanh %281 : vector<8x128xf32>
    %283 = arith.mulf %278, %282 : vector<8x128xf32>
    %c8_90 = arith.constant 8 : index
    %c0_91 = arith.constant 0 : index
    %284 = vector.load %arg6[%c8_90, %c0_91] : memref<64x512xf32, #tpu.memory_space<vmem>>, vector<8x512xf32>
    %cst_92 = arith.constant dense<0.000000e+00> : vector<8x512xf32>
    %285 = tpu.matmul %283, %248, %cst_92 {dimension_numbers = #tpu.dot_dimension_numbers<[1], [0], [0], [1], [0, 0, 1, 1], [], []>} : vector<8x128xf32>, vector<128x512xf32>, vector<8x512xf32> -> vector<8x512xf32>
    %286 = arith.addf %284, %285 : vector<8x512xf32>
    %287 = vector.extract_strided_slice %286 {offsets = [0, 0], sizes = [8, 128], strides = [1, 1]} : vector<8x512xf32> to vector<8x128xf32>
    %288 = arith.negf %287 : vector<8x128xf32>
    %289 = math.exp %288 : vector<8x128xf32>
    %cst_93 = arith.constant 1.000000e+00 : f32
    %290 = vector.broadcast %cst_93 : f32 to vector<8x128xf32>
    %291 = arith.addf %290, %289 : vector<8x128xf32>
    %292 = arith.divf %290, %291 : vector<8x128xf32>
    %293 = vector.extract_strided_slice %286 {offsets = [0, 128], sizes = [8, 128], strides = [1, 1]} : vector<8x512xf32> to vector<8x128xf32>
    %294 = arith.negf %293 : vector<8x128xf32>
    %295 = math.exp %294 : vector<8x128xf32>
    %cst_94 = arith.constant 1.000000e+00 : f32
    %296 = vector.broadcast %cst_94 : f32 to vector<8x128xf32>
    %297 = arith.addf %296, %295 : vector<8x128xf32>
    %298 = arith.divf %296, %297 : vector<8x128xf32>
    %299 = vector.extract_strided_slice %286 {offsets = [0, 256], sizes = [8, 128], strides = [1, 1]} : vector<8x512xf32> to vector<8x128xf32>
    %300 = math.tanh %299 : vector<8x128xf32>
    %301 = vector.extract_strided_slice %286 {offsets = [0, 384], sizes = [8, 128], strides = [1, 1]} : vector<8x512xf32> to vector<8x128xf32>
    %302 = arith.negf %301 : vector<8x128xf32>
    %303 = math.exp %302 : vector<8x128xf32>
    %cst_95 = arith.constant 1.000000e+00 : f32
    %304 = vector.broadcast %cst_95 : f32 to vector<8x128xf32>
    %305 = arith.addf %304, %303 : vector<8x128xf32>
    %306 = arith.divf %304, %305 : vector<8x128xf32>
    %307 = arith.mulf %298, %281 : vector<8x128xf32>
    %308 = arith.mulf %292, %300 : vector<8x128xf32>
    %309 = arith.addf %307, %308 : vector<8x128xf32>
    %310 = math.tanh %309 : vector<8x128xf32>
    %311 = arith.mulf %306, %310 : vector<8x128xf32>
    %c16_96 = arith.constant 16 : index
    %c0_97 = arith.constant 0 : index
    %312 = vector.load %arg6[%c16_96, %c0_97] : memref<64x512xf32, #tpu.memory_space<vmem>>, vector<8x512xf32>
    %cst_98 = arith.constant dense<0.000000e+00> : vector<8x512xf32>
    %313 = tpu.matmul %311, %248, %cst_98 {dimension_numbers = #tpu.dot_dimension_numbers<[1], [0], [0], [1], [0, 0, 1, 1], [], []>} : vector<8x128xf32>, vector<128x512xf32>, vector<8x512xf32> -> vector<8x512xf32>
    %314 = arith.addf %312, %313 : vector<8x512xf32>
    %315 = vector.extract_strided_slice %314 {offsets = [0, 0], sizes = [8, 128], strides = [1, 1]} : vector<8x512xf32> to vector<8x128xf32>
    %316 = arith.negf %315 : vector<8x128xf32>
    %317 = math.exp %316 : vector<8x128xf32>
    %cst_99 = arith.constant 1.000000e+00 : f32
    %318 = vector.broadcast %cst_99 : f32 to vector<8x128xf32>
    %319 = arith.addf %318, %317 : vector<8x128xf32>
    %320 = arith.divf %318, %319 : vector<8x128xf32>
    %321 = vector.extract_strided_slice %314 {offsets = [0, 128], sizes = [8, 128], strides = [1, 1]} : vector<8x512xf32> to vector<8x128xf32>
    %322 = arith.negf %321 : vector<8x128xf32>
    %323 = math.exp %322 : vector<8x128xf32>
    %cst_100 = arith.constant 1.000000e+00 : f32
    %324 = vector.broadcast %cst_100 : f32 to vector<8x128xf32>
    %325 = arith.addf %324, %323 : vector<8x128xf32>
    %326 = arith.divf %324, %325 : vector<8x128xf32>
    %327 = vector.extract_strided_slice %314 {offsets = [0, 256], sizes = [8, 128], strides = [1, 1]} : vector<8x512xf32> to vector<8x128xf32>
    %328 = math.tanh %327 : vector<8x128xf32>
    %329 = vector.extract_strided_slice %314 {offsets = [0, 384], sizes = [8, 128], strides = [1, 1]} : vector<8x512xf32> to vector<8x128xf32>
    %330 = arith.negf %329 : vector<8x128xf32>
    %331 = math.exp %330 : vector<8x128xf32>
    %cst_101 = arith.constant 1.000000e+00 : f32
    %332 = vector.broadcast %cst_101 : f32 to vector<8x128xf32>
    %333 = arith.addf %332, %331 : vector<8x128xf32>
    %334 = arith.divf %332, %333 : vector<8x128xf32>
    %335 = arith.mulf %326, %309 : vector<8x128xf32>
    %336 = arith.mulf %320, %328 : vector<8x128xf32>
    %337 = arith.addf %335, %336 : vector<8x128xf32>
    %338 = math.tanh %337 : vector<8x128xf32>
    %339 = arith.mulf %334, %338 : vector<8x128xf32>
    %c24_102 = arith.constant 24 : index
    %c0_103 = arith.constant 0 : index
    %340 = vector.load %arg6[%c24_102, %c0_103] : memref<64x512xf32, #tpu.memory_space<vmem>>, vector<8x512xf32>
    %cst_104 = arith.constant dense<0.000000e+00> : vector<8x512xf32>
    %341 = tpu.matmul %339, %248, %cst_104 {dimension_numbers = #tpu.dot_dimension_numbers<[1], [0], [0], [1], [0, 0, 1, 1], [], []>} : vector<8x128xf32>, vector<128x512xf32>, vector<8x512xf32> -> vector<8x512xf32>
    %342 = arith.addf %340, %341 : vector<8x512xf32>
    %343 = vector.extract_strided_slice %342 {offsets = [0, 0], sizes = [8, 128], strides = [1, 1]} : vector<8x512xf32> to vector<8x128xf32>
    %344 = arith.negf %343 : vector<8x128xf32>
    %345 = math.exp %344 : vector<8x128xf32>
    %cst_105 = arith.constant 1.000000e+00 : f32
    %346 = vector.broadcast %cst_105 : f32 to vector<8x128xf32>
    %347 = arith.addf %346, %345 : vector<8x128xf32>
    %348 = arith.divf %346, %347 : vector<8x128xf32>
    %349 = vector.extract_strided_slice %342 {offsets = [0, 128], sizes = [8, 128], strides = [1, 1]} : vector<8x512xf32> to vector<8x128xf32>
    %350 = arith.negf %349 : vector<8x128xf32>
    %351 = math.exp %350 : vector<8x128xf32>
    %cst_106 = arith.constant 1.000000e+00 : f32
    %352 = vector.broadcast %cst_106 : f32 to vector<8x128xf32>
    %353 = arith.addf %352, %351 : vector<8x128xf32>
    %354 = arith.divf %352, %353 : vector<8x128xf32>
    %355 = vector.extract_strided_slice %342 {offsets = [0, 256], sizes = [8, 128], strides = [1, 1]} : vector<8x512xf32> to vector<8x128xf32>
    %356 = math.tanh %355 : vector<8x128xf32>
    %357 = vector.extract_strided_slice %342 {offsets = [0, 384], sizes = [8, 128], strides = [1, 1]} : vector<8x512xf32> to vector<8x128xf32>
    %358 = arith.negf %357 : vector<8x128xf32>
    %359 = math.exp %358 : vector<8x128xf32>
    %cst_107 = arith.constant 1.000000e+00 : f32
    %360 = vector.broadcast %cst_107 : f32 to vector<8x128xf32>
    %361 = arith.addf %360, %359 : vector<8x128xf32>
    %362 = arith.divf %360, %361 : vector<8x128xf32>
    %363 = arith.mulf %354, %337 : vector<8x128xf32>
    %364 = arith.mulf %348, %356 : vector<8x128xf32>
    %365 = arith.addf %363, %364 : vector<8x128xf32>
    %366 = math.tanh %365 : vector<8x128xf32>
    %367 = arith.mulf %362, %366 : vector<8x128xf32>
    %c32_108 = arith.constant 32 : index
    %c0_109 = arith.constant 0 : index
    %368 = vector.load %arg6[%c32_108, %c0_109] : memref<64x512xf32, #tpu.memory_space<vmem>>, vector<8x512xf32>
    %cst_110 = arith.constant dense<0.000000e+00> : vector<8x512xf32>
    %369 = tpu.matmul %367, %248, %cst_110 {dimension_numbers = #tpu.dot_dimension_numbers<[1], [0], [0], [1], [0, 0, 1, 1], [], []>} : vector<8x128xf32>, vector<128x512xf32>, vector<8x512xf32> -> vector<8x512xf32>
    %370 = arith.addf %368, %369 : vector<8x512xf32>
    %371 = vector.extract_strided_slice %370 {offsets = [0, 0], sizes = [8, 128], strides = [1, 1]} : vector<8x512xf32> to vector<8x128xf32>
    %372 = arith.negf %371 : vector<8x128xf32>
    %373 = math.exp %372 : vector<8x128xf32>
    %cst_111 = arith.constant 1.000000e+00 : f32
    %374 = vector.broadcast %cst_111 : f32 to vector<8x128xf32>
    %375 = arith.addf %374, %373 : vector<8x128xf32>
    %376 = arith.divf %374, %375 : vector<8x128xf32>
    %377 = vector.extract_strided_slice %370 {offsets = [0, 128], sizes = [8, 128], strides = [1, 1]} : vector<8x512xf32> to vector<8x128xf32>
    %378 = arith.negf %377 : vector<8x128xf32>
    %379 = math.exp %378 : vector<8x128xf32>
    %cst_112 = arith.constant 1.000000e+00 : f32
    %380 = vector.broadcast %cst_112 : f32 to vector<8x128xf32>
    %381 = arith.addf %380, %379 : vector<8x128xf32>
    %382 = arith.divf %380, %381 : vector<8x128xf32>
    %383 = vector.extract_strided_slice %370 {offsets = [0, 256], sizes = [8, 128], strides = [1, 1]} : vector<8x512xf32> to vector<8x128xf32>
    %384 = math.tanh %383 : vector<8x128xf32>
    %385 = vector.extract_strided_slice %370 {offsets = [0, 384], sizes = [8, 128], strides = [1, 1]} : vector<8x512xf32> to vector<8x128xf32>
    %386 = arith.negf %385 : vector<8x128xf32>
    %387 = math.exp %386 : vector<8x128xf32>
    %cst_113 = arith.constant 1.000000e+00 : f32
    %388 = vector.broadcast %cst_113 : f32 to vector<8x128xf32>
    %389 = arith.addf %388, %387 : vector<8x128xf32>
    %390 = arith.divf %388, %389 : vector<8x128xf32>
    %391 = arith.mulf %382, %365 : vector<8x128xf32>
    %392 = arith.mulf %376, %384 : vector<8x128xf32>
    %393 = arith.addf %391, %392 : vector<8x128xf32>
    %394 = math.tanh %393 : vector<8x128xf32>
    %395 = arith.mulf %390, %394 : vector<8x128xf32>
    %c40_114 = arith.constant 40 : index
    %c0_115 = arith.constant 0 : index
    %396 = vector.load %arg6[%c40_114, %c0_115] : memref<64x512xf32, #tpu.memory_space<vmem>>, vector<8x512xf32>
    %cst_116 = arith.constant dense<0.000000e+00> : vector<8x512xf32>
    %397 = tpu.matmul %395, %248, %cst_116 {dimension_numbers = #tpu.dot_dimension_numbers<[1], [0], [0], [1], [0, 0, 1, 1], [], []>} : vector<8x128xf32>, vector<128x512xf32>, vector<8x512xf32> -> vector<8x512xf32>
    %398 = arith.addf %396, %397 : vector<8x512xf32>
    %399 = vector.extract_strided_slice %398 {offsets = [0, 0], sizes = [8, 128], strides = [1, 1]} : vector<8x512xf32> to vector<8x128xf32>
    %400 = arith.negf %399 : vector<8x128xf32>
    %401 = math.exp %400 : vector<8x128xf32>
    %cst_117 = arith.constant 1.000000e+00 : f32
    %402 = vector.broadcast %cst_117 : f32 to vector<8x128xf32>
    %403 = arith.addf %402, %401 : vector<8x128xf32>
    %404 = arith.divf %402, %403 : vector<8x128xf32>
    %405 = vector.extract_strided_slice %398 {offsets = [0, 128], sizes = [8, 128], strides = [1, 1]} : vector<8x512xf32> to vector<8x128xf32>
    %406 = arith.negf %405 : vector<8x128xf32>
    %407 = math.exp %406 : vector<8x128xf32>
    %cst_118 = arith.constant 1.000000e+00 : f32
    %408 = vector.broadcast %cst_118 : f32 to vector<8x128xf32>
    %409 = arith.addf %408, %407 : vector<8x128xf32>
    %410 = arith.divf %408, %409 : vector<8x128xf32>
    %411 = vector.extract_strided_slice %398 {offsets = [0, 256], sizes = [8, 128], strides = [1, 1]} : vector<8x512xf32> to vector<8x128xf32>
    %412 = math.tanh %411 : vector<8x128xf32>
    %413 = vector.extract_strided_slice %398 {offsets = [0, 384], sizes = [8, 128], strides = [1, 1]} : vector<8x512xf32> to vector<8x128xf32>
    %414 = arith.negf %413 : vector<8x128xf32>
    %415 = math.exp %414 : vector<8x128xf32>
    %cst_119 = arith.constant 1.000000e+00 : f32
    %416 = vector.broadcast %cst_119 : f32 to vector<8x128xf32>
    %417 = arith.addf %416, %415 : vector<8x128xf32>
    %418 = arith.divf %416, %417 : vector<8x128xf32>
    %419 = arith.mulf %410, %393 : vector<8x128xf32>
    %420 = arith.mulf %404, %412 : vector<8x128xf32>
    %421 = arith.addf %419, %420 : vector<8x128xf32>
    %422 = math.tanh %421 : vector<8x128xf32>
    %423 = arith.mulf %418, %422 : vector<8x128xf32>
    %c48_120 = arith.constant 48 : index
    %c0_121 = arith.constant 0 : index
    %424 = vector.load %arg6[%c48_120, %c0_121] : memref<64x512xf32, #tpu.memory_space<vmem>>, vector<8x512xf32>
    %cst_122 = arith.constant dense<0.000000e+00> : vector<8x512xf32>
    %425 = tpu.matmul %423, %248, %cst_122 {dimension_numbers = #tpu.dot_dimension_numbers<[1], [0], [0], [1], [0, 0, 1, 1], [], []>} : vector<8x128xf32>, vector<128x512xf32>, vector<8x512xf32> -> vector<8x512xf32>
    %426 = arith.addf %424, %425 : vector<8x512xf32>
    %427 = vector.extract_strided_slice %426 {offsets = [0, 0], sizes = [8, 128], strides = [1, 1]} : vector<8x512xf32> to vector<8x128xf32>
    %428 = arith.negf %427 : vector<8x128xf32>
    %429 = math.exp %428 : vector<8x128xf32>
    %cst_123 = arith.constant 1.000000e+00 : f32
    %430 = vector.broadcast %cst_123 : f32 to vector<8x128xf32>
    %431 = arith.addf %430, %429 : vector<8x128xf32>
    %432 = arith.divf %430, %431 : vector<8x128xf32>
    %433 = vector.extract_strided_slice %426 {offsets = [0, 128], sizes = [8, 128], strides = [1, 1]} : vector<8x512xf32> to vector<8x128xf32>
    %434 = arith.negf %433 : vector<8x128xf32>
    %435 = math.exp %434 : vector<8x128xf32>
    %cst_124 = arith.constant 1.000000e+00 : f32
    %436 = vector.broadcast %cst_124 : f32 to vector<8x128xf32>
    %437 = arith.addf %436, %435 : vector<8x128xf32>
    %438 = arith.divf %436, %437 : vector<8x128xf32>
    %439 = vector.extract_strided_slice %426 {offsets = [0, 256], sizes = [8, 128], strides = [1, 1]} : vector<8x512xf32> to vector<8x128xf32>
    %440 = math.tanh %439 : vector<8x128xf32>
    %441 = vector.extract_strided_slice %426 {offsets = [0, 384], sizes = [8, 128], strides = [1, 1]} : vector<8x512xf32> to vector<8x128xf32>
    %442 = arith.negf %441 : vector<8x128xf32>
    %443 = math.exp %442 : vector<8x128xf32>
    %cst_125 = arith.constant 1.000000e+00 : f32
    %444 = vector.broadcast %cst_125 : f32 to vector<8x128xf32>
    %445 = arith.addf %444, %443 : vector<8x128xf32>
    %446 = arith.divf %444, %445 : vector<8x128xf32>
    %447 = arith.mulf %438, %421 : vector<8x128xf32>
    %448 = arith.mulf %432, %440 : vector<8x128xf32>
    %449 = arith.addf %447, %448 : vector<8x128xf32>
    %450 = math.tanh %449 : vector<8x128xf32>
    %451 = arith.mulf %446, %450 : vector<8x128xf32>
    %c56_126 = arith.constant 56 : index
    %c0_127 = arith.constant 0 : index
    %452 = vector.load %arg6[%c56_126, %c0_127] : memref<64x512xf32, #tpu.memory_space<vmem>>, vector<8x512xf32>
    %cst_128 = arith.constant dense<0.000000e+00> : vector<8x512xf32>
    %453 = tpu.matmul %451, %248, %cst_128 {dimension_numbers = #tpu.dot_dimension_numbers<[1], [0], [0], [1], [0, 0, 1, 1], [], []>} : vector<8x128xf32>, vector<128x512xf32>, vector<8x512xf32> -> vector<8x512xf32>
    %454 = arith.addf %452, %453 : vector<8x512xf32>
    %455 = vector.extract_strided_slice %454 {offsets = [0, 0], sizes = [8, 128], strides = [1, 1]} : vector<8x512xf32> to vector<8x128xf32>
    %456 = arith.negf %455 : vector<8x128xf32>
    %457 = math.exp %456 : vector<8x128xf32>
    %cst_129 = arith.constant 1.000000e+00 : f32
    %458 = vector.broadcast %cst_129 : f32 to vector<8x128xf32>
    %459 = arith.addf %458, %457 : vector<8x128xf32>
    %460 = arith.divf %458, %459 : vector<8x128xf32>
    %461 = vector.extract_strided_slice %454 {offsets = [0, 128], sizes = [8, 128], strides = [1, 1]} : vector<8x512xf32> to vector<8x128xf32>
    %462 = arith.negf %461 : vector<8x128xf32>
    %463 = math.exp %462 : vector<8x128xf32>
    %cst_130 = arith.constant 1.000000e+00 : f32
    %464 = vector.broadcast %cst_130 : f32 to vector<8x128xf32>
    %465 = arith.addf %464, %463 : vector<8x128xf32>
    %466 = arith.divf %464, %465 : vector<8x128xf32>
    %467 = vector.extract_strided_slice %454 {offsets = [0, 256], sizes = [8, 128], strides = [1, 1]} : vector<8x512xf32> to vector<8x128xf32>
    %468 = math.tanh %467 : vector<8x128xf32>
    %469 = vector.extract_strided_slice %454 {offsets = [0, 384], sizes = [8, 128], strides = [1, 1]} : vector<8x512xf32> to vector<8x128xf32>
    %470 = arith.negf %469 : vector<8x128xf32>
    %471 = math.exp %470 : vector<8x128xf32>
    %cst_131 = arith.constant 1.000000e+00 : f32
    %472 = vector.broadcast %cst_131 : f32 to vector<8x128xf32>
    %473 = arith.addf %472, %471 : vector<8x128xf32>
    %474 = arith.divf %472, %473 : vector<8x128xf32>
    %475 = arith.mulf %466, %449 : vector<8x128xf32>
    %476 = arith.mulf %460, %468 : vector<8x128xf32>
    %477 = arith.addf %475, %476 : vector<8x128xf32>
    %478 = math.tanh %477 : vector<8x128xf32>
    %479 = arith.mulf %474, %478 : vector<8x128xf32>
    %480 = arith.negf %479 : vector<8x128xf32>
    %481 = math.exp %480 : vector<8x128xf32>
    %cst_132 = arith.constant 1.000000e+00 : f32
    %482 = vector.broadcast %cst_132 : f32 to vector<8x128xf32>
    %483 = arith.addf %482, %481 : vector<8x128xf32>
    %484 = arith.divf %482, %483 : vector<8x128xf32>
    %c0_133 = arith.constant 0 : index
    %c0_134 = arith.constant 0 : index
    %485 = vector.load %arg4[%c0_133, %c0_134] : memref<8x128xf32, #tpu.memory_space<vmem>>, vector<8x128xf32>
    tpu.vector_store %arg4[%c0_133, %c0_134], %484 {strides = array<i32>} : memref<8x128xf32, #tpu.memory_space<vmem>>, vector<8x128xf32>,
    return
  }
}

</mosaic_0001>

<llo_original>
// kernel: tpu_custom_call.1
$region0: #{tpu_custom_call.1}
  #allocation0 [shape = 'u32[]', space=smem, size = 0x4, offset = 0x4, fixed_abs, tag = 'smem constant byte address 0x4 - core index']
  #allocation1 [shape = 'u32[72,128]{1,0:T(1,128)}', space=vmem, size = 0x9000, scoped, tag = 'internal scratch']
  #allocation2 [shape = 'f32[64,128]{1,0:T(8,128)}', space=vmem, size = 0x8000, scoped, tag = 'scratch operand']
  #allocation3 [shape = 'f32[64,512]{1,0:T(8,128)}', space=vmem, size = 0x20000, scoped, tag = 'scratch operand']
  %s0 = inlined_call_operand.hbm [shape: f32[64,128], index: 0, kind: input, shape index: {}]
  %s1 = inlined_call_operand.hbm [shape: f32[2,128,512], index: 1, kind: input, shape index: {}]
  %s2 = inlined_call_operand.hbm [shape: f32[2,128,512], index: 2, kind: input, shape index: {}]
  %s3 = inlined_call_operand.hbm [shape: f32[2,1,512], index: 3, kind: input, shape index: {}]
  %s4 = inlined_call_operand.hbm [shape: f32[8,128], index: 4, kind: output, shape index: {}]
  %s5 = sld [smem:[#allocation0]]
  $region42: #{tpu_custom_call.1} parent=0
    _
  %s7 = ssub.s32 1, %s5
  %s8 = scalar_select 0, %s7, %s5
  $region1: #{tpu_custom_call.1} parent=0
    #allocation4 [shape = 'u8[32768]{0}', space=vmem, size = 0x8000, scoped, tag = 'input window, operand 0, single buffered']
    #allocation5 [shape = 's32[1]{0}', space=sflag, size = 0x4, scoped, tag = 'scoped memory for tpu_custom_call.1']
    #allocation6 [shape = 's32[1]{0}', space=sflag, size = 0x4, scoped, tag = 'scoped memory for tpu_custom_call.1']
    #allocation7 [shape = 'u8[524288]{0}', space=vmem, size = 0x80000, scoped, tag = 'input window, operand 1, single buffered']
    #allocation8 [shape = 's32[1]{0}', space=sflag, size = 0x4, scoped, tag = 'scoped memory for tpu_custom_call.1']
    #allocation9 [shape = 'u8[524288]{0}', space=vmem, size = 0x80000, scoped, tag = 'input window, operand 2, single buffered']
    #allocation10 [shape = 'u8[4096]{0}', space=vmem, size = 0x1000, scoped, tag = 'input window, operand 3, single buffered']
    #allocation11 [shape = 's32[1]{0}', space=sflag, size = 0x4, scoped, tag = 'scoped memory for tpu_custom_call.1']
    #allocation12 [shape = 'u8[4096]{0}', space=vmem, size = 0x1000, scoped, tag = 'output window, operand 0, single buffered']
    %9 = vsyncpa [#allocation5], 0
    %10 = vsyncpa [#allocation8], 0
    %11 = vsyncpa [#allocation11], 0
    %12 = vsyncpa [#allocation6], 0
    // Predicated region
    $region2: #{tpu_custom_call.1} parent=1 // pred_check
      _
    $region3: #{tpu_custom_call.1} parent=1 // pred_check_branch
      %14 = sbr.rel (0) target = $region5
    $region4: #{tpu_custom_call.1} parent=1 // pred_region
      %16 = vsyncadd [#allocation5], 0
      %s17 = sshll.u32 %s0, 4
      %s18 = int_to_ptr.hbm [resolvable:$true] %s17
      %s19 = sshll.u32 [#allocation4], 4
      %s20 = int_to_ptr.vmem [resolvable:$true] %s19
      %25 = dma.hbm_to_vmem [thread:$0]  %s18, 1024, %s20, [#allocation5], 128, 128, 8
    $region5: #{tpu_custom_call.1} parent=1 // pred_fallthru
      _
    // Predicated region
    $region6: #{tpu_custom_call.1} parent=1 // pred_check
      _
    $region7: #{tpu_custom_call.1} parent=1 // pred_check_branch
      %27 = sbr.rel (0) target = $region9
    $region8: #{tpu_custom_call.1} parent=1 // pred_region
      %29 = vsyncadd [#allocation8], 0
      %s30 = sshll.u32 %s1, 4
      %s31 = int_to_ptr.hbm [resolvable:$true] %s30
      %s32 = sshll.u32 [#allocation7], 4
      %s33 = int_to_ptr.vmem [resolvable:$true] %s32
      %38 = dma.hbm_to_vmem [thread:$0]  %s31, 16384, %s33, [#allocation8], 512, 512, 32
    $region9: #{tpu_custom_call.1} parent=1 // pred_fallthru
      _
    // Predicated region
    $region10: #{tpu_custom_call.1} parent=1 // pred_check
      _
    $region11: #{tpu_custom_call.1} parent=1 // pred_check_branch
      %40 = sbr.rel (0) target = $region13
    $region12: #{tpu_custom_call.1} parent=1 // pred_region
      %42 = vsyncadd [#allocation8], 0
      %s43 = sshll.u32 %s2, 4
      %s44 = int_to_ptr.hbm [resolvable:$true] %s43
      %s45 = sshll.u32 [#allocation9], 4
      %s46 = int_to_ptr.vmem [resolvable:$true] %s45
      %51 = dma.hbm_to_vmem [thread:$0]  %s44, 16384, %s46, [#allocation8], 512, 512, 32
    $region13: #{tpu_custom_call.1} parent=1 // pred_fallthru
      _
    // Predicated region
    $region14: #{tpu_custom_call.1} parent=1 // pred_check
      _
    $region15: #{tpu_custom_call.1} parent=1 // pred_check_branch
      %53 = sbr.rel (0) target = $region17
    $region16: #{tpu_custom_call.1} parent=1 // pred_region
      %55 = vsyncadd [#allocation11], 0
      %s56 = sshll.u32 %s3, 4
      %s57 = int_to_ptr.hbm [resolvable:$true] %s56
      %s58 = sshll.u32 [#allocation10], 4
      %s59 = int_to_ptr.vmem [resolvable:$true] %s58
      %64 = dma.hbm_to_vmem [thread:$0]  %s57, 128, %s59, [#allocation11], 64, 64, 4
    $region17: #{tpu_custom_call.1} parent=1 // pred_fallthru
      _
    // Predicated region
    $region18: #{tpu_custom_call.1} parent=1 // pred_check
      _
    $region19: #{tpu_custom_call.1} parent=1 // pred_check_branch
      %66 = sbr.rel (0) target = $region21
    $region20: #{tpu_custom_call.1} parent=1 // pred_region
      %68 = dma.done [#allocation5], 1024
    $region21: #{tpu_custom_call.1} parent=1 // pred_fallthru
      _
    // Predicated region
    $region22: #{tpu_custom_call.1} parent=1 // pred_check
      _
    $region23: #{tpu_custom_call.1} parent=1 // pred_check_branch
      %70 = sbr.rel (0) target = $region25
    $region24: #{tpu_custom_call.1} parent=1 // pred_region
      %72 = dma.done [#allocation8], 16384
    $region25: #{tpu_custom_call.1} parent=1 // pred_fallthru
      _
    // Predicated region
    $region26: #{tpu_custom_call.1} parent=1 // pred_check
      _
    $region27: #{tpu_custom_call.1} parent=1 // pred_check_branch
      %74 = sbr.rel (0) target = $region29
    $region28: #{tpu_custom_call.1} parent=1 // pred_region
      %76 = dma.done [#allocation8], 16384
    $region29: #{tpu_custom_call.1} parent=1 // pred_fallthru
      _
    // Predicated region
    $region30: #{tpu_custom_call.1} parent=1 // pred_check
      _
    $region31: #{tpu_custom_call.1} parent=1 // pred_check_branch
      %78 = sbr.rel (0) target = $region33
    $region32: #{tpu_custom_call.1} parent=1 // pred_region
      %80 = dma.done [#allocation11], 128
    $region33: #{tpu_custom_call.1} parent=1 // pred_fallthru
      _
    %v81 = vld [vmem:[#allocation7] sm:$0xff]
    %v82 = vld [vmem:[#allocation7 + $0x8] sm:$0xff]
    %v83 = vld [vmem:[#allocation7 + $0x10] sm:$0xff]
    %v84 = vld [vmem:[#allocation7 + $0x18] sm:$0xff]
    %v85 = vld [vmem:[#allocation7 + $0x20] sm:$0xff]
    %v86 = vld [vmem:[#allocation7 + $0x28] sm:$0xff]
    %v87 = vld [vmem:[#allocation7 + $0x30] sm:$0xff]
    %v88 = vld [vmem:[#allocation7 + $0x38] sm:$0xff]
    %v89 = vld [vmem:[#allocation7 + $0x40] sm:$0xff]
    %v90 = vld [vmem:[#allocation7 + $0x48] sm:$0xff]
    %v91 = vld [vmem:[#allocation7 + $0x50] sm:$0xff]
    %v92 = vld [vmem:[#allocation7 + $0x58] sm:$0xff]
    %v93 = vld [vmem:[#allocation7 + $0x60] sm:$0xff]
    %v94 = vld [vmem:[#allocation7 + $0x68] sm:$0xff]
    %v95 = vld [vmem:[#allocation7 + $0x70] sm:$0xff]
    %v96 = vld [vmem:[#allocation7 + $0x78] sm:$0xff]
    %v97 = vld [vmem:[#allocation7 + $0x80] sm:$0xff]
    %v98 = vld [vmem:[#allocation7 + $0x88] sm:$0xff]
    %v99 = vld [vmem:[#allocation7 + $0x90] sm:$0xff]
    %v100 = vld [vmem:[#allocation7 + $0x98] sm:$0xff]
    %v101 = vld [vmem:[#allocation7 + $0xa0] sm:$0xff]
    %v102 = vld [vmem:[#allocation7 + $0xa8] sm:$0xff]
    %v103 = vld [vmem:[#allocation7 + $0xb0] sm:$0xff]
    %v104 = vld [vmem:[#allocation7 + $0xb8] sm:$0xff]
    %v105 = vld [vmem:[#allocation7 + $0xc0] sm:$0xff]
    %v106 = vld [vmem:[#allocation7 + $0xc8] sm:$0xff]
    %v107 = vld [vmem:[#allocation7 + $0xd0] sm:$0xff]
    %v108 = vld [vmem:[#allocation7 + $0xd8] sm:$0xff]
    %v109 = vld [vmem:[#allocation7 + $0xe0] sm:$0xff]
    %v110 = vld [vmem:[#allocation7 + $0xe8] sm:$0xff]
    %v111 = vld [vmem:[#allocation7 + $0xf0] sm:$0xff]
    %v112 = vld [vmem:[#allocation7 + $0xf8] sm:$0xff]
    %v113 = vld [vmem:[#allocation7 + $0x100] sm:$0xff]
    %v114 = vld [vmem:[#allocation7 + $0x108] sm:$0xff]
    %v115 = vld [vmem:[#allocation7 + $0x110] sm:$0xff]
    %v116 = vld [vmem:[#allocation7 + $0x118] sm:$0xff]
    %v117 = vld [vmem:[#allocation7 + $0x120] sm:$0xff]
    %v118 = vld [vmem:[#allocation7 + $0x128] sm:$0xff]
    %v119 = vld [vmem:[#allocation7 + $0x130] sm:$0xff]
    %v120 = vld [vmem:[#allocation7 + $0x138] sm:$0xff]
    %v121 = vld [vmem:[#allocation7 + $0x140] sm:$0xff]
    %v122 = vld [vmem:[#allocation7 + $0x148] sm:$0xff]
    %v123 = vld [vmem:[#allocation7 + $0x150] sm:$0xff]
    %v124 = vld [vmem:[#allocation7 + $0x158] sm:$0xff]
    %v125 = vld [vmem:[#allocation7 + $0x160] sm:$0xff]
    %v126 = vld [vmem:[#allocation7 + $0x168] sm:$0xff]
    %v127 = vld [vmem:[#allocation7 + $0x170] sm:$0xff]
    %v128 = vld [vmem:[#allocation7 + $0x178] sm:$0xff]
    %v129 = vld [vmem:[#allocation7 + $0x180] sm:$0xff]
    %v130 = vld [vmem:[#allocation7 + $0x188] sm:$0xff]
    %v131 = vld [vmem:[#allocation7 + $0x190] sm:$0xff]
    %v132 = vld [vmem:[#allocation7 + $0x198] sm:$0xff]
    %v133 = vld [vmem:[#allocation7 + $0x1a0] sm:$0xff]
    %v134 = vld [vmem:[#allocation7 + $0x1a8] sm:$0xff]
    %v135 = vld [vmem:[#allocation7 + $0x1b0] sm:$0xff]
    %v136 = vld [vmem:[#allocation7 + $0x1b8] sm:$0xff]
    %v137 = vld [vmem:[#allocation7 + $0x1c0] sm:$0xff]
    %v138 = vld [vmem:[#allocation7 + $0x1c8] sm:$0xff]
    %v139 = vld [vmem:[#allocation7 + $0x1d0] sm:$0xff]
    %v140 = vld [vmem:[#allocation7 + $0x1d8] sm:$0xff]
    %v141 = vld [vmem:[#allocation7 + $0x1e0] sm:$0xff]
    %v142 = vld [vmem:[#allocation7 + $0x1e8] sm:$0xff]
    %v143 = vld [vmem:[#allocation7 + $0x1f0] sm:$0xff]
    %v144 = vld [vmem:[#allocation7 + $0x1f8] sm:$0xff]
    %v145 = vld [vmem:[#allocation9] sm:$0xff]
    %v146 = vld [vmem:[#allocation9 + $0x8] sm:$0xff]
    %v147 = vld [vmem:[#allocation9 + $0x10] sm:$0xff]
    %v148 = vld [vmem:[#allocation9 + $0x18] sm:$0xff]
    %v149 = vld [vmem:[#allocation9 + $0x20] sm:$0xff]
    %v150 = vld [vmem:[#allocation9 + $0x28] sm:$0xff]
    %v151 = vld [vmem:[#allocation9 + $0x30] sm:$0xff]
    %v152 = vld [vmem:[#allocation9 + $0x38] sm:$0xff]
    %v153 = vld [vmem:[#allocation9 + $0x40] sm:$0xff]
    %v154 = vld [vmem:[#allocation9 + $0x48] sm:$0xff]
    %v155 = vld [vmem:[#allocation9 + $0x50] sm:$0xff]
    %v156 = vld [vmem:[#allocation9 + $0x58] sm:$0xff]
    %v157 = vld [vmem:[#allocation9 + $0x60] sm:$0xff]
    %v158 = vld [vmem:[#allocation9 + $0x68] sm:$0xff]
    %v159 = vld [vmem:[#allocation9 + $0x70] sm:$0xff]
    %v160 = vld [vmem:[#allocation9 + $0x78] sm:$0xff]
    %v161 = vld [vmem:[#allocation9 + $0x80] sm:$0xff]
    %v162 = vld [vmem:[#allocation9 + $0x88] sm:$0xff]
    %v163 = vld [vmem:[#allocation9 + $0x90] sm:$0xff]
    %v164 = vld [vmem:[#allocation9 + $0x98] sm:$0xff]
    %v165 = vld [vmem:[#allocation9 + $0xa0] sm:$0xff]
    %v166 = vld [vmem:[#allocation9 + $0xa8] sm:$0xff]
    %v167 = vld [vmem:[#allocation9 + $0xb0] sm:$0xff]
    %v168 = vld [vmem:[#allocation9 + $0xb8] sm:$0xff]
    %v169 = vld [vmem:[#allocation9 + $0xc0] sm:$0xff]
    %v170 = vld [vmem:[#allocation9 + $0xc8] sm:$0xff]
    %v171 = vld [vmem:[#allocation9 + $0xd0] sm:$0xff]
    %v172 = vld [vmem:[#allocation9 + $0xd8] sm:$0xff]
    %v173 = vld [vmem:[#allocation9 + $0xe0] sm:$0xff]
    %v174 = vld [vmem:[#allocation9 + $0xe8] sm:$0xff]
    %v175 = vld [vmem:[#allocation9 + $0xf0] sm:$0xff]
    %v176 = vld [vmem:[#allocation9 + $0xf8] sm:$0xff]
    %v177 = vld [vmem:[#allocation9 + $0x100] sm:$0xff]
    %v178 = vld [vmem:[#allocation9 + $0x108] sm:$0xff]
    %v179 = vld [vmem:[#allocation9 + $0x110] sm:$0xff]
    %v180 = vld [vmem:[#allocation9 + $0x118] sm:$0xff]
    %v181 = vld [vmem:[#allocation9 + $0x120] sm:$0xff]
    %v182 = vld [vmem:[#allocation9 + $0x128] sm:$0xff]
    %v183 = vld [vmem:[#allocation9 + $0x130] sm:$0xff]
    %v184 = vld [vmem:[#allocation9 + $0x138] sm:$0xff]
    %v185 = vld [vmem:[#allocation9 + $0x140] sm:$0xff]
    %v186 = vld [vmem:[#allocation9 + $0x148] sm:$0xff]
    %v187 = vld [vmem:[#allocation9 + $0x150] sm:$0xff]
    %v188 = vld [vmem:[#allocation9 + $0x158] sm:$0xff]
    %v189 = vld [vmem:[#allocation9 + $0x160] sm:$0xff]
    %v190 = vld [vmem:[#allocation9 + $0x168] sm:$0xff]
    %v191 = vld [vmem:[#allocation9 + $0x170] sm:$0xff]
    %v192 = vld [vmem:[#allocation9 + $0x178] sm:$0xff]
    %v193 = vld [vmem:[#allocation9 + $0x180] sm:$0xff]
    %v194 = vld [vmem:[#allocation9 + $0x188] sm:$0xff]
    %v195 = vld [vmem:[#allocation9 + $0x190] sm:$0xff]
    %v196 = vld [vmem:[#allocation9 + $0x198] sm:$0xff]
    %v197 = vld [vmem:[#allocation9 + $0x1a0] sm:$0xff]
    %v198 = vld [vmem:[#allocation9 + $0x1a8] sm:$0xff]
    %v199 = vld [vmem:[#allocation9 + $0x1b0] sm:$0xff]
    %v200 = vld [vmem:[#allocation9 + $0x1b8] sm:$0xff]
    %v201 = vld [vmem:[#allocation9 + $0x1c0] sm:$0xff]
    %v202 = vld [vmem:[#allocation9 + $0x1c8] sm:$0xff]
    %v203 = vld [vmem:[#allocation9 + $0x1d0] sm:$0xff]
    %v204 = vld [vmem:[#allocation9 + $0x1d8] sm:$0xff]
    %v205 = vld [vmem:[#allocation9 + $0x1e0] sm:$0xff]
    %v206 = vld [vmem:[#allocation9 + $0x1e8] sm:$0xff]
    %v207 = vld [vmem:[#allocation9 + $0x1f0] sm:$0xff]
    %v208 = vld [vmem:[#allocation9 + $0x1f8] sm:$0xff]
    %v209 = vld [vmem:[#allocation10] sm:$0xf]
    %v210 = vld [vmem:[#allocation4] sm:$0xff]
    %v211 = vld [vmem:[#allocation4 + $0x8] sm:$0xff]
    %v212 = vld [vmem:[#allocation4 + $0x10] sm:$0xff]
    %v213 = vld [vmem:[#allocation4 + $0x18] sm:$0xff]
    %v214 = vld [vmem:[#allocation4 + $0x20] sm:$0xff]
    %v215 = vld [vmem:[#allocation4 + $0x28] sm:$0xff]
    %v216 = vld [vmem:[#allocation4 + $0x30] sm:$0xff]
    %v217 = vld [vmem:[#allocation4 + $0x38] sm:$0xff]
    %v219 = vperm.slane %v209, 0
    %v220 = vperm.slane %v209, 1
    %v221 = vperm.slane %v209, 2
    %v222 = vperm.slane %v209, 3
    %227 = vmatpush.msra.mxu0 %v141
    %228 = vmatpush.msra.mxu0 %v137
    %229 = vmatpush.msra.mxu0 %v133
    %230 = vmatpush.msra.mxu0 %v129
    %231 = vmatpush.msra.mxu0 %v125
    %232 = vmatpush.msra.mxu0 %v121
    %233 = vmatpush.msra.mxu0 %v117
    %234 = vmatpush.msra.mxu0 %v113
    %235 = vmatpush.msra.mxu0 %v109
    %236 = vmatpush.msra.mxu0 %v105
    %237 = vmatpush.msra.mxu0 %v101
    %238 = vmatpush.msra.mxu0 %v97
    %239 = vmatpush.msra.mxu0 %v93
    %240 = vmatpush.msra.mxu0 %v89
    %241 = vmatpush.msra.mxu0 %v85
    %242 = vmatpush.msra.mxu0 %v81
    %243 = vmatmul.f32.gmra.mxu0 %v210
    %v244 = vpop.f32.mrf.mxu0
    %v245 = vadd.f32 %v219, %v244
    %246 = vmatmul.f32.gmra.mxu0 %v211
    %v247 = vpop.f32.mrf.mxu0
    %v248 = vadd.f32 %v219, %v247
    %249 = vmatmul.f32.gmra.mxu0 %v212
    %v250 = vpop.f32.mrf.mxu0
    %v251 = vadd.f32 %v219, %v250
    %252 = vmatmul.f32.gmra.mxu0 %v213
    %v253 = vpop.f32.mrf.mxu0
    %v254 = vadd.f32 %v219, %v253
    %255 = vmatmul.f32.gmra.mxu0 %v214
    %v256 = vpop.f32.mrf.mxu0
    %v257 = vadd.f32 %v219, %v256
    %258 = vmatmul.f32.gmra.mxu0 %v215
    %v259 = vpop.f32.mrf.mxu0
    %v260 = vadd.f32 %v219, %v259
    %261 = vmatmul.f32.gmra.mxu0 %v216
    %v262 = vpop.f32.mrf.mxu0
    %v263 = vadd.f32 %v219, %v262
    %264 = vmatmul.f32.gmra.mxu0 %v217
    %v265 = vpop.f32.mrf.mxu0
    %v266 = vadd.f32 %v219, %v265
    %267 = vdwg.mxu0
    %268 = vmatpush.msra.mxu0 %v142
    %269 = vmatpush.msra.mxu0 %v138
    %270 = vmatpush.msra.mxu0 %v134
    %271 = vmatpush.msra.mxu0 %v130
    %272 = vmatpush.msra.mxu0 %v126
    %273 = vmatpush.msra.mxu0 %v122
    %274 = vmatpush.msra.mxu0 %v118
    %275 = vmatpush.msra.mxu0 %v114
    %276 = vmatpush.msra.mxu0 %v110
    %277 = vmatpush.msra.mxu0 %v106
    %278 = vmatpush.msra.mxu0 %v102
    %279 = vmatpush.msra.mxu0 %v98
    %280 = vmatpush.msra.mxu0 %v94
    %281 = vmatpush.msra.mxu0 %v90
    %282 = vmatpush.msra.mxu0 %v86
    %283 = vmatpush.msra.mxu0 %v82
    %284 = vmatmul.f32.gmra.mxu0 %v210
    %v285 = vpop.f32.mrf.mxu0
    %v286 = vadd.f32 %v220, %v285
    %287 = vmatmul.f32.gmra.mxu0 %v211
    %v288 = vpop.f32.mrf.mxu0
    %v289 = vadd.f32 %v220, %v288
    %290 = vmatmul.f32.gmra.mxu0 %v212
    %v291 = vpop.f32.mrf.mxu0
    %v292 = vadd.f32 %v220, %v291
    %293 = vmatmul.f32.gmra.mxu0 %v213
    %v294 = vpop.f32.mrf.mxu0
    %v295 = vadd.f32 %v220, %v294
    %296 = vmatmul.f32.gmra.mxu0 %v214
    %v297 = vpop.f32.mrf.mxu0
    %v298 = vadd.f32 %v220, %v297
    %299 = vmatmul.f32.gmra.mxu0 %v215
    %v300 = vpop.f32.mrf.mxu0
    %v301 = vadd.f32 %v220, %v300
    %302 = vmatmul.f32.gmra.mxu0 %v216
    %v303 = vpop.f32.mrf.mxu0
    %v304 = vadd.f32 %v220, %v303
    %305 = vmatmul.f32.gmra.mxu0 %v217
    %v306 = vpop.f32.mrf.mxu0
    %v307 = vadd.f32 %v220, %v306
    %308 = vdwg.mxu0
    %309 = vmatpush.msra.mxu0 %v143
    %310 = vmatpush.msra.mxu0 %v139
    %311 = vmatpush.msra.mxu0 %v135
    %312 = vmatpush.msra.mxu0 %v131
    %313 = vmatpush.msra.mxu0 %v127
    %314 = vmatpush.msra.mxu0 %v123
    %315 = vmatpush.msra.mxu0 %v119
    %316 = vmatpush.msra.mxu0 %v115
    %317 = vmatpush.msra.mxu0 %v111
    %318 = vmatpush.msra.mxu0 %v107
    %319 = vmatpush.msra.mxu0 %v103
    %320 = vmatpush.msra.mxu0 %v99
    %321 = vmatpush.msra.mxu0 %v95
    %322 = vmatpush.msra.mxu0 %v91
    %323 = vmatpush.msra.mxu0 %v87
    %324 = vmatpush.msra.mxu0 %v83
    %325 = vmatmul.f32.gmra.mxu0 %v210
    %v326 = vpop.f32.mrf.mxu0
    %v327 = vadd.f32 %v221, %v326
    %328 = vmatmul.f32.gmra.mxu0 %v211
    %v329 = vpop.f32.mrf.mxu0
    %v330 = vadd.f32 %v221, %v329
    %331 = vmatmul.f32.gmra.mxu0 %v212
    %v332 = vpop.f32.mrf.mxu0
    %v333 = vadd.f32 %v221, %v332
    %334 = vmatmul.f32.gmra.mxu0 %v213
    %v335 = vpop.f32.mrf.mxu0
    %v336 = vadd.f32 %v221, %v335
    %337 = vmatmul.f32.gmra.mxu0 %v214
    %v338 = vpop.f32.mrf.mxu0
    %v339 = vadd.f32 %v221, %v338
    %340 = vmatmul.f32.gmra.mxu0 %v215
    %v341 = vpop.f32.mrf.mxu0
    %v342 = vadd.f32 %v221, %v341
    %343 = vmatmul.f32.gmra.mxu0 %v216
    %v344 = vpop.f32.mrf.mxu0
    %v345 = vadd.f32 %v221, %v344
    %346 = vmatmul.f32.gmra.mxu0 %v217
    %v347 = vpop.f32.mrf.mxu0
    %v348 = vadd.f32 %v221, %v347
    %349 = vdwg.mxu0
    %350 = vmatpush.msra.mxu0 %v144
    %351 = vmatpush.msra.mxu0 %v140
    %352 = vmatpush.msra.mxu0 %v136
    %353 = vmatpush.msra.mxu0 %v132
    %354 = vmatpush.msra.mxu0 %v128
    %355 = vmatpush.msra.mxu0 %v124
    %356 = vmatpush.msra.mxu0 %v120
    %357 = vmatpush.msra.mxu0 %v116
    %358 = vmatpush.msra.mxu0 %v112
    %359 = vmatpush.msra.mxu0 %v108
    %360 = vmatpush.msra.mxu0 %v104
    %361 = vmatpush.msra.mxu0 %v100
    %362 = vmatpush.msra.mxu0 %v96
    %363 = vmatpush.msra.mxu0 %v92
    %364 = vmatpush.msra.mxu0 %v88
    %365 = vmatpush.msra.mxu0 %v84
    %366 = vmatmul.f32.gmra.mxu0 %v210
    %v367 = vpop.f32.mrf.mxu0
    %v368 = vadd.f32 %v222, %v367
    %369 = vmatmul.f32.gmra.mxu0 %v211
    %v370 = vpop.f32.mrf.mxu0
    %v371 = vadd.f32 %v222, %v370
    %372 = vmatmul.f32.gmra.mxu0 %v212
    %v373 = vpop.f32.mrf.mxu0
    %v374 = vadd.f32 %v222, %v373
    %375 = vmatmul.f32.gmra.mxu0 %v213
    %v376 = vpop.f32.mrf.mxu0
    %v377 = vadd.f32 %v222, %v376
    %378 = vmatmul.f32.gmra.mxu0 %v214
    %v379 = vpop.f32.mrf.mxu0
    %v380 = vadd.f32 %v222, %v379
    %381 = vmatmul.f32.gmra.mxu0 %v215
    %v382 = vpop.f32.mrf.mxu0
    %v383 = vadd.f32 %v222, %v382
    %384 = vmatmul.f32.gmra.mxu0 %v216
    %v385 = vpop.f32.mrf.mxu0
    %v386 = vadd.f32 %v222, %v385
    %387 = vmatmul.f32.gmra.mxu0 %v217
    %v388 = vpop.f32.mrf.mxu0
    %v389 = vadd.f32 %v222, %v388
    %390 = vdwg.mxu0
    %391 = vst [vmem:[#allocation3] sm:$0xff] %v245
    %392 = vst [vmem:[#allocation3 + $0x8] sm:$0xff] %v286
    %393 = vst [vmem:[#allocation3 + $0x10] sm:$0xff] %v327
    %394 = vst [vmem:[#allocation3 + $0x18] sm:$0xff] %v368
    %395 = vst [vmem:[#allocation3 + $0x20] sm:$0xff] %v248
    %396 = vst [vmem:[#allocation3 + $0x28] sm:$0xff] %v289
    %397 = vst [vmem:[#allocation3 + $0x30] sm:$0xff] %v330
    %398 = vst [vmem:[#allocation3 + $0x38] sm:$0xff] %v371
    %399 = vst [vmem:[#allocation3 + $0x40] sm:$0xff] %v251
    %400 = vst [vmem:[#allocation3 + $0x48] sm:$0xff] %v292
    %401 = vst [vmem:[#allocation3 + $0x50] sm:$0xff] %v333
    %402 = vst [vmem:[#allocation3 + $0x58] sm:$0xff] %v374
    %403 = vst [vmem:[#allocation3 + $0x60] sm:$0xff] %v254
    %404 = vst [vmem:[#allocation3 + $0x68] sm:$0xff] %v295
    %405 = vst [vmem:[#allocation3 + $0x70] sm:$0xff] %v336
    %406 = vst [vmem:[#allocation3 + $0x78] sm:$0xff] %v377
    %407 = vst [vmem:[#allocation3 + $0x80] sm:$0xff] %v257
    %408 = vst [vmem:[#allocation3 + $0x88] sm:$0xff] %v298
    %409 = vst [vmem:[#allocation3 + $0x90] sm:$0xff] %v339
    %410 = vst [vmem:[#allocation3 + $0x98] sm:$0xff] %v380
    %411 = vst [vmem:[#allocation3 + $0xa0] sm:$0xff] %v260
    %412 = vst [vmem:[#allocation3 + $0xa8] sm:$0xff] %v301
    %413 = vst [vmem:[#allocation3 + $0xb0] sm:$0xff] %v342
    %414 = vst [vmem:[#allocation3 + $0xb8] sm:$0xff] %v383
    %415 = vst [vmem:[#allocation3 + $0xc0] sm:$0xff] %v263
    %416 = vst [vmem:[#allocation3 + $0xc8] sm:$0xff] %v304
    %417 = vst [vmem:[#allocation3 + $0xd0] sm:$0xff] %v345
    %418 = vst [vmem:[#allocation3 + $0xd8] sm:$0xff] %v386
    %419 = vst [vmem:[#allocation3 + $0xe0] sm:$0xff] %v266
    %420 = vst [vmem:[#allocation3 + $0xe8] sm:$0xff] %v307
    %421 = vst [vmem:[#allocation3 + $0xf0] sm:$0xff] %v348
    %422 = vst [vmem:[#allocation3 + $0xf8] sm:$0xff] %v389
    %v423 = vld [vmem:[#allocation3] sm:$0xff]
    %v424 = vld [vmem:[#allocation3 + $0x8] sm:$0xff]
    %v425 = vld [vmem:[#allocation3 + $0x10] sm:$0xff]
    %v426 = vld [vmem:[#allocation3 + $0x18] sm:$0xff]
    %427 = vmatpush.msra.mxu0 %v205
    %428 = vmatpush.msra.mxu0 %v201
    %429 = vmatpush.msra.mxu0 %v197
    %430 = vmatpush.msra.mxu0 %v193
    %431 = vmatpush.msra.mxu0 %v189
    %432 = vmatpush.msra.mxu0 %v185
    %433 = vmatpush.msra.mxu0 %v181
    %434 = vmatpush.msra.mxu0 %v177
    %435 = vmatpush.msra.mxu0 %v173
    %436 = vmatpush.msra.mxu0 %v169
    %437 = vmatpush.msra.mxu0 %v165
    %438 = vmatpush.msra.mxu0 %v161
    %439 = vmatpush.msra.mxu0 %v157
    %440 = vmatpush.msra.mxu0 %v153
    %441 = vmatpush.msra.mxu0 %v149
    %442 = vmatpush.msra.mxu0 %v145
    %443 = vmatmul.f32.gmra.mxu0 0.0
    %v444 = vpop.f32.mrf.mxu0
    %v445 = vadd.f32 0.0, %v444
    %446 = vdwg.mxu0
    %447 = vmatpush.msra.mxu0 %v206
    %448 = vmatpush.msra.mxu0 %v202
    %449 = vmatpush.msra.mxu0 %v198
    %450 = vmatpush.msra.mxu0 %v194
    %451 = vmatpush.msra.mxu0 %v190
    %452 = vmatpush.msra.mxu0 %v186
    %453 = vmatpush.msra.mxu0 %v182
    %454 = vmatpush.msra.mxu0 %v178
    %455 = vmatpush.msra.mxu0 %v174
    %456 = vmatpush.msra.mxu0 %v170
    %457 = vmatpush.msra.mxu0 %v166
    %458 = vmatpush.msra.mxu0 %v162
    %459 = vmatpush.msra.mxu0 %v158
    %460 = vmatpush.msra.mxu0 %v154
    %461 = vmatpush.msra.mxu0 %v150
    %462 = vmatpush.msra.mxu0 %v146
    %463 = vmatmul.f32.gmra.mxu0 0.0
    %v464 = vpop.f32.mrf.mxu0
    %v465 = vadd.f32 0.0, %v464
    %466 = vdwg.mxu0
    %467 = vmatpush.msra.mxu0 %v207
    %468 = vmatpush.msra.mxu0 %v203
    %469 = vmatpush.msra.mxu0 %v199
    %470 = vmatpush.msra.mxu0 %v195
    %471 = vmatpush.msra.mxu0 %v191
    %472 = vmatpush.msra.mxu0 %v187
    %473 = vmatpush.msra.mxu0 %v183
    %474 = vmatpush.msra.mxu0 %v179
    %475 = vmatpush.msra.mxu0 %v175
    %476 = vmatpush.msra.mxu0 %v171
    %477 = vmatpush.msra.mxu0 %v167
    %478 = vmatpush.msra.mxu0 %v163
    %479 = vmatpush.msra.mxu0 %v159
    %480 = vmatpush.msra.mxu0 %v155
    %481 = vmatpush.msra.mxu0 %v151
    %482 = vmatpush.msra.mxu0 %v147
    %483 = vmatmul.f32.gmra.mxu0 0.0
    %v484 = vpop.f32.mrf.mxu0
    %v485 = vadd.f32 0.0, %v484
    %486 = vdwg.mxu0
    %487 = vmatpush.msra.mxu0 %v208
    %488 = vmatpush.msra.mxu0 %v204
    %489 = vmatpush.msra.mxu0 %v200
    %490 = vmatpush.msra.mxu0 %v196
    %491 = vmatpush.msra.mxu0 %v192
    %492 = vmatpush.msra.mxu0 %v188
    %493 = vmatpush.msra.mxu0 %v184
    %494 = vmatpush.msra.mxu0 %v180
    %495 = vmatpush.msra.mxu0 %v176
    %496 = vmatpush.msra.mxu0 %v172
    %497 = vmatpush.msra.mxu0 %v168
    %498 = vmatpush.msra.mxu0 %v164
    %499 = vmatpush.msra.mxu0 %v160
    %500 = vmatpush.msra.mxu0 %v156
    %501 = vmatpush.msra.mxu0 %v152
    %502 = vmatpush.msra.mxu0 %v148
    %503 = vmatmul.f32.gmra.mxu0 0.0
    %v504 = vpop.f32.mrf.mxu0
    %v505 = vadd.f32 0.0, %v504
    %506 = vdwg.mxu0
    %v507 = vadd.f32 %v423, %v445
    %v508 = vadd.f32 %v424, %v465
    %v509 = vadd.f32 %v425, %v485
    %v510 = vadd.f32 %v426, %v505
    %v511 = vxor.u32 %v507, 2147483648
    %v512 = vmul.f32 %v511, 1.442695
    %v513 = vpow.pop %v512
    %v514 = vadd.f32 %v513, 1.0
    %v515 = vrcp.pop %v514
    %v516 = vmul.f32 %v514, %v515
    %v517 = vsub.f32 1.0, %v516
    %v518 = vmul.f32 %v515, %v517
    %v519 = vadd.f32 %v515, %v518
    %vm520 = vweird.f32 %v514
    %vm521 = vweird.f32 %v515
    %vm522 = vmor %vm520, %vm521
    %v523 = vsel %vm522, %v515, %v519
    %v524 = vand.u32 2147483647, %v514
    %vm525 = vcmp.eq.f32.partialorder %v524, 8.507059e+37
    %v526 = vand.u32 %v514, 2147483648
    %v527 = vor.u32 1.1754944e-38, %v526
    %v528 = vsel %vm525, %v527, %v523
    %v529 = vmul.f32 1.0, %v528
    %v530 = vxor.u32 %v508, 2147483648
    %v531 = vmul.f32 %v530, 1.442695
    %v532 = vpow.pop %v531
    %v533 = vadd.f32 %v532, 1.0
    %v534 = vrcp.pop %v533
    %v535 = vmul.f32 %v533, %v534
    %v536 = vsub.f32 1.0, %v535
    %v537 = vmul.f32 %v534, %v536
    %v538 = vadd.f32 %v534, %v537
    %vm539 = vweird.f32 %v533
    %vm540 = vweird.f32 %v534
    %vm541 = vmor %vm539, %vm540
    %v542 = vsel %vm541, %v534, %v538
    %v543 = vand.u32 2147483647, %v533
    %vm544 = vcmp.eq.f32.partialorder %v543, 8.507059e+37
    %v545 = vand.u32 %v533, 2147483648
    %v546 = vor.u32 1.1754944e-38, %v545
    %v547 = vsel %vm544, %v546, %v542
    %v548 = vmul.f32 1.0, %v547
    %v549 = vtanh.pop %v509
    %v550 = vxor.u32 %v510, 2147483648
    %v551 = vmul.f32 %v550, 1.442695
    %v552 = vpow.pop %v551
    %v553 = vadd.f32 %v552, 1.0
    %v554 = vrcp.pop %v553
    %v555 = vmul.f32 %v553, %v554
    %v556 = vsub.f32 1.0, %v555
    %v557 = vmul.f32 %v554, %v556
    %v558 = vadd.f32 %v554, %v557
    %vm559 = vweird.f32 %v553
    %vm560 = vweird.f32 %v554
    %vm561 = vmor %vm559, %vm560
    %v562 = vsel %vm561, %v554, %v558
    %v563 = vand.u32 2147483647, %v553
    %vm564 = vcmp.eq.f32.partialorder %v563, 8.507059e+37
    %v565 = vand.u32 %v553, 2147483648
    %v566 = vor.u32 1.1754944e-38, %v565
    %v567 = vsel %vm564, %v566, %v562
    %v568 = vmul.f32 1.0, %v567
    %v569 = vmul.f32 %v548, 0.0
    %v570 = vmul.f32 %v529, %v549
    %v571 = vadd.f32 %v569, %v570
    %v572 = vtanh.pop %v571
    %v573 = vmul.f32 %v568, %v572
    %574 = vst [vmem:[#allocation2] sm:$0xff] %v573
    %v575 = vld [vmem:[#allocation3 + $0x20] sm:$0xff]
    %v576 = vld [vmem:[#allocation3 + $0x28] sm:$0xff]
    %v577 = vld [vmem:[#allocation3 + $0x30] sm:$0xff]
    %v578 = vld [vmem:[#allocation3 + $0x38] sm:$0xff]
    %579 = vmatpush.msra.mxu0 %v205
    %580 = vmatpush.msra.mxu0 %v201
    %581 = vmatpush.msra.mxu0 %v197
    %582 = vmatpush.msra.mxu0 %v193
    %583 = vmatpush.msra.mxu0 %v189
    %584 = vmatpush.msra.mxu0 %v185
    %585 = vmatpush.msra.mxu0 %v181
    %586 = vmatpush.msra.mxu0 %v177
    %587 = vmatpush.msra.mxu0 %v173
    %588 = vmatpush.msra.mxu0 %v169
    %589 = vmatpush.msra.mxu0 %v165
    %590 = vmatpush.msra.mxu0 %v161
    %591 = vmatpush.msra.mxu0 %v157
    %592 = vmatpush.msra.mxu0 %v153
    %593 = vmatpush.msra.mxu0 %v149
    %594 = vmatpush.msra.mxu0 %v145
    %595 = vmatmul.f32.gmra.mxu0 %v573
    %v596 = vpop.f32.mrf.mxu0
    %v597 = vadd.f32 0.0, %v596
    %598 = vdwg.mxu0
    %599 = vmatpush.msra.mxu0 %v206
    %600 = vmatpush.msra.mxu0 %v202
    %601 = vmatpush.msra.mxu0 %v198
    %602 = vmatpush.msra.mxu0 %v194
    %603 = vmatpush.msra.mxu0 %v190
    %604 = vmatpush.msra.mxu0 %v186
    %605 = vmatpush.msra.mxu0 %v182
    %606 = vmatpush.msra.mxu0 %v178
    %607 = vmatpush.msra.mxu0 %v174
    %608 = vmatpush.msra.mxu0 %v170
    %609 = vmatpush.msra.mxu0 %v166
    %610 = vmatpush.msra.mxu0 %v162
    %611 = vmatpush.msra.mxu0 %v158
    %612 = vmatpush.msra.mxu0 %v154
    %613 = vmatpush.msra.mxu0 %v150
    %614 = vmatpush.msra.mxu0 %v146
    %615 = vmatmul.f32.gmra.mxu0 %v573
    %v616 = vpop.f32.mrf.mxu0
    %v617 = vadd.f32 0.0, %v616
    %618 = vdwg.mxu0
    %619 = vmatpush.msra.mxu0 %v207
    %620 = vmatpush.msra.mxu0 %v203
    %621 = vmatpush.msra.mxu0 %v199
    %622 = vmatpush.msra.mxu0 %v195
    %623 = vmatpush.msra.mxu0 %v191
    %624 = vmatpush.msra.mxu0 %v187
    %625 = vmatpush.msra.mxu0 %v183
    %626 = vmatpush.msra.mxu0 %v179
    %627 = vmatpush.msra.mxu0 %v175
    %628 = vmatpush.msra.mxu0 %v171
    %629 = vmatpush.msra.mxu0 %v167
    %630 = vmatpush.msra.mxu0 %v163
    %631 = vmatpush.msra.mxu0 %v159
    %632 = vmatpush.msra.mxu0 %v155
    %633 = vmatpush.msra.mxu0 %v151
    %634 = vmatpush.msra.mxu0 %v147
    %635 = vmatmul.f32.gmra.mxu0 %v573
    %v636 = vpop.f32.mrf.mxu0
    %v637 = vadd.f32 0.0, %v636
    %638 = vdwg.mxu0
    %639 = vmatpush.msra.mxu0 %v208
    %640 = vmatpush.msra.mxu0 %v204
    %641 = vmatpush.msra.mxu0 %v200
    %642 = vmatpush.msra.mxu0 %v196
    %643 = vmatpush.msra.mxu0 %v192
    %644 = vmatpush.msra.mxu0 %v188
    %645 = vmatpush.msra.mxu0 %v184
    %646 = vmatpush.msra.mxu0 %v180
    %647 = vmatpush.msra.mxu0 %v176
    %648 = vmatpush.msra.mxu0 %v172
    %649 = vmatpush.msra.mxu0 %v168
    %650 = vmatpush.msra.mxu0 %v164
    %651 = vmatpush.msra.mxu0 %v160
    %652 = vmatpush.msra.mxu0 %v156
    %653 = vmatpush.msra.mxu0 %v152
    %654 = vmatpush.msra.mxu0 %v148
    %655 = vmatmul.f32.gmra.mxu0 %v573
    %v656 = vpop.f32.mrf.mxu0
    %v657 = vadd.f32 0.0, %v656
    %658 = vdwg.mxu0
    %v659 = vadd.f32 %v575, %v597
    %v660 = vadd.f32 %v576, %v617
    %v661 = vadd.f32 %v577, %v637
    %v662 = vadd.f32 %v578, %v657
    %v663 = vxor.u32 %v659, 2147483648
    %v664 = vmul.f32 %v663, 1.442695
    %v665 = vpow.pop %v664
    %v666 = vadd.f32 %v665, 1.0
    %v667 = vrcp.pop %v666
    %v668 = vmul.f32 %v666, %v667
    %v669 = vsub.f32 1.0, %v668
    %v670 = vmul.f32 %v667, %v669
    %v671 = vadd.f32 %v667, %v670
    %vm672 = vweird.f32 %v666
    %vm673 = vweird.f32 %v667
    %vm674 = vmor %vm672, %vm673
    %v675 = vsel %vm674, %v667, %v671
    %v676 = vand.u32 2147483647, %v666
    %vm677 = vcmp.eq.f32.partialorder %v676, 8.507059e+37
    %v678 = vand.u32 %v666, 2147483648
    %v679 = vor.u32 1.1754944e-38, %v678
    %v680 = vsel %vm677, %v679, %v675
    %v681 = vmul.f32 1.0, %v680
    %v682 = vxor.u32 %v660, 2147483648
    %v683 = vmul.f32 %v682, 1.442695
    %v684 = vpow.pop %v683
    %v685 = vadd.f32 %v684, 1.0
    %v686 = vrcp.pop %v685
    %v687 = vmul.f32 %v685, %v686
    %v688 = vsub.f32 1.0, %v687
    %v689 = vmul.f32 %v686, %v688
    %v690 = vadd.f32 %v686, %v689
    %vm691 = vweird.f32 %v685
    %vm692 = vweird.f32 %v686
    %vm693 = vmor %vm691, %vm692
    %v694 = vsel %vm693, %v686, %v690
    %v695 = vand.u32 2147483647, %v685
    %vm696 = vcmp.eq.f32.partialorder %v695, 8.507059e+37
    %v697 = vand.u32 %v685, 2147483648
    %v698 = vor.u32 1.1754944e-38, %v697
    %v699 = vsel %vm696, %v698, %v694
    %v700 = vmul.f32 1.0, %v699
    %v701 = vtanh.pop %v661
    %v702 = vxor.u32 %v662, 2147483648
    %v703 = vmul.f32 %v702, 1.442695
    %v704 = vpow.pop %v703
    %v705 = vadd.f32 %v704, 1.0
    %v706 = vrcp.pop %v705
    %v707 = vmul.f32 %v705, %v706
    %v708 = vsub.f32 1.0, %v707
    %v709 = vmul.f32 %v706, %v708
    %v710 = vadd.f32 %v706, %v709
    %vm711 = vweird.f32 %v705
    %vm712 = vweird.f32 %v706
    %vm713 = vmor %vm711, %vm712
    %v714 = vsel %vm713, %v706, %v710
    %v715 = vand.u32 2147483647, %v705
    %vm716 = vcmp.eq.f32.partialorder %v715, 8.507059e+37
    %v717 = vand.u32 %v705, 2147483648
    %v718 = vor.u32 1.1754944e-38, %v717
    %v719 = vsel %vm716, %v718, %v714
    %v720 = vmul.f32 1.0, %v719
    %v721 = vmul.f32 %v700, %v571
    %v722 = vmul.f32 %v681, %v701
    %v723 = vadd.f32 %v721, %v722
    %v724 = vtanh.pop %v723
    %v725 = vmul.f32 %v720, %v724
    %726 = vst [vmem:[#allocation2 + $0x8] sm:$0xff] %v725
    %v727 = vld [vmem:[#allocation3 + $0x40] sm:$0xff]
    %v728 = vld [vmem:[#allocation3 + $0x48] sm:$0xff]
    %v729 = vld [vmem:[#allocation3 + $0x50] sm:$0xff]
    %v730 = vld [vmem:[#allocation3 + $0x58] sm:$0xff]
    %731 = vmatpush.msra.mxu0 %v205
    %732 = vmatpush.msra.mxu0 %v201
    %733 = vmatpush.msra.mxu0 %v197
    %734 = vmatpush.msra.mxu0 %v193
    %735 = vmatpush.msra.mxu0 %v189
    %736 = vmatpush.msra.mxu0 %v185
    %737 = vmatpush.msra.mxu0 %v181
    %738 = vmatpush.msra.mxu0 %v177
    %739 = vmatpush.msra.mxu0 %v173
    %740 = vmatpush.msra.mxu0 %v169
    %741 = vmatpush.msra.mxu0 %v165
    %742 = vmatpush.msra.mxu0 %v161
    %743 = vmatpush.msra.mxu0 %v157
    %744 = vmatpush.msra.mxu0 %v153
    %745 = vmatpush.msra.mxu0 %v149
    %746 = vmatpush.msra.mxu0 %v145
    %747 = vmatmul.f32.gmra.mxu0 %v725
    %v748 = vpop.f32.mrf.mxu0
    %v749 = vadd.f32 0.0, %v748
    %750 = vdwg.mxu0
    %751 = vmatpush.msra.mxu0 %v206
    %752 = vmatpush.msra.mxu0 %v202
    %753 = vmatpush.msra.mxu0 %v198
    %754 = vmatpush.msra.mxu0 %v194
    %755 = vmatpush.msra.mxu0 %v190
    %756 = vmatpush.msra.mxu0 %v186
    %757 = vmatpush.msra.mxu0 %v182
    %758 = vmatpush.msra.mxu0 %v178
    %759 = vmatpush.msra.mxu0 %v174
    %760 = vmatpush.msra.mxu0 %v170
    %761 = vmatpush.msra.mxu0 %v166
    %762 = vmatpush.msra.mxu0 %v162
    %763 = vmatpush.msra.mxu0 %v158
    %764 = vmatpush.msra.mxu0 %v154
    %765 = vmatpush.msra.mxu0 %v150
    %766 = vmatpush.msra.mxu0 %v146
    %767 = vmatmul.f32.gmra.mxu0 %v725
    %v768 = vpop.f32.mrf.mxu0
    %v769 = vadd.f32 0.0, %v768
    %770 = vdwg.mxu0
    %771 = vmatpush.msra.mxu0 %v207
    %772 = vmatpush.msra.mxu0 %v203
    %773 = vmatpush.msra.mxu0 %v199
    %774 = vmatpush.msra.mxu0 %v195
    %775 = vmatpush.msra.mxu0 %v191
    %776 = vmatpush.msra.mxu0 %v187
    %777 = vmatpush.msra.mxu0 %v183
    %778 = vmatpush.msra.mxu0 %v179
    %779 = vmatpush.msra.mxu0 %v175
    %780 = vmatpush.msra.mxu0 %v171
    %781 = vmatpush.msra.mxu0 %v167
    %782 = vmatpush.msra.mxu0 %v163
    %783 = vmatpush.msra.mxu0 %v159
    %784 = vmatpush.msra.mxu0 %v155
    %785 = vmatpush.msra.mxu0 %v151
    %786 = vmatpush.msra.mxu0 %v147
    %787 = vmatmul.f32.gmra.mxu0 %v725
    %v788 = vpop.f32.mrf.mxu0
    %v789 = vadd.f32 0.0, %v788
    %790 = vdwg.mxu0
    %791 = vmatpush.msra.mxu0 %v208
    %792 = vmatpush.msra.mxu0 %v204
    %793 = vmatpush.msra.mxu0 %v200
    %794 = vmatpush.msra.mxu0 %v196
    %795 = vmatpush.msra.mxu0 %v192
    %796 = vmatpush.msra.mxu0 %v188
    %797 = vmatpush.msra.mxu0 %v184
    %798 = vmatpush.msra.mxu0 %v180
    %799 = vmatpush.msra.mxu0 %v176
    %800 = vmatpush.msra.mxu0 %v172
    %801 = vmatpush.msra.mxu0 %v168
    %802 = vmatpush.msra.mxu0 %v164
    %803 = vmatpush.msra.mxu0 %v160
    %804 = vmatpush.msra.mxu0 %v156
    %805 = vmatpush.msra.mxu0 %v152
    %806 = vmatpush.msra.mxu0 %v148
    %807 = vmatmul.f32.gmra.mxu0 %v725
    %v808 = vpop.f32.mrf.mxu0
    %v809 = vadd.f32 0.0, %v808
    %810 = vdwg.mxu0
    %v811 = vadd.f32 %v727, %v749
    %v812 = vadd.f32 %v728, %v769
    %v813 = vadd.f32 %v729, %v789
    %v814 = vadd.f32 %v730, %v809
    %v815 = vxor.u32 %v811, 2147483648
    %v816 = vmul.f32 %v815, 1.442695
    %v817 = vpow.pop %v816
    %v818 = vadd.f32 %v817, 1.0
    %v819 = vrcp.pop %v818
    %v820 = vmul.f32 %v818, %v819
    %v821 = vsub.f32 1.0, %v820
    %v822 = vmul.f32 %v819, %v821
    %v823 = vadd.f32 %v819, %v822
    %vm824 = vweird.f32 %v818
    %vm825 = vweird.f32 %v819
    %vm826 = vmor %vm824, %vm825
    %v827 = vsel %vm826, %v819, %v823
    %v828 = vand.u32 2147483647, %v818
    %vm829 = vcmp.eq.f32.partialorder %v828, 8.507059e+37
    %v830 = vand.u32 %v818, 2147483648
    %v831 = vor.u32 1.1754944e-38, %v830
    %v832 = vsel %vm829, %v831, %v827
    %v833 = vmul.f32 1.0, %v832
    %v834 = vxor.u32 %v812, 2147483648
    %v835 = vmul.f32 %v834, 1.442695
    %v836 = vpow.pop %v835
    %v837 = vadd.f32 %v836, 1.0
    %v838 = vrcp.pop %v837
    %v839 = vmul.f32 %v837, %v838
    %v840 = vsub.f32 1.0, %v839
    %v841 = vmul.f32 %v838, %v840
    %v842 = vadd.f32 %v838, %v841
    %vm843 = vweird.f32 %v837
    %vm844 = vweird.f32 %v838
    %vm845 = vmor %vm843, %vm844
    %v846 = vsel %vm845, %v838, %v842
    %v847 = vand.u32 2147483647, %v837
    %vm848 = vcmp.eq.f32.partialorder %v847, 8.507059e+37
    %v849 = vand.u32 %v837, 2147483648
    %v850 = vor.u32 1.1754944e-38, %v849
    %v851 = vsel %vm848, %v850, %v846
    %v852 = vmul.f32 1.0, %v851
    %v853 = vtanh.pop %v813
    %v854 = vxor.u32 %v814, 2147483648
    %v855 = vmul.f32 %v854, 1.442695
    %v856 = vpow.pop %v855
    %v857 = vadd.f32 %v856, 1.0
    %v858 = vrcp.pop %v857
    %v859 = vmul.f32 %v857, %v858
    %v860 = vsub.f32 1.0, %v859
    %v861 = vmul.f32 %v858, %v860
    %v862 = vadd.f32 %v858, %v861
    %vm863 = vweird.f32 %v857
    %vm864 = vweird.f32 %v858
    %vm865 = vmor %vm863, %vm864
    %v866 = vsel %vm865, %v858, %v862
    %v867 = vand.u32 2147483647, %v857
    %vm868 = vcmp.eq.f32.partialorder %v867, 8.507059e+37
    %v869 = vand.u32 %v857, 2147483648
    %v870 = vor.u32 1.1754944e-38, %v869
    %v871 = vsel %vm868, %v870, %v866
    %v872 = vmul.f32 1.0, %v871
    %v873 = vmul.f32 %v852, %v723
    %v874 = vmul.f32 %v833, %v853
    %v875 = vadd.f32 %v873, %v874
    %v876 = vtanh.pop %v875
    %v877 = vmul.f32 %v872, %v876
    %878 = vst [vmem:[#allocation2 + $0x10] sm:$0xff] %v877
    %v879 = vld [vmem:[#allocation3 + $0x60] sm:$0xff]
    %v880 = vld [vmem:[#allocation3 + $0x68] sm:$0xff]
    %v881 = vld [vmem:[#allocation3 + $0x70] sm:$0xff]
    %v882 = vld [vmem:[#allocation3 + $0x78] sm:$0xff]
    %883 = vmatpush.msra.mxu0 %v205
    %884 = vmatpush.msra.mxu0 %v201
    %885 = vmatpush.msra.mxu0 %v197
    %886 = vmatpush.msra.mxu0 %v193
    %887 = vmatpush.msra.mxu0 %v189
    %888 = vmatpush.msra.mxu0 %v185
    %889 = vmatpush.msra.mxu0 %v181
    %890 = vmatpush.msra.mxu0 %v177
    %891 = vmatpush.msra.mxu0 %v173
    %892 = vmatpush.msra.mxu0 %v169
    %893 = vmatpush.msra.mxu0 %v165
    %894 = vmatpush.msra.mxu0 %v161
    %895 = vmatpush.msra.mxu0 %v157
    %896 = vmatpush.msra.mxu0 %v153
    %897 = vmatpush.msra.mxu0 %v149
    %898 = vmatpush.msra.mxu0 %v145
    %899 = vmatmul.f32.gmra.mxu0 %v877
    %v900 = vpop.f32.mrf.mxu0
    %v901 = vadd.f32 0.0, %v900
    %902 = vdwg.mxu0
    %903 = vmatpush.msra.mxu0 %v206
    %904 = vmatpush.msra.mxu0 %v202
    %905 = vmatpush.msra.mxu0 %v198
    %906 = vmatpush.msra.mxu0 %v194
    %907 = vmatpush.msra.mxu0 %v190
    %908 = vmatpush.msra.mxu0 %v186
    %909 = vmatpush.msra.mxu0 %v182
    %910 = vmatpush.msra.mxu0 %v178
    %911 = vmatpush.msra.mxu0 %v174
    %912 = vmatpush.msra.mxu0 %v170
    %913 = vmatpush.msra.mxu0 %v166
    %914 = vmatpush.msra.mxu0 %v162
    %915 = vmatpush.msra.mxu0 %v158
    %916 = vmatpush.msra.mxu0 %v154
    %917 = vmatpush.msra.mxu0 %v150
    %918 = vmatpush.msra.mxu0 %v146
    %919 = vmatmul.f32.gmra.mxu0 %v877
    %v920 = vpop.f32.mrf.mxu0
    %v921 = vadd.f32 0.0, %v920
    %922 = vdwg.mxu0
    %923 = vmatpush.msra.mxu0 %v207
    %924 = vmatpush.msra.mxu0 %v203
    %925 = vmatpush.msra.mxu0 %v199
    %926 = vmatpush.msra.mxu0 %v195
    %927 = vmatpush.msra.mxu0 %v191
    %928 = vmatpush.msra.mxu0 %v187
    %929 = vmatpush.msra.mxu0 %v183
    %930 = vmatpush.msra.mxu0 %v179
    %931 = vmatpush.msra.mxu0 %v175
    %932 = vmatpush.msra.mxu0 %v171
    %933 = vmatpush.msra.mxu0 %v167
    %934 = vmatpush.msra.mxu0 %v163
    %935 = vmatpush.msra.mxu0 %v159
    %936 = vmatpush.msra.mxu0 %v155
    %937 = vmatpush.msra.mxu0 %v151
    %938 = vmatpush.msra.mxu0 %v147
    %939 = vmatmul.f32.gmra.mxu0 %v877
    %v940 = vpop.f32.mrf.mxu0
    %v941 = vadd.f32 0.0, %v940
    %942 = vdwg.mxu0
    %943 = vmatpush.msra.mxu0 %v208
    %944 = vmatpush.msra.mxu0 %v204
    %945 = vmatpush.msra.mxu0 %v200
    %946 = vmatpush.msra.mxu0 %v196
    %947 = vmatpush.msra.mxu0 %v192
    %948 = vmatpush.msra.mxu0 %v188
    %949 = vmatpush.msra.mxu0 %v184
    %950 = vmatpush.msra.mxu0 %v180
    %951 = vmatpush.msra.mxu0 %v176
    %952 = vmatpush.msra.mxu0 %v172
    %953 = vmatpush.msra.mxu0 %v168
    %954 = vmatpush.msra.mxu0 %v164
    %955 = vmatpush.msra.mxu0 %v160
    %956 = vmatpush.msra.mxu0 %v156
    %957 = vmatpush.msra.mxu0 %v152
    %958 = vmatpush.msra.mxu0 %v148
    %959 = vmatmul.f32.gmra.mxu0 %v877
    %v960 = vpop.f32.mrf.mxu0
    %v961 = vadd.f32 0.0, %v960
    %962 = vdwg.mxu0
    %v963 = vadd.f32 %v879, %v901
    %v964 = vadd.f32 %v880, %v921
    %v965 = vadd.f32 %v881, %v941
    %v966 = vadd.f32 %v882, %v961
    %v967 = vxor.u32 %v963, 2147483648
    %v968 = vmul.f32 %v967, 1.442695
    %v969 = vpow.pop %v968
    %v970 = vadd.f32 %v969, 1.0
    %v971 = vrcp.pop %v970
    %v972 = vmul.f32 %v970, %v971
    %v973 = vsub.f32 1.0, %v972
    %v974 = vmul.f32 %v971, %v973
    %v975 = vadd.f32 %v971, %v974
    %vm976 = vweird.f32 %v970
    %vm977 = vweird.f32 %v971
    %vm978 = vmor %vm976, %vm977
    %v979 = vsel %vm978, %v971, %v975
    %v980 = vand.u32 2147483647, %v970
    %vm981 = vcmp.eq.f32.partialorder %v980, 8.507059e+37
    %v982 = vand.u32 %v970, 2147483648
    %v983 = vor.u32 1.1754944e-38, %v982
    %v984 = vsel %vm981, %v983, %v979
    %v985 = vmul.f32 1.0, %v984
    %v986 = vxor.u32 %v964, 2147483648
    %v987 = vmul.f32 %v986, 1.442695
    %v988 = vpow.pop %v987
    %v989 = vadd.f32 %v988, 1.0
    %v990 = vrcp.pop %v989
    %v991 = vmul.f32 %v989, %v990
    %v992 = vsub.f32 1.0, %v991
    %v993 = vmul.f32 %v990, %v992
    %v994 = vadd.f32 %v990, %v993
    %vm995 = vweird.f32 %v989
    %vm996 = vweird.f32 %v990
    %vm997 = vmor %vm995, %vm996
    %v998 = vsel %vm997, %v990, %v994
    %v999 = vand.u32 2147483647, %v989
    %vm1000 = vcmp.eq.f32.partialorder %v999, 8.507059e+37
    %v1001 = vand.u32 %v989, 2147483648
    %v1002 = vor.u32 1.1754944e-38, %v1001
    %v1003 = vsel %vm1000, %v1002, %v998
    %v1004 = vmul.f32 1.0, %v1003
    %v1005 = vtanh.pop %v965
    %v1006 = vxor.u32 %v966, 2147483648
    %v1007 = vmul.f32 %v1006, 1.442695
    %v1008 = vpow.pop %v1007
    %v1009 = vadd.f32 %v1008, 1.0
    %v1010 = vrcp.pop %v1009
    %v1011 = vmul.f32 %v1009, %v1010
    %v1012 = vsub.f32 1.0, %v1011
    %v1013 = vmul.f32 %v1010, %v1012
    %v1014 = vadd.f32 %v1010, %v1013
    %vm1015 = vweird.f32 %v1009
    %vm1016 = vweird.f32 %v1010
    %vm1017 = vmor %vm1015, %vm1016
    %v1018 = vsel %vm1017, %v1010, %v1014
    %v1019 = vand.u32 2147483647, %v1009
    %vm1020 = vcmp.eq.f32.partialorder %v1019, 8.507059e+37
    %v1021 = vand.u32 %v1009, 2147483648
    %v1022 = vor.u32 1.1754944e-38, %v1021
    %v1023 = vsel %vm1020, %v1022, %v1018
    %v1024 = vmul.f32 1.0, %v1023
    %v1025 = vmul.f32 %v1004, %v875
    %v1026 = vmul.f32 %v985, %v1005
    %v1027 = vadd.f32 %v1025, %v1026
    %v1028 = vtanh.pop %v1027
    %v1029 = vmul.f32 %v1024, %v1028
    %1030 = vst [vmem:[#allocation2 + $0x18] sm:$0xff] %v1029
    %v1031 = vld [vmem:[#allocation3 + $0x80] sm:$0xff]
    %v1032 = vld [vmem:[#allocation3 + $0x88] sm:$0xff]
    %v1033 = vld [vmem:[#allocation3 + $0x90] sm:$0xff]
    %v1034 = vld [vmem:[#allocation3 + $0x98] sm:$0xff]
    %1035 = vmatpush.msra.mxu0 %v205
    %1036 = vmatpush.msra.mxu0 %v201
    %1037 = vmatpush.msra.mxu0 %v197
    %1038 = vmatpush.msra.mxu0 %v193
    %1039 = vmatpush.msra.mxu0 %v189
    %1040 = vmatpush.msra.mxu0 %v185
    %1041 = vmatpush.msra.mxu0 %v181
    %1042 = vmatpush.msra.mxu0 %v177
    %1043 = vmatpush.msra.mxu0 %v173
    %1044 = vmatpush.msra.mxu0 %v169
    %1045 = vmatpush.msra.mxu0 %v165
    %1046 = vmatpush.msra.mxu0 %v161
    %1047 = vmatpush.msra.mxu0 %v157
    %1048 = vmatpush.msra.mxu0 %v153
    %1049 = vmatpush.msra.mxu0 %v149
    %1050 = vmatpush.msra.mxu0 %v145
    %1051 = vmatmul.f32.gmra.mxu0 %v1029
    %v1052 = vpop.f32.mrf.mxu0
    %v1053 = vadd.f32 0.0, %v1052
    %1054 = vdwg.mxu0
    %1055 = vmatpush.msra.mxu0 %v206
    %1056 = vmatpush.msra.mxu0 %v202
    %1057 = vmatpush.msra.mxu0 %v198
    %1058 = vmatpush.msra.mxu0 %v194
    %1059 = vmatpush.msra.mxu0 %v190
    %1060 = vmatpush.msra.mxu0 %v186
    %1061 = vmatpush.msra.mxu0 %v182
    %1062 = vmatpush.msra.mxu0 %v178
    %1063 = vmatpush.msra.mxu0 %v174
    %1064 = vmatpush.msra.mxu0 %v170
    %1065 = vmatpush.msra.mxu0 %v166
    %1066 = vmatpush.msra.mxu0 %v162
    %1067 = vmatpush.msra.mxu0 %v158
    %1068 = vmatpush.msra.mxu0 %v154
    %1069 = vmatpush.msra.mxu0 %v150
    %1070 = vmatpush.msra.mxu0 %v146
    %1071 = vmatmul.f32.gmra.mxu0 %v1029
    %v1072 = vpop.f32.mrf.mxu0
    %v1073 = vadd.f32 0.0, %v1072
    %1074 = vdwg.mxu0
    %1075 = vmatpush.msra.mxu0 %v207
    %1076 = vmatpush.msra.mxu0 %v203
    %1077 = vmatpush.msra.mxu0 %v199
    %1078 = vmatpush.msra.mxu0 %v195
    %1079 = vmatpush.msra.mxu0 %v191
    %1080 = vmatpush.msra.mxu0 %v187
    %1081 = vmatpush.msra.mxu0 %v183
    %1082 = vmatpush.msra.mxu0 %v179
    %1083 = vmatpush.msra.mxu0 %v175
    %1084 = vmatpush.msra.mxu0 %v171
    %1085 = vmatpush.msra.mxu0 %v167
    %1086 = vmatpush.msra.mxu0 %v163
    %1087 = vmatpush.msra.mxu0 %v159
    %1088 = vmatpush.msra.mxu0 %v155
    %1089 = vmatpush.msra.mxu0 %v151
    %1090 = vmatpush.msra.mxu0 %v147
    %1091 = vmatmul.f32.gmra.mxu0 %v1029
    %v1092 = vpop.f32.mrf.mxu0
    %v1093 = vadd.f32 0.0, %v1092
    %1094 = vdwg.mxu0
    %1095 = vmatpush.msra.mxu0 %v208
    %1096 = vmatpush.msra.mxu0 %v204
    %1097 = vmatpush.msra.mxu0 %v200
    %1098 = vmatpush.msra.mxu0 %v196
    %1099 = vmatpush.msra.mxu0 %v192
    %1100 = vmatpush.msra.mxu0 %v188
    %1101 = vmatpush.msra.mxu0 %v184
    %1102 = vmatpush.msra.mxu0 %v180
    %1103 = vmatpush.msra.mxu0 %v176
    %1104 = vmatpush.msra.mxu0 %v172
    %1105 = vmatpush.msra.mxu0 %v168
    %1106 = vmatpush.msra.mxu0 %v164
    %1107 = vmatpush.msra.mxu0 %v160
    %1108 = vmatpush.msra.mxu0 %v156
    %1109 = vmatpush.msra.mxu0 %v152
    %1110 = vmatpush.msra.mxu0 %v148
    %1111 = vmatmul.f32.gmra.mxu0 %v1029
    %v1112 = vpop.f32.mrf.mxu0
    %v1113 = vadd.f32 0.0, %v1112
    %1114 = vdwg.mxu0
    %v1115 = vadd.f32 %v1031, %v1053
    %v1116 = vadd.f32 %v1032, %v1073
    %v1117 = vadd.f32 %v1033, %v1093
    %v1118 = vadd.f32 %v1034, %v1113
    %v1119 = vxor.u32 %v1115, 2147483648
    %v1120 = vmul.f32 %v1119, 1.442695
    %v1121 = vpow.pop %v1120
    %v1122 = vadd.f32 %v1121, 1.0
    %v1123 = vrcp.pop %v1122
    %v1124 = vmul.f32 %v1122, %v1123
    %v1125 = vsub.f32 1.0, %v1124
    %v1126 = vmul.f32 %v1123, %v1125
    %v1127 = vadd.f32 %v1123, %v1126
    %vm1128 = vweird.f32 %v1122
    %vm1129 = vweird.f32 %v1123
    %vm1130 = vmor %vm1128, %vm1129
    %v1131 = vsel %vm1130, %v1123, %v1127
    %v1132 = vand.u32 2147483647, %v1122
    %vm1133 = vcmp.eq.f32.partialorder %v1132, 8.507059e+37
    %v1134 = vand.u32 %v1122, 2147483648
    %v1135 = vor.u32 1.1754944e-38, %v1134
    %v1136 = vsel %vm1133, %v1135, %v1131
    %v1137 = vmul.f32 1.0, %v1136
    %v1138 = vxor.u32 %v1116, 2147483648
    %v1139 = vmul.f32 %v1138, 1.442695
    %v1140 = vpow.pop %v1139
    %v1141 = vadd.f32 %v1140, 1.0
    %v1142 = vrcp.pop %v1141
    %v1143 = vmul.f32 %v1141, %v1142
    %v1144 = vsub.f32 1.0, %v1143
    %v1145 = vmul.f32 %v1142, %v1144
    %v1146 = vadd.f32 %v1142, %v1145
    %vm1147 = vweird.f32 %v1141
    %vm1148 = vweird.f32 %v1142
    %vm1149 = vmor %vm1147, %vm1148
    %v1150 = vsel %vm1149, %v1142, %v1146
    %v1151 = vand.u32 2147483647, %v1141
    %vm1152 = vcmp.eq.f32.partialorder %v1151, 8.507059e+37
    %v1153 = vand.u32 %v1141, 2147483648
    %v1154 = vor.u32 1.1754944e-38, %v1153
    %v1155 = vsel %vm1152, %v1154, %v1150
    %v1156 = vmul.f32 1.0, %v1155
    %v1157 = vtanh.pop %v1117
    %v1158 = vxor.u32 %v1118, 2147483648
    %v1159 = vmul.f32 %v1158, 1.442695
    %v1160 = vpow.pop %v1159
    %v1161 = vadd.f32 %v1160, 1.0
    %v1162 = vrcp.pop %v1161
    %v1163 = vmul.f32 %v1161, %v1162
    %v1164 = vsub.f32 1.0, %v1163
    %v1165 = vmul.f32 %v1162, %v1164
    %v1166 = vadd.f32 %v1162, %v1165
    %vm1167 = vweird.f32 %v1161
    %vm1168 = vweird.f32 %v1162
    %vm1169 = vmor %vm1167, %vm1168
    %v1170 = vsel %vm1169, %v1162, %v1166
    %v1171 = vand.u32 2147483647, %v1161
    %vm1172 = vcmp.eq.f32.partialorder %v1171, 8.507059e+37
    %v1173 = vand.u32 %v1161, 2147483648
    %v1174 = vor.u32 1.1754944e-38, %v1173
    %v1175 = vsel %vm1172, %v1174, %v1170
    %v1176 = vmul.f32 1.0, %v1175
    %v1177 = vmul.f32 %v1156, %v1027
    %v1178 = vmul.f32 %v1137, %v1157
    %v1179 = vadd.f32 %v1177, %v1178
    %v1180 = vtanh.pop %v1179
    %v1181 = vmul.f32 %v1176, %v1180
    %1182 = vst [vmem:[#allocation2 + $0x20] sm:$0xff] %v1181
    %v1183 = vld [vmem:[#allocation3 + $0xa0] sm:$0xff]
    %v1184 = vld [vmem:[#allocation3 + $0xa8] sm:$0xff]
    %v1185 = vld [vmem:[#allocation3 + $0xb0] sm:$0xff]
    %v1186 = vld [vmem:[#allocation3 + $0xb8] sm:$0xff]
    %1187 = vmatpush.msra.mxu0 %v205
    %1188 = vmatpush.msra.mxu0 %v201
    %1189 = vmatpush.msra.mxu0 %v197
    %1190 = vmatpush.msra.mxu0 %v193
    %1191 = vmatpush.msra.mxu0 %v189
    %1192 = vmatpush.msra.mxu0 %v185
    %1193 = vmatpush.msra.mxu0 %v181
    %1194 = vmatpush.msra.mxu0 %v177
    %1195 = vmatpush.msra.mxu0 %v173
    %1196 = vmatpush.msra.mxu0 %v169
    %1197 = vmatpush.msra.mxu0 %v165
    %1198 = vmatpush.msra.mxu0 %v161
    %1199 = vmatpush.msra.mxu0 %v157
    %1200 = vmatpush.msra.mxu0 %v153
    %1201 = vmatpush.msra.mxu0 %v149
    %1202 = vmatpush.msra.mxu0 %v145
    %1203 = vmatmul.f32.gmra.mxu0 %v1181
    %v1204 = vpop.f32.mrf.mxu0
    %v1205 = vadd.f32 0.0, %v1204
    %1206 = vdwg.mxu0
    %1207 = vmatpush.msra.mxu0 %v206
    %1208 = vmatpush.msra.mxu0 %v202
    %1209 = vmatpush.msra.mxu0 %v198
    %1210 = vmatpush.msra.mxu0 %v194
    %1211 = vmatpush.msra.mxu0 %v190
    %1212 = vmatpush.msra.mxu0 %v186
    %1213 = vmatpush.msra.mxu0 %v182
    %1214 = vmatpush.msra.mxu0 %v178
    %1215 = vmatpush.msra.mxu0 %v174
    %1216 = vmatpush.msra.mxu0 %v170
    %1217 = vmatpush.msra.mxu0 %v166
    %1218 = vmatpush.msra.mxu0 %v162
    %1219 = vmatpush.msra.mxu0 %v158
    %1220 = vmatpush.msra.mxu0 %v154
    %1221 = vmatpush.msra.mxu0 %v150
    %1222 = vmatpush.msra.mxu0 %v146
    %1223 = vmatmul.f32.gmra.mxu0 %v1181
    %v1224 = vpop.f32.mrf.mxu0
    %v1225 = vadd.f32 0.0, %v1224
    %1226 = vdwg.mxu0
    %1227 = vmatpush.msra.mxu0 %v207
    %1228 = vmatpush.msra.mxu0 %v203
    %1229 = vmatpush.msra.mxu0 %v199
    %1230 = vmatpush.msra.mxu0 %v195
    %1231 = vmatpush.msra.mxu0 %v191
    %1232 = vmatpush.msra.mxu0 %v187
    %1233 = vmatpush.msra.mxu0 %v183
    %1234 = vmatpush.msra.mxu0 %v179
    %1235 = vmatpush.msra.mxu0 %v175
    %1236 = vmatpush.msra.mxu0 %v171
    %1237 = vmatpush.msra.mxu0 %v167
    %1238 = vmatpush.msra.mxu0 %v163
    %1239 = vmatpush.msra.mxu0 %v159
    %1240 = vmatpush.msra.mxu0 %v155
    %1241 = vmatpush.msra.mxu0 %v151
    %1242 = vmatpush.msra.mxu0 %v147
    %1243 = vmatmul.f32.gmra.mxu0 %v1181
    %v1244 = vpop.f32.mrf.mxu0
    %v1245 = vadd.f32 0.0, %v1244
    %1246 = vdwg.mxu0
    %1247 = vmatpush.msra.mxu0 %v208
    %1248 = vmatpush.msra.mxu0 %v204
    %1249 = vmatpush.msra.mxu0 %v200
    %1250 = vmatpush.msra.mxu0 %v196
    %1251 = vmatpush.msra.mxu0 %v192
    %1252 = vmatpush.msra.mxu0 %v188
    %1253 = vmatpush.msra.mxu0 %v184
    %1254 = vmatpush.msra.mxu0 %v180
    %1255 = vmatpush.msra.mxu0 %v176
    %1256 = vmatpush.msra.mxu0 %v172
    %1257 = vmatpush.msra.mxu0 %v168
    %1258 = vmatpush.msra.mxu0 %v164
    %1259 = vmatpush.msra.mxu0 %v160
    %1260 = vmatpush.msra.mxu0 %v156
    %1261 = vmatpush.msra.mxu0 %v152
    %1262 = vmatpush.msra.mxu0 %v148
    %1263 = vmatmul.f32.gmra.mxu0 %v1181
    %v1264 = vpop.f32.mrf.mxu0
    %v1265 = vadd.f32 0.0, %v1264
    %1266 = vdwg.mxu0
    %v1267 = vadd.f32 %v1183, %v1205
    %v1268 = vadd.f32 %v1184, %v1225
    %v1269 = vadd.f32 %v1185, %v1245
    %v1270 = vadd.f32 %v1186, %v1265
    %v1271 = vxor.u32 %v1267, 2147483648
    %v1272 = vmul.f32 %v1271, 1.442695
    %v1273 = vpow.pop %v1272
    %v1274 = vadd.f32 %v1273, 1.0
    %v1275 = vrcp.pop %v1274
    %v1276 = vmul.f32 %v1274, %v1275
    %v1277 = vsub.f32 1.0, %v1276
    %v1278 = vmul.f32 %v1275, %v1277
    %v1279 = vadd.f32 %v1275, %v1278
    %vm1280 = vweird.f32 %v1274
    %vm1281 = vweird.f32 %v1275
    %vm1282 = vmor %vm1280, %vm1281
    %v1283 = vsel %vm1282, %v1275, %v1279
    %v1284 = vand.u32 2147483647, %v1274
    %vm1285 = vcmp.eq.f32.partialorder %v1284, 8.507059e+37
    %v1286 = vand.u32 %v1274, 2147483648
    %v1287 = vor.u32 1.1754944e-38, %v1286
    %v1288 = vsel %vm1285, %v1287, %v1283
    %v1289 = vmul.f32 1.0, %v1288
    %v1290 = vxor.u32 %v1268, 2147483648
    %v1291 = vmul.f32 %v1290, 1.442695
    %v1292 = vpow.pop %v1291
    %v1293 = vadd.f32 %v1292, 1.0
    %v1294 = vrcp.pop %v1293
    %v1295 = vmul.f32 %v1293, %v1294
    %v1296 = vsub.f32 1.0, %v1295
    %v1297 = vmul.f32 %v1294, %v1296
    %v1298 = vadd.f32 %v1294, %v1297
    %vm1299 = vweird.f32 %v1293
    %vm1300 = vweird.f32 %v1294
    %vm1301 = vmor %vm1299, %vm1300
    %v1302 = vsel %vm1301, %v1294, %v1298
    %v1303 = vand.u32 2147483647, %v1293
    %vm1304 = vcmp.eq.f32.partialorder %v1303, 8.507059e+37
    %v1305 = vand.u32 %v1293, 2147483648
    %v1306 = vor.u32 1.1754944e-38, %v1305
    %v1307 = vsel %vm1304, %v1306, %v1302
    %v1308 = vmul.f32 1.0, %v1307
    %v1309 = vtanh.pop %v1269
    %v1310 = vxor.u32 %v1270, 2147483648
    %v1311 = vmul.f32 %v1310, 1.442695
    %v1312 = vpow.pop %v1311
    %v1313 = vadd.f32 %v1312, 1.0
    %v1314 = vrcp.pop %v1313
    %v1315 = vmul.f32 %v1313, %v1314
    %v1316 = vsub.f32 1.0, %v1315
    %v1317 = vmul.f32 %v1314, %v1316
    %v1318 = vadd.f32 %v1314, %v1317
    %vm1319 = vweird.f32 %v1313
    %vm1320 = vweird.f32 %v1314
    %vm1321 = vmor %vm1319, %vm1320
    %v1322 = vsel %vm1321, %v1314, %v1318
    %v1323 = vand.u32 2147483647, %v1313
    %vm1324 = vcmp.eq.f32.partialorder %v1323, 8.507059e+37
    %v1325 = vand.u32 %v1313, 2147483648
    %v1326 = vor.u32 1.1754944e-38, %v1325
    %v1327 = vsel %vm1324, %v1326, %v1322
    %v1328 = vmul.f32 1.0, %v1327
    %v1329 = vmul.f32 %v1308, %v1179
    %v1330 = vmul.f32 %v1289, %v1309
    %v1331 = vadd.f32 %v1329, %v1330
    %v1332 = vtanh.pop %v1331
    %v1333 = vmul.f32 %v1328, %v1332
    %1334 = vst [vmem:[#allocation2 + $0x28] sm:$0xff] %v1333
    %v1335 = vld [vmem:[#allocation3 + $0xc0] sm:$0xff]
    %v1336 = vld [vmem:[#allocation3 + $0xc8] sm:$0xff]
    %v1337 = vld [vmem:[#allocation3 + $0xd0] sm:$0xff]
    %v1338 = vld [vmem:[#allocation3 + $0xd8] sm:$0xff]
    %1339 = vmatpush.msra.mxu0 %v205
    %1340 = vmatpush.msra.mxu0 %v201
    %1341 = vmatpush.msra.mxu0 %v197
    %1342 = vmatpush.msra.mxu0 %v193
    %1343 = vmatpush.msra.mxu0 %v189
    %1344 = vmatpush.msra.mxu0 %v185
    %1345 = vmatpush.msra.mxu0 %v181
    %1346 = vmatpush.msra.mxu0 %v177
    %1347 = vmatpush.msra.mxu0 %v173
    %1348 = vmatpush.msra.mxu0 %v169
    %1349 = vmatpush.msra.mxu0 %v165
    %1350 = vmatpush.msra.mxu0 %v161
    %1351 = vmatpush.msra.mxu0 %v157
    %1352 = vmatpush.msra.mxu0 %v153
    %1353 = vmatpush.msra.mxu0 %v149
    %1354 = vmatpush.msra.mxu0 %v145
    %1355 = vmatmul.f32.gmra.mxu0 %v1333
    %v1356 = vpop.f32.mrf.mxu0
    %v1357 = vadd.f32 0.0, %v1356
    %1358 = vdwg.mxu0
    %1359 = vmatpush.msra.mxu0 %v206
    %1360 = vmatpush.msra.mxu0 %v202
    %1361 = vmatpush.msra.mxu0 %v198
    %1362 = vmatpush.msra.mxu0 %v194
    %1363 = vmatpush.msra.mxu0 %v190
    %1364 = vmatpush.msra.mxu0 %v186
    %1365 = vmatpush.msra.mxu0 %v182
    %1366 = vmatpush.msra.mxu0 %v178
    %1367 = vmatpush.msra.mxu0 %v174
    %1368 = vmatpush.msra.mxu0 %v170
    %1369 = vmatpush.msra.mxu0 %v166
    %1370 = vmatpush.msra.mxu0 %v162
    %1371 = vmatpush.msra.mxu0 %v158
    %1372 = vmatpush.msra.mxu0 %v154
    %1373 = vmatpush.msra.mxu0 %v150
    %1374 = vmatpush.msra.mxu0 %v146
    %1375 = vmatmul.f32.gmra.mxu0 %v1333
    %v1376 = vpop.f32.mrf.mxu0
    %v1377 = vadd.f32 0.0, %v1376
    %1378 = vdwg.mxu0
    %1379 = vmatpush.msra.mxu0 %v207
    %1380 = vmatpush.msra.mxu0 %v203
    %1381 = vmatpush.msra.mxu0 %v199
    %1382 = vmatpush.msra.mxu0 %v195
    %1383 = vmatpush.msra.mxu0 %v191
    %1384 = vmatpush.msra.mxu0 %v187
    %1385 = vmatpush.msra.mxu0 %v183
    %1386 = vmatpush.msra.mxu0 %v179
    %1387 = vmatpush.msra.mxu0 %v175
    %1388 = vmatpush.msra.mxu0 %v171
    %1389 = vmatpush.msra.mxu0 %v167
    %1390 = vmatpush.msra.mxu0 %v163
    %1391 = vmatpush.msra.mxu0 %v159
    %1392 = vmatpush.msra.mxu0 %v155
    %1393 = vmatpush.msra.mxu0 %v151
    %1394 = vmatpush.msra.mxu0 %v147
    %1395 = vmatmul.f32.gmra.mxu0 %v1333
    %v1396 = vpop.f32.mrf.mxu0
    %v1397 = vadd.f32 0.0, %v1396
    %1398 = vdwg.mxu0
    %1399 = vmatpush.msra.mxu0 %v208
    %1400 = vmatpush.msra.mxu0 %v204
    %1401 = vmatpush.msra.mxu0 %v200
    %1402 = vmatpush.msra.mxu0 %v196
    %1403 = vmatpush.msra.mxu0 %v192
    %1404 = vmatpush.msra.mxu0 %v188
    %1405 = vmatpush.msra.mxu0 %v184
    %1406 = vmatpush.msra.mxu0 %v180
    %1407 = vmatpush.msra.mxu0 %v176
    %1408 = vmatpush.msra.mxu0 %v172
    %1409 = vmatpush.msra.mxu0 %v168
    %1410 = vmatpush.msra.mxu0 %v164
    %1411 = vmatpush.msra.mxu0 %v160
    %1412 = vmatpush.msra.mxu0 %v156
    %1413 = vmatpush.msra.mxu0 %v152
    %1414 = vmatpush.msra.mxu0 %v148
    %1415 = vmatmul.f32.gmra.mxu0 %v1333
    %v1416 = vpop.f32.mrf.mxu0
    %v1417 = vadd.f32 0.0, %v1416
    %1418 = vdwg.mxu0
    %v1419 = vadd.f32 %v1335, %v1357
    %v1420 = vadd.f32 %v1336, %v1377
    %v1421 = vadd.f32 %v1337, %v1397
    %v1422 = vadd.f32 %v1338, %v1417
    %v1423 = vxor.u32 %v1419, 2147483648
    %v1424 = vmul.f32 %v1423, 1.442695
    %v1425 = vpow.pop %v1424
    %v1426 = vadd.f32 %v1425, 1.0
    %v1427 = vrcp.pop %v1426
    %v1428 = vmul.f32 %v1426, %v1427
    %v1429 = vsub.f32 1.0, %v1428
    %v1430 = vmul.f32 %v1427, %v1429
    %v1431 = vadd.f32 %v1427, %v1430
    %vm1432 = vweird.f32 %v1426
    %vm1433 = vweird.f32 %v1427
    %vm1434 = vmor %vm1432, %vm1433
    %v1435 = vsel %vm1434, %v1427, %v1431
    %v1436 = vand.u32 2147483647, %v1426
    %vm1437 = vcmp.eq.f32.partialorder %v1436, 8.507059e+37
    %v1438 = vand.u32 %v1426, 2147483648
    %v1439 = vor.u32 1.1754944e-38, %v1438
    %v1440 = vsel %vm1437, %v1439, %v1435
    %v1441 = vmul.f32 1.0, %v1440
    %v1442 = vxor.u32 %v1420, 2147483648
    %v1443 = vmul.f32 %v1442, 1.442695
    %v1444 = vpow.pop %v1443
    %v1445 = vadd.f32 %v1444, 1.0
    %v1446 = vrcp.pop %v1445
    %v1447 = vmul.f32 %v1445, %v1446
    %v1448 = vsub.f32 1.0, %v1447
    %v1449 = vmul.f32 %v1446, %v1448
    %v1450 = vadd.f32 %v1446, %v1449
    %vm1451 = vweird.f32 %v1445
    %vm1452 = vweird.f32 %v1446
    %vm1453 = vmor %vm1451, %vm1452
    %v1454 = vsel %vm1453, %v1446, %v1450
    %v1455 = vand.u32 2147483647, %v1445
    %vm1456 = vcmp.eq.f32.partialorder %v1455, 8.507059e+37
    %v1457 = vand.u32 %v1445, 2147483648
    %v1458 = vor.u32 1.1754944e-38, %v1457
    %v1459 = vsel %vm1456, %v1458, %v1454
    %v1460 = vmul.f32 1.0, %v1459
    %v1461 = vtanh.pop %v1421
    %v1462 = vxor.u32 %v1422, 2147483648
    %v1463 = vmul.f32 %v1462, 1.442695
    %v1464 = vpow.pop %v1463
    %v1465 = vadd.f32 %v1464, 1.0
    %v1466 = vrcp.pop %v1465
    %v1467 = vmul.f32 %v1465, %v1466
    %v1468 = vsub.f32 1.0, %v1467
    %v1469 = vmul.f32 %v1466, %v1468
    %v1470 = vadd.f32 %v1466, %v1469
    %vm1471 = vweird.f32 %v1465
    %vm1472 = vweird.f32 %v1466
    %vm1473 = vmor %vm1471, %vm1472
    %v1474 = vsel %vm1473, %v1466, %v1470
    %v1475 = vand.u32 2147483647, %v1465
    %vm1476 = vcmp.eq.f32.partialorder %v1475, 8.507059e+37
    %v1477 = vand.u32 %v1465, 2147483648
    %v1478 = vor.u32 1.1754944e-38, %v1477
    %v1479 = vsel %vm1476, %v1478, %v1474
    %v1480 = vmul.f32 1.0, %v1479
    %v1481 = vmul.f32 %v1460, %v1331
    %v1482 = vmul.f32 %v1441, %v1461
    %v1483 = vadd.f32 %v1481, %v1482
    %v1484 = vtanh.pop %v1483
    %v1485 = vmul.f32 %v1480, %v1484
    %1486 = vst [vmem:[#allocation2 + $0x30] sm:$0xff] %v1485
    %v1487 = vld [vmem:[#allocation3 + $0xe0] sm:$0xff]
    %v1488 = vld [vmem:[#allocation3 + $0xe8] sm:$0xff]
    %v1489 = vld [vmem:[#allocation3 + $0xf0] sm:$0xff]
    %v1490 = vld [vmem:[#allocation3 + $0xf8] sm:$0xff]
    %1491 = vmatpush.msra.mxu0 %v205
    %1492 = vmatpush.msra.mxu0 %v201
    %1493 = vmatpush.msra.mxu0 %v197
    %1494 = vmatpush.msra.mxu0 %v193
    %1495 = vmatpush.msra.mxu0 %v189
    %1496 = vmatpush.msra.mxu0 %v185
    %1497 = vmatpush.msra.mxu0 %v181
    %1498 = vmatpush.msra.mxu0 %v177
    %1499 = vmatpush.msra.mxu0 %v173
    %1500 = vmatpush.msra.mxu0 %v169
    %1501 = vmatpush.msra.mxu0 %v165
    %1502 = vmatpush.msra.mxu0 %v161
    %1503 = vmatpush.msra.mxu0 %v157
    %1504 = vmatpush.msra.mxu0 %v153
    %1505 = vmatpush.msra.mxu0 %v149
    %1506 = vmatpush.msra.mxu0 %v145
    %1507 = vmatmul.f32.gmra.mxu0 %v1485
    %v1508 = vpop.f32.mrf.mxu0
    %v1509 = vadd.f32 0.0, %v1508
    %1510 = vdwg.mxu0
    %1511 = vmatpush.msra.mxu0 %v206
    %1512 = vmatpush.msra.mxu0 %v202
    %1513 = vmatpush.msra.mxu0 %v198
    %1514 = vmatpush.msra.mxu0 %v194
    %1515 = vmatpush.msra.mxu0 %v190
    %1516 = vmatpush.msra.mxu0 %v186
    %1517 = vmatpush.msra.mxu0 %v182
    %1518 = vmatpush.msra.mxu0 %v178
    %1519 = vmatpush.msra.mxu0 %v174
    %1520 = vmatpush.msra.mxu0 %v170
    %1521 = vmatpush.msra.mxu0 %v166
    %1522 = vmatpush.msra.mxu0 %v162
    %1523 = vmatpush.msra.mxu0 %v158
    %1524 = vmatpush.msra.mxu0 %v154
    %1525 = vmatpush.msra.mxu0 %v150
    %1526 = vmatpush.msra.mxu0 %v146
    %1527 = vmatmul.f32.gmra.mxu0 %v1485
    %v1528 = vpop.f32.mrf.mxu0
    %v1529 = vadd.f32 0.0, %v1528
    %1530 = vdwg.mxu0
    %1531 = vmatpush.msra.mxu0 %v207
    %1532 = vmatpush.msra.mxu0 %v203
    %1533 = vmatpush.msra.mxu0 %v199
    %1534 = vmatpush.msra.mxu0 %v195
    %1535 = vmatpush.msra.mxu0 %v191
    %1536 = vmatpush.msra.mxu0 %v187
    %1537 = vmatpush.msra.mxu0 %v183
    %1538 = vmatpush.msra.mxu0 %v179
    %1539 = vmatpush.msra.mxu0 %v175
    %1540 = vmatpush.msra.mxu0 %v171
    %1541 = vmatpush.msra.mxu0 %v167
    %1542 = vmatpush.msra.mxu0 %v163
    %1543 = vmatpush.msra.mxu0 %v159
    %1544 = vmatpush.msra.mxu0 %v155
    %1545 = vmatpush.msra.mxu0 %v151
    %1546 = vmatpush.msra.mxu0 %v147
    %1547 = vmatmul.f32.gmra.mxu0 %v1485
    %v1548 = vpop.f32.mrf.mxu0
    %v1549 = vadd.f32 0.0, %v1548
    %1550 = vdwg.mxu0
    %1551 = vmatpush.msra.mxu0 %v208
    %1552 = vmatpush.msra.mxu0 %v204
    %1553 = vmatpush.msra.mxu0 %v200
    %1554 = vmatpush.msra.mxu0 %v196
    %1555 = vmatpush.msra.mxu0 %v192
    %1556 = vmatpush.msra.mxu0 %v188
    %1557 = vmatpush.msra.mxu0 %v184
    %1558 = vmatpush.msra.mxu0 %v180
    %1559 = vmatpush.msra.mxu0 %v176
    %1560 = vmatpush.msra.mxu0 %v172
    %1561 = vmatpush.msra.mxu0 %v168
    %1562 = vmatpush.msra.mxu0 %v164
    %1563 = vmatpush.msra.mxu0 %v160
    %1564 = vmatpush.msra.mxu0 %v156
    %1565 = vmatpush.msra.mxu0 %v152
    %1566 = vmatpush.msra.mxu0 %v148
    %1567 = vmatmul.f32.gmra.mxu0 %v1485
    %v1568 = vpop.f32.mrf.mxu0
    %v1569 = vadd.f32 0.0, %v1568
    %1570 = vdwg.mxu0
    %v1571 = vadd.f32 %v1487, %v1509
    %v1572 = vadd.f32 %v1488, %v1529
    %v1573 = vadd.f32 %v1489, %v1549
    %v1574 = vadd.f32 %v1490, %v1569
    %v1575 = vxor.u32 %v1571, 2147483648
    %v1576 = vmul.f32 %v1575, 1.442695
    %v1577 = vpow.pop %v1576
    %v1578 = vadd.f32 %v1577, 1.0
    %v1579 = vrcp.pop %v1578
    %v1580 = vmul.f32 %v1578, %v1579
    %v1581 = vsub.f32 1.0, %v1580
    %v1582 = vmul.f32 %v1579, %v1581
    %v1583 = vadd.f32 %v1579, %v1582
    %vm1584 = vweird.f32 %v1578
    %vm1585 = vweird.f32 %v1579
    %vm1586 = vmor %vm1584, %vm1585
    %v1587 = vsel %vm1586, %v1579, %v1583
    %v1588 = vand.u32 2147483647, %v1578
    %vm1589 = vcmp.eq.f32.partialorder %v1588, 8.507059e+37
    %v1590 = vand.u32 %v1578, 2147483648
    %v1591 = vor.u32 1.1754944e-38, %v1590
    %v1592 = vsel %vm1589, %v1591, %v1587
    %v1593 = vmul.f32 1.0, %v1592
    %v1594 = vxor.u32 %v1572, 2147483648
    %v1595 = vmul.f32 %v1594, 1.442695
    %v1596 = vpow.pop %v1595
    %v1597 = vadd.f32 %v1596, 1.0
    %v1598 = vrcp.pop %v1597
    %v1599 = vmul.f32 %v1597, %v1598
    %v1600 = vsub.f32 1.0, %v1599
    %v1601 = vmul.f32 %v1598, %v1600
    %v1602 = vadd.f32 %v1598, %v1601
    %vm1603 = vweird.f32 %v1597
    %vm1604 = vweird.f32 %v1598
    %vm1605 = vmor %vm1603, %vm1604
    %v1606 = vsel %vm1605, %v1598, %v1602
    %v1607 = vand.u32 2147483647, %v1597
    %vm1608 = vcmp.eq.f32.partialorder %v1607, 8.507059e+37
    %v1609 = vand.u32 %v1597, 2147483648
    %v1610 = vor.u32 1.1754944e-38, %v1609
    %v1611 = vsel %vm1608, %v1610, %v1606
    %v1612 = vmul.f32 1.0, %v1611
    %v1613 = vtanh.pop %v1573
    %v1614 = vxor.u32 %v1574, 2147483648
    %v1615 = vmul.f32 %v1614, 1.442695
    %v1616 = vpow.pop %v1615
    %v1617 = vadd.f32 %v1616, 1.0
    %v1618 = vrcp.pop %v1617
    %v1619 = vmul.f32 %v1617, %v1618
    %v1620 = vsub.f32 1.0, %v1619
    %v1621 = vmul.f32 %v1618, %v1620
    %v1622 = vadd.f32 %v1618, %v1621
    %vm1623 = vweird.f32 %v1617
    %vm1624 = vweird.f32 %v1618
    %vm1625 = vmor %vm1623, %vm1624
    %v1626 = vsel %vm1625, %v1618, %v1622
    %v1627 = vand.u32 2147483647, %v1617
    %vm1628 = vcmp.eq.f32.partialorder %v1627, 8.507059e+37
    %v1629 = vand.u32 %v1617, 2147483648
    %v1630 = vor.u32 1.1754944e-38, %v1629
    %v1631 = vsel %vm1628, %v1630, %v1626
    %v1632 = vmul.f32 1.0, %v1631
    %v1633 = vmul.f32 %v1612, %v1483
    %v1634 = vmul.f32 %v1593, %v1613
    %v1635 = vadd.f32 %v1633, %v1634
    %v1636 = vtanh.pop %v1635
    %v1637 = vmul.f32 %v1632, %v1636
    %1638 = vst [vmem:[#allocation2 + $0x38] sm:$0xff] %v1637
    %s1639 = scalar_lea.vmem [#allocation7], 512
    %v1640 = vld [vmem:[%s1639] sm:$0xff]
    %v1641 = vld [vmem:[%s1639 + $0x8] sm:$0xff]
    %v1642 = vld [vmem:[%s1639 + $0x10] sm:$0xff]
    %v1643 = vld [vmem:[%s1639 + $0x18] sm:$0xff]
    %v1644 = vld [vmem:[%s1639 + $0x20] sm:$0xff]
    %v1645 = vld [vmem:[%s1639 + $0x28] sm:$0xff]
    %v1646 = vld [vmem:[%s1639 + $0x30] sm:$0xff]
    %v1647 = vld [vmem:[%s1639 + $0x38] sm:$0xff]
    %v1648 = vld [vmem:[%s1639 + $0x40] sm:$0xff]
    %v1649 = vld [vmem:[%s1639 + $0x48] sm:$0xff]
    %v1650 = vld [vmem:[%s1639 + $0x50] sm:$0xff]
    %v1651 = vld [vmem:[%s1639 + $0x58] sm:$0xff]
    %v1652 = vld [vmem:[%s1639 + $0x60] sm:$0xff]
    %v1653 = vld [vmem:[%s1639 + $0x68] sm:$0xff]
    %v1654 = vld [vmem:[%s1639 + $0x70] sm:$0xff]
    %v1655 = vld [vmem:[%s1639 + $0x78] sm:$0xff]
    %v1656 = vld [vmem:[%s1639 + $0x80] sm:$0xff]
    %v1657 = vld [vmem:[%s1639 + $0x88] sm:$0xff]
    %v1658 = vld [vmem:[%s1639 + $0x90] sm:$0xff]
    %v1659 = vld [vmem:[%s1639 + $0x98] sm:$0xff]
    %v1660 = vld [vmem:[%s1639 + $0xa0] sm:$0xff]
    %v1661 = vld [vmem:[%s1639 + $0xa8] sm:$0xff]
    %v1662 = vld [vmem:[%s1639 + $0xb0] sm:$0xff]
    %v1663 = vld [vmem:[%s1639 + $0xb8] sm:$0xff]
    %v1664 = vld [vmem:[%s1639 + $0xc0] sm:$0xff]
    %v1665 = vld [vmem:[%s1639 + $0xc8] sm:$0xff]
    %v1666 = vld [vmem:[%s1639 + $0xd0] sm:$0xff]
    %v1667 = vld [vmem:[%s1639 + $0xd8] sm:$0xff]
    %v1668 = vld [vmem:[%s1639 + $0xe0] sm:$0xff]
    %v1669 = vld [vmem:[%s1639 + $0xe8] sm:$0xff]
    %v1670 = vld [vmem:[%s1639 + $0xf0] sm:$0xff]
    %v1671 = vld [vmem:[%s1639 + $0xf8] sm:$0xff]
    %v1672 = vld [vmem:[%s1639 + $0x100] sm:$0xff]
    %v1673 = vld [vmem:[%s1639 + $0x108] sm:$0xff]
    %v1674 = vld [vmem:[%s1639 + $0x110] sm:$0xff]
    %v1675 = vld [vmem:[%s1639 + $0x118] sm:$0xff]
    %v1676 = vld [vmem:[%s1639 + $0x120] sm:$0xff]
    %v1677 = vld [vmem:[%s1639 + $0x128] sm:$0xff]
    %v1678 = vld [vmem:[%s1639 + $0x130] sm:$0xff]
    %v1679 = vld [vmem:[%s1639 + $0x138] sm:$0xff]
    %v1680 = vld [vmem:[%s1639 + $0x140] sm:$0xff]
    %v1681 = vld [vmem:[%s1639 + $0x148] sm:$0xff]
    %v1682 = vld [vmem:[%s1639 + $0x150] sm:$0xff]
    %v1683 = vld [vmem:[%s1639 + $0x158] sm:$0xff]
    %v1684 = vld [vmem:[%s1639 + $0x160] sm:$0xff]
    %v1685 = vld [vmem:[%s1639 + $0x168] sm:$0xff]
    %v1686 = vld [vmem:[%s1639 + $0x170] sm:$0xff]
    %v1687 = vld [vmem:[%s1639 + $0x178] sm:$0xff]
    %v1688 = vld [vmem:[%s1639 + $0x180] sm:$0xff]
    %v1689 = vld [vmem:[%s1639 + $0x188] sm:$0xff]
    %v1690 = vld [vmem:[%s1639 + $0x190] sm:$0xff]
    %v1691 = vld [vmem:[%s1639 + $0x198] sm:$0xff]
    %v1692 = vld [vmem:[%s1639 + $0x1a0] sm:$0xff]
    %v1693 = vld [vmem:[%s1639 + $0x1a8] sm:$0xff]
    %v1694 = vld [vmem:[%s1639 + $0x1b0] sm:$0xff]
    %v1695 = vld [vmem:[%s1639 + $0x1b8] sm:$0xff]
    %v1696 = vld [vmem:[%s1639 + $0x1c0] sm:$0xff]
    %v1697 = vld [vmem:[%s1639 + $0x1c8] sm:$0xff]
    %v1698 = vld [vmem:[%s1639 + $0x1d0] sm:$0xff]
    %v1699 = vld [vmem:[%s1639 + $0x1d8] sm:$0xff]
    %v1700 = vld [vmem:[%s1639 + $0x1e0] sm:$0xff]
    %v1701 = vld [vmem:[%s1639 + $0x1e8] sm:$0xff]
    %v1702 = vld [vmem:[%s1639 + $0x1f0] sm:$0xff]
    %v1703 = vld [vmem:[%s1639 + $0x1f8] sm:$0xff]
    %s1704 = scalar_lea.vmem [#allocation9], 512
    %v1705 = vld [vmem:[%s1704] sm:$0xff]
    %v1706 = vld [vmem:[%s1704 + $0x8] sm:$0xff]
    %v1707 = vld [vmem:[%s1704 + $0x10] sm:$0xff]
    %v1708 = vld [vmem:[%s1704 + $0x18] sm:$0xff]
    %v1709 = vld [vmem:[%s1704 + $0x20] sm:$0xff]
    %v1710 = vld [vmem:[%s1704 + $0x28] sm:$0xff]
    %v1711 = vld [vmem:[%s1704 + $0x30] sm:$0xff]
    %v1712 = vld [vmem:[%s1704 + $0x38] sm:$0xff]
    %v1713 = vld [vmem:[%s1704 + $0x40] sm:$0xff]
    %v1714 = vld [vmem:[%s1704 + $0x48] sm:$0xff]
    %v1715 = vld [vmem:[%s1704 + $0x50] sm:$0xff]
    %v1716 = vld [vmem:[%s1704 + $0x58] sm:$0xff]
    %v1717 = vld [vmem:[%s1704 + $0x60] sm:$0xff]
    %v1718 = vld [vmem:[%s1704 + $0x68] sm:$0xff]
    %v1719 = vld [vmem:[%s1704 + $0x70] sm:$0xff]
    %v1720 = vld [vmem:[%s1704 + $0x78] sm:$0xff]
    %v1721 = vld [vmem:[%s1704 + $0x80] sm:$0xff]
    %v1722 = vld [vmem:[%s1704 + $0x88] sm:$0xff]
    %v1723 = vld [vmem:[%s1704 + $0x90] sm:$0xff]
    %v1724 = vld [vmem:[%s1704 + $0x98] sm:$0xff]
    %v1725 = vld [vmem:[%s1704 + $0xa0] sm:$0xff]
    %v1726 = vld [vmem:[%s1704 + $0xa8] sm:$0xff]
    %v1727 = vld [vmem:[%s1704 + $0xb0] sm:$0xff]
    %v1728 = vld [vmem:[%s1704 + $0xb8] sm:$0xff]
    %v1729 = vld [vmem:[%s1704 + $0xc0] sm:$0xff]
    %v1730 = vld [vmem:[%s1704 + $0xc8] sm:$0xff]
    %v1731 = vld [vmem:[%s1704 + $0xd0] sm:$0xff]
    %v1732 = vld [vmem:[%s1704 + $0xd8] sm:$0xff]
    %v1733 = vld [vmem:[%s1704 + $0xe0] sm:$0xff]
    %v1734 = vld [vmem:[%s1704 + $0xe8] sm:$0xff]
    %v1735 = vld [vmem:[%s1704 + $0xf0] sm:$0xff]
    %v1736 = vld [vmem:[%s1704 + $0xf8] sm:$0xff]
    %v1737 = vld [vmem:[%s1704 + $0x100] sm:$0xff]
    %v1738 = vld [vmem:[%s1704 + $0x108] sm:$0xff]
    %v1739 = vld [vmem:[%s1704 + $0x110] sm:$0xff]
    %v1740 = vld [vmem:[%s1704 + $0x118] sm:$0xff]
    %v1741 = vld [vmem:[%s1704 + $0x120] sm:$0xff]
    %v1742 = vld [vmem:[%s1704 + $0x128] sm:$0xff]
    %v1743 = vld [vmem:[%s1704 + $0x130] sm:$0xff]
    %v1744 = vld [vmem:[%s1704 + $0x138] sm:$0xff]
    %v1745 = vld [vmem:[%s1704 + $0x140] sm:$0xff]
    %v1746 = vld [vmem:[%s1704 + $0x148] sm:$0xff]
    %v1747 = vld [vmem:[%s1704 + $0x150] sm:$0xff]
    %v1748 = vld [vmem:[%s1704 + $0x158] sm:$0xff]
    %v1749 = vld [vmem:[%s1704 + $0x160] sm:$0xff]
    %v1750 = vld [vmem:[%s1704 + $0x168] sm:$0xff]
    %v1751 = vld [vmem:[%s1704 + $0x170] sm:$0xff]
    %v1752 = vld [vmem:[%s1704 + $0x178] sm:$0xff]
    %v1753 = vld [vmem:[%s1704 + $0x180] sm:$0xff]
    %v1754 = vld [vmem:[%s1704 + $0x188] sm:$0xff]
    %v1755 = vld [vmem:[%s1704 + $0x190] sm:$0xff]
    %v1756 = vld [vmem:[%s1704 + $0x198] sm:$0xff]
    %v1757 = vld [vmem:[%s1704 + $0x1a0] sm:$0xff]
    %v1758 = vld [vmem:[%s1704 + $0x1a8] sm:$0xff]
    %v1759 = vld [vmem:[%s1704 + $0x1b0] sm:$0xff]
    %v1760 = vld [vmem:[%s1704 + $0x1b8] sm:$0xff]
    %v1761 = vld [vmem:[%s1704 + $0x1c0] sm:$0xff]
    %v1762 = vld [vmem:[%s1704 + $0x1c8] sm:$0xff]
    %v1763 = vld [vmem:[%s1704 + $0x1d0] sm:$0xff]
    %v1764 = vld [vmem:[%s1704 + $0x1d8] sm:$0xff]
    %v1765 = vld [vmem:[%s1704 + $0x1e0] sm:$0xff]
    %v1766 = vld [vmem:[%s1704 + $0x1e8] sm:$0xff]
    %v1767 = vld [vmem:[%s1704 + $0x1f0] sm:$0xff]
    %v1768 = vld [vmem:[%s1704 + $0x1f8] sm:$0xff]
    %s1769 = scalar_lea.vmem [#allocation10], 4
    %v1770 = vld [vmem:[%s1769] sm:$0xf]
    %v1771 = vld [vmem:[#allocation2] sm:$0xff]
    %v1772 = vld [vmem:[#allocation2 + $0x8] sm:$0xff]
    %v1773 = vld [vmem:[#allocation2 + $0x10] sm:$0xff]
    %v1774 = vld [vmem:[#allocation2 + $0x18] sm:$0xff]
    %v1775 = vld [vmem:[#allocation2 + $0x20] sm:$0xff]
    %v1776 = vld [vmem:[#allocation2 + $0x28] sm:$0xff]
    %v1777 = vld [vmem:[#allocation2 + $0x30] sm:$0xff]
    %v1778 = vld [vmem:[#allocation2 + $0x38] sm:$0xff]
    %v1780 = vperm.slane %v1770, 0
    %v1781 = vperm.slane %v1770, 1
    %v1782 = vperm.slane %v1770, 2
    %v1783 = vperm.slane %v1770, 3
    %1788 = vmatpush.msra.mxu0 %v1700
    %1789 = vmatpush.msra.mxu0 %v1696
    %1790 = vmatpush.msra.mxu0 %v1692
    %1791 = vmatpush.msra.mxu0 %v1688
    %1792 = vmatpush.msra.mxu0 %v1684
    %1793 = vmatpush.msra.mxu0 %v1680
    %1794 = vmatpush.msra.mxu0 %v1676
    %1795 = vmatpush.msra.mxu0 %v1672
    %1796 = vmatpush.msra.mxu0 %v1668
    %1797 = vmatpush.msra.mxu0 %v1664
    %1798 = vmatpush.msra.mxu0 %v1660
    %1799 = vmatpush.msra.mxu0 %v1656
    %1800 = vmatpush.msra.mxu0 %v1652
    %1801 = vmatpush.msra.mxu0 %v1648
    %1802 = vmatpush.msra.mxu0 %v1644
    %1803 = vmatpush.msra.mxu0 %v1640
    %1804 = vmatmul.f32.gmra.mxu0 %v1771
    %v1805 = vpop.f32.mrf.mxu0
    %v1806 = vadd.f32 %v1780, %v1805
    %1807 = vmatmul.f32.gmra.mxu0 %v1772
    %v1808 = vpop.f32.mrf.mxu0
    %v1809 = vadd.f32 %v1780, %v1808
    %1810 = vmatmul.f32.gmra.mxu0 %v1773
    %v1811 = vpop.f32.mrf.mxu0
    %v1812 = vadd.f32 %v1780, %v1811
    %1813 = vmatmul.f32.gmra.mxu0 %v1774
    %v1814 = vpop.f32.mrf.mxu0
    %v1815 = vadd.f32 %v1780, %v1814
    %1816 = vmatmul.f32.gmra.mxu0 %v1775
    %v1817 = vpop.f32.mrf.mxu0
    %v1818 = vadd.f32 %v1780, %v1817
    %1819 = vmatmul.f32.gmra.mxu0 %v1776
    %v1820 = vpop.f32.mrf.mxu0
    %v1821 = vadd.f32 %v1780, %v1820
    %1822 = vmatmul.f32.gmra.mxu0 %v1777
    %v1823 = vpop.f32.mrf.mxu0
    %v1824 = vadd.f32 %v1780, %v1823
    %1825 = vmatmul.f32.gmra.mxu0 %v1778
    %v1826 = vpop.f32.mrf.mxu0
    %v1827 = vadd.f32 %v1780, %v1826
    %1828 = vdwg.mxu0
    %1829 = vmatpush.msra.mxu0 %v1701
    %1830 = vmatpush.msra.mxu0 %v1697
    %1831 = vmatpush.msra.mxu0 %v1693
    %1832 = vmatpush.msra.mxu0 %v1689
    %1833 = vmatpush.msra.mxu0 %v1685
    %1834 = vmatpush.msra.mxu0 %v1681
    %1835 = vmatpush.msra.mxu0 %v1677
    %1836 = vmatpush.msra.mxu0 %v1673
    %1837 = vmatpush.msra.mxu0 %v1669
    %1838 = vmatpush.msra.mxu0 %v1665
    %1839 = vmatpush.msra.mxu0 %v1661
    %1840 = vmatpush.msra.mxu0 %v1657
    %1841 = vmatpush.msra.mxu0 %v1653
    %1842 = vmatpush.msra.mxu0 %v1649
    %1843 = vmatpush.msra.mxu0 %v1645
    %1844 = vmatpush.msra.mxu0 %v1641
    %1845 = vmatmul.f32.gmra.mxu0 %v1771
    %v1846 = vpop.f32.mrf.mxu0
    %v1847 = vadd.f32 %v1781, %v1846
    %1848 = vmatmul.f32.gmra.mxu0 %v1772
    %v1849 = vpop.f32.mrf.mxu0
    %v1850 = vadd.f32 %v1781, %v1849
    %1851 = vmatmul.f32.gmra.mxu0 %v1773
    %v1852 = vpop.f32.mrf.mxu0
    %v1853 = vadd.f32 %v1781, %v1852
    %1854 = vmatmul.f32.gmra.mxu0 %v1774
    %v1855 = vpop.f32.mrf.mxu0
    %v1856 = vadd.f32 %v1781, %v1855
    %1857 = vmatmul.f32.gmra.mxu0 %v1775
    %v1858 = vpop.f32.mrf.mxu0
    %v1859 = vadd.f32 %v1781, %v1858
    %1860 = vmatmul.f32.gmra.mxu0 %v1776
    %v1861 = vpop.f32.mrf.mxu0
    %v1862 = vadd.f32 %v1781, %v1861
    %1863 = vmatmul.f32.gmra.mxu0 %v1777
    %v1864 = vpop.f32.mrf.mxu0
    %v1865 = vadd.f32 %v1781, %v1864
    %1866 = vmatmul.f32.gmra.mxu0 %v1778
    %v1867 = vpop.f32.mrf.mxu0
    %v1868 = vadd.f32 %v1781, %v1867
    %1869 = vdwg.mxu0
    %1870 = vmatpush.msra.mxu0 %v1702
    %1871 = vmatpush.msra.mxu0 %v1698
    %1872 = vmatpush.msra.mxu0 %v1694
    %1873 = vmatpush.msra.mxu0 %v1690
    %1874 = vmatpush.msra.mxu0 %v1686
    %1875 = vmatpush.msra.mxu0 %v1682
    %1876 = vmatpush.msra.mxu0 %v1678
    %1877 = vmatpush.msra.mxu0 %v1674
    %1878 = vmatpush.msra.mxu0 %v1670
    %1879 = vmatpush.msra.mxu0 %v1666
    %1880 = vmatpush.msra.mxu0 %v1662
    %1881 = vmatpush.msra.mxu0 %v1658
    %1882 = vmatpush.msra.mxu0 %v1654
    %1883 = vmatpush.msra.mxu0 %v1650
    %1884 = vmatpush.msra.mxu0 %v1646
    %1885 = vmatpush.msra.mxu0 %v1642
    %1886 = vmatmul.f32.gmra.mxu0 %v1771
    %v1887 = vpop.f32.mrf.mxu0
    %v1888 = vadd.f32 %v1782, %v1887
    %1889 = vmatmul.f32.gmra.mxu0 %v1772
    %v1890 = vpop.f32.mrf.mxu0
    %v1891 = vadd.f32 %v1782, %v1890
    %1892 = vmatmul.f32.gmra.mxu0 %v1773
    %v1893 = vpop.f32.mrf.mxu0
    %v1894 = vadd.f32 %v1782, %v1893
    %1895 = vmatmul.f32.gmra.mxu0 %v1774
    %v1896 = vpop.f32.mrf.mxu0
    %v1897 = vadd.f32 %v1782, %v1896
    %1898 = vmatmul.f32.gmra.mxu0 %v1775
    %v1899 = vpop.f32.mrf.mxu0
    %v1900 = vadd.f32 %v1782, %v1899
    %1901 = vmatmul.f32.gmra.mxu0 %v1776
    %v1902 = vpop.f32.mrf.mxu0
    %v1903 = vadd.f32 %v1782, %v1902
    %1904 = vmatmul.f32.gmra.mxu0 %v1777
    %v1905 = vpop.f32.mrf.mxu0
    %v1906 = vadd.f32 %v1782, %v1905
    %1907 = vmatmul.f32.gmra.mxu0 %v1778
    %v1908 = vpop.f32.mrf.mxu0
    %v1909 = vadd.f32 %v1782, %v1908
    %1910 = vdwg.mxu0
    %1911 = vmatpush.msra.mxu0 %v1703
    %1912 = vmatpush.msra.mxu0 %v1699
    %1913 = vmatpush.msra.mxu0 %v1695
    %1914 = vmatpush.msra.mxu0 %v1691
    %1915 = vmatpush.msra.mxu0 %v1687
    %1916 = vmatpush.msra.mxu0 %v1683
    %1917 = vmatpush.msra.mxu0 %v1679
    %1918 = vmatpush.msra.mxu0 %v1675
    %1919 = vmatpush.msra.mxu0 %v1671
    %1920 = vmatpush.msra.mxu0 %v1667
    %1921 = vmatpush.msra.mxu0 %v1663
    %1922 = vmatpush.msra.mxu0 %v1659
    %1923 = vmatpush.msra.mxu0 %v1655
    %1924 = vmatpush.msra.mxu0 %v1651
    %1925 = vmatpush.msra.mxu0 %v1647
    %1926 = vmatpush.msra.mxu0 %v1643
    %1927 = vmatmul.f32.gmra.mxu0 %v1771
    %v1928 = vpop.f32.mrf.mxu0
    %v1929 = vadd.f32 %v1783, %v1928
    %1930 = vmatmul.f32.gmra.mxu0 %v1772
    %v1931 = vpop.f32.mrf.mxu0
    %v1932 = vadd.f32 %v1783, %v1931
    %1933 = vmatmul.f32.gmra.mxu0 %v1773
    %v1934 = vpop.f32.mrf.mxu0
    %v1935 = vadd.f32 %v1783, %v1934
    %1936 = vmatmul.f32.gmra.mxu0 %v1774
    %v1937 = vpop.f32.mrf.mxu0
    %v1938 = vadd.f32 %v1783, %v1937
    %1939 = vmatmul.f32.gmra.mxu0 %v1775
    %v1940 = vpop.f32.mrf.mxu0
    %v1941 = vadd.f32 %v1783, %v1940
    %1942 = vmatmul.f32.gmra.mxu0 %v1776
    %v1943 = vpop.f32.mrf.mxu0
    %v1944 = vadd.f32 %v1783, %v1943
    %1945 = vmatmul.f32.gmra.mxu0 %v1777
    %v1946 = vpop.f32.mrf.mxu0
    %v1947 = vadd.f32 %v1783, %v1946
    %1948 = vmatmul.f32.gmra.mxu0 %v1778
    %v1949 = vpop.f32.mrf.mxu0
    %v1950 = vadd.f32 %v1783, %v1949
    %1951 = vdwg.mxu0
    %1952 = vst [vmem:[#allocation3] sm:$0xff] %v1806
    %1953 = vst [vmem:[#allocation3 + $0x8] sm:$0xff] %v1847
    %1954 = vst [vmem:[#allocation3 + $0x10] sm:$0xff] %v1888
    %1955 = vst [vmem:[#allocation3 + $0x18] sm:$0xff] %v1929
    %1956 = vst [vmem:[#allocation3 + $0x20] sm:$0xff] %v1809
    %1957 = vst [vmem:[#allocation3 + $0x28] sm:$0xff] %v1850
    %1958 = vst [vmem:[#allocation3 + $0x30] sm:$0xff] %v1891
    %1959 = vst [vmem:[#allocation3 + $0x38] sm:$0xff] %v1932
    %1960 = vst [vmem:[#allocation3 + $0x40] sm:$0xff] %v1812
    %1961 = vst [vmem:[#allocation3 + $0x48] sm:$0xff] %v1853
    %1962 = vst [vmem:[#allocation3 + $0x50] sm:$0xff] %v1894
    %1963 = vst [vmem:[#allocation3 + $0x58] sm:$0xff] %v1935
    %1964 = vst [vmem:[#allocation3 + $0x60] sm:$0xff] %v1815
    %1965 = vst [vmem:[#allocation3 + $0x68] sm:$0xff] %v1856
    %1966 = vst [vmem:[#allocation3 + $0x70] sm:$0xff] %v1897
    %1967 = vst [vmem:[#allocation3 + $0x78] sm:$0xff] %v1938
    %1968 = vst [vmem:[#allocation3 + $0x80] sm:$0xff] %v1818
    %1969 = vst [vmem:[#allocation3 + $0x88] sm:$0xff] %v1859
    %1970 = vst [vmem:[#allocation3 + $0x90] sm:$0xff] %v1900
    %1971 = vst [vmem:[#allocation3 + $0x98] sm:$0xff] %v1941
    %1972 = vst [vmem:[#allocation3 + $0xa0] sm:$0xff] %v1821
    %1973 = vst [vmem:[#allocation3 + $0xa8] sm:$0xff] %v1862
    %1974 = vst [vmem:[#allocation3 + $0xb0] sm:$0xff] %v1903
    %1975 = vst [vmem:[#allocation3 + $0xb8] sm:$0xff] %v1944
    %1976 = vst [vmem:[#allocation3 + $0xc0] sm:$0xff] %v1824
    %1977 = vst [vmem:[#allocation3 + $0xc8] sm:$0xff] %v1865
    %1978 = vst [vmem:[#allocation3 + $0xd0] sm:$0xff] %v1906
    %1979 = vst [vmem:[#allocation3 + $0xd8] sm:$0xff] %v1947
    %1980 = vst [vmem:[#allocation3 + $0xe0] sm:$0xff] %v1827
    %1981 = vst [vmem:[#allocation3 + $0xe8] sm:$0xff] %v1868
    %1982 = vst [vmem:[#allocation3 + $0xf0] sm:$0xff] %v1909
    %1983 = vst [vmem:[#allocation3 + $0xf8] sm:$0xff] %v1950
    %v1984 = vld [vmem:[#allocation3] sm:$0xff]
    %v1985 = vld [vmem:[#allocation3 + $0x8] sm:$0xff]
    %v1986 = vld [vmem:[#allocation3 + $0x10] sm:$0xff]
    %v1987 = vld [vmem:[#allocation3 + $0x18] sm:$0xff]
    %1988 = vmatpush.msra.mxu0 %v1765
    %1989 = vmatpush.msra.mxu0 %v1761
    %1990 = vmatpush.msra.mxu0 %v1757
    %1991 = vmatpush.msra.mxu0 %v1753
    %1992 = vmatpush.msra.mxu0 %v1749
    %1993 = vmatpush.msra.mxu0 %v1745
    %1994 = vmatpush.msra.mxu0 %v1741
    %1995 = vmatpush.msra.mxu0 %v1737
    %1996 = vmatpush.msra.mxu0 %v1733
    %1997 = vmatpush.msra.mxu0 %v1729
    %1998 = vmatpush.msra.mxu0 %v1725
    %1999 = vmatpush.msra.mxu0 %v1721
    %2000 = vmatpush.msra.mxu0 %v1717
    %2001 = vmatpush.msra.mxu0 %v1713
    %2002 = vmatpush.msra.mxu0 %v1709
    %2003 = vmatpush.msra.mxu0 %v1705
    %2004 = vmatmul.f32.gmra.mxu0 %v1637
    %v2005 = vpop.f32.mrf.mxu0
    %v2006 = vadd.f32 0.0, %v2005
    %2007 = vdwg.mxu0
    %2008 = vmatpush.msra.mxu0 %v1766
    %2009 = vmatpush.msra.mxu0 %v1762
    %2010 = vmatpush.msra.mxu0 %v1758
    %2011 = vmatpush.msra.mxu0 %v1754
    %2012 = vmatpush.msra.mxu0 %v1750
    %2013 = vmatpush.msra.mxu0 %v1746
    %2014 = vmatpush.msra.mxu0 %v1742
    %2015 = vmatpush.msra.mxu0 %v1738
    %2016 = vmatpush.msra.mxu0 %v1734
    %2017 = vmatpush.msra.mxu0 %v1730
    %2018 = vmatpush.msra.mxu0 %v1726
    %2019 = vmatpush.msra.mxu0 %v1722
    %2020 = vmatpush.msra.mxu0 %v1718
    %2021 = vmatpush.msra.mxu0 %v1714
    %2022 = vmatpush.msra.mxu0 %v1710
    %2023 = vmatpush.msra.mxu0 %v1706
    %2024 = vmatmul.f32.gmra.mxu0 %v1637
    %v2025 = vpop.f32.mrf.mxu0
    %v2026 = vadd.f32 0.0, %v2025
    %2027 = vdwg.mxu0
    %2028 = vmatpush.msra.mxu0 %v1767
    %2029 = vmatpush.msra.mxu0 %v1763
    %2030 = vmatpush.msra.mxu0 %v1759
    %2031 = vmatpush.msra.mxu0 %v1755
    %2032 = vmatpush.msra.mxu0 %v1751
    %2033 = vmatpush.msra.mxu0 %v1747
    %2034 = vmatpush.msra.mxu0 %v1743
    %2035 = vmatpush.msra.mxu0 %v1739
    %2036 = vmatpush.msra.mxu0 %v1735
    %2037 = vmatpush.msra.mxu0 %v1731
    %2038 = vmatpush.msra.mxu0 %v1727
    %2039 = vmatpush.msra.mxu0 %v1723
    %2040 = vmatpush.msra.mxu0 %v1719
    %2041 = vmatpush.msra.mxu0 %v1715
    %2042 = vmatpush.msra.mxu0 %v1711
    %2043 = vmatpush.msra.mxu0 %v1707
    %2044 = vmatmul.f32.gmra.mxu0 %v1637
    %v2045 = vpop.f32.mrf.mxu0
    %v2046 = vadd.f32 0.0, %v2045
    %2047 = vdwg.mxu0
    %2048 = vmatpush.msra.mxu0 %v1768
    %2049 = vmatpush.msra.mxu0 %v1764
    %2050 = vmatpush.msra.mxu0 %v1760
    %2051 = vmatpush.msra.mxu0 %v1756
    %2052 = vmatpush.msra.mxu0 %v1752
    %2053 = vmatpush.msra.mxu0 %v1748
    %2054 = vmatpush.msra.mxu0 %v1744
    %2055 = vmatpush.msra.mxu0 %v1740
    %2056 = vmatpush.msra.mxu0 %v1736
    %2057 = vmatpush.msra.mxu0 %v1732
    %2058 = vmatpush.msra.mxu0 %v1728
    %2059 = vmatpush.msra.mxu0 %v1724
    %2060 = vmatpush.msra.mxu0 %v1720
    %2061 = vmatpush.msra.mxu0 %v1716
    %2062 = vmatpush.msra.mxu0 %v1712
    %2063 = vmatpush.msra.mxu0 %v1708
    %2064 = vmatmul.f32.gmra.mxu0 %v1637
    %v2065 = vpop.f32.mrf.mxu0
    %v2066 = vadd.f32 0.0, %v2065
    %2067 = vdwg.mxu0
    %v2068 = vadd.f32 %v1984, %v2006
    %v2069 = vadd.f32 %v1985, %v2026
    %v2070 = vadd.f32 %v1986, %v2046
    %v2071 = vadd.f32 %v1987, %v2066
    %v2072 = vxor.u32 %v2068, 2147483648
    %v2073 = vmul.f32 %v2072, 1.442695
    %v2074 = vpow.pop %v2073
    %v2075 = vadd.f32 %v2074, 1.0
    %v2076 = vrcp.pop %v2075
    %v2077 = vmul.f32 %v2075, %v2076
    %v2078 = vsub.f32 1.0, %v2077
    %v2079 = vmul.f32 %v2076, %v2078
    %v2080 = vadd.f32 %v2076, %v2079
    %vm2081 = vweird.f32 %v2075
    %vm2082 = vweird.f32 %v2076
    %vm2083 = vmor %vm2081, %vm2082
    %v2084 = vsel %vm2083, %v2076, %v2080
    %v2085 = vand.u32 2147483647, %v2075
    %vm2086 = vcmp.eq.f32.partialorder %v2085, 8.507059e+37
    %v2087 = vand.u32 %v2075, 2147483648
    %v2088 = vor.u32 1.1754944e-38, %v2087
    %v2089 = vsel %vm2086, %v2088, %v2084
    %v2090 = vmul.f32 1.0, %v2089
    %v2091 = vxor.u32 %v2069, 2147483648
    %v2092 = vmul.f32 %v2091, 1.442695
    %v2093 = vpow.pop %v2092
    %v2094 = vadd.f32 %v2093, 1.0
    %v2095 = vrcp.pop %v2094
    %v2096 = vmul.f32 %v2094, %v2095
    %v2097 = vsub.f32 1.0, %v2096
    %v2098 = vmul.f32 %v2095, %v2097
    %v2099 = vadd.f32 %v2095, %v2098
    %vm2100 = vweird.f32 %v2094
    %vm2101 = vweird.f32 %v2095
    %vm2102 = vmor %vm2100, %vm2101
    %v2103 = vsel %vm2102, %v2095, %v2099
    %v2104 = vand.u32 2147483647, %v2094
    %vm2105 = vcmp.eq.f32.partialorder %v2104, 8.507059e+37
    %v2106 = vand.u32 %v2094, 2147483648
    %v2107 = vor.u32 1.1754944e-38, %v2106
    %v2108 = vsel %vm2105, %v2107, %v2103
    %v2109 = vmul.f32 1.0, %v2108
    %v2110 = vtanh.pop %v2070
    %v2111 = vxor.u32 %v2071, 2147483648
    %v2112 = vmul.f32 %v2111, 1.442695
    %v2113 = vpow.pop %v2112
    %v2114 = vadd.f32 %v2113, 1.0
    %v2115 = vrcp.pop %v2114
    %v2116 = vmul.f32 %v2114, %v2115
    %v2117 = vsub.f32 1.0, %v2116
    %v2118 = vmul.f32 %v2115, %v2117
    %v2119 = vadd.f32 %v2115, %v2118
    %vm2120 = vweird.f32 %v2114
    %vm2121 = vweird.f32 %v2115
    %vm2122 = vmor %vm2120, %vm2121
    %v2123 = vsel %vm2122, %v2115, %v2119
    %v2124 = vand.u32 2147483647, %v2114
    %vm2125 = vcmp.eq.f32.partialorder %v2124, 8.507059e+37
    %v2126 = vand.u32 %v2114, 2147483648
    %v2127 = vor.u32 1.1754944e-38, %v2126
    %v2128 = vsel %vm2125, %v2127, %v2123
    %v2129 = vmul.f32 1.0, %v2128
    %v2130 = vmul.f32 %v2109, %v1635
    %v2131 = vmul.f32 %v2090, %v2110
    %v2132 = vadd.f32 %v2130, %v2131
    %v2133 = vtanh.pop %v2132
    %v2134 = vmul.f32 %v2129, %v2133
    %v2135 = vld [vmem:[#allocation3 + $0x20] sm:$0xff]
    %v2136 = vld [vmem:[#allocation3 + $0x28] sm:$0xff]
    %v2137 = vld [vmem:[#allocation3 + $0x30] sm:$0xff]
    %v2138 = vld [vmem:[#allocation3 + $0x38] sm:$0xff]
    %2139 = vmatpush.msra.mxu0 %v1765
    %2140 = vmatpush.msra.mxu0 %v1761
    %2141 = vmatpush.msra.mxu0 %v1757
    %2142 = vmatpush.msra.mxu0 %v1753
    %2143 = vmatpush.msra.mxu0 %v1749
    %2144 = vmatpush.msra.mxu0 %v1745
    %2145 = vmatpush.msra.mxu0 %v1741
    %2146 = vmatpush.msra.mxu0 %v1737
    %2147 = vmatpush.msra.mxu0 %v1733
    %2148 = vmatpush.msra.mxu0 %v1729
    %2149 = vmatpush.msra.mxu0 %v1725
    %2150 = vmatpush.msra.mxu0 %v1721
    %2151 = vmatpush.msra.mxu0 %v1717
    %2152 = vmatpush.msra.mxu0 %v1713
    %2153 = vmatpush.msra.mxu0 %v1709
    %2154 = vmatpush.msra.mxu0 %v1705
    %2155 = vmatmul.f32.gmra.mxu0 %v2134
    %v2156 = vpop.f32.mrf.mxu0
    %v2157 = vadd.f32 0.0, %v2156
    %2158 = vdwg.mxu0
    %2159 = vmatpush.msra.mxu0 %v1766
    %2160 = vmatpush.msra.mxu0 %v1762
    %2161 = vmatpush.msra.mxu0 %v1758
    %2162 = vmatpush.msra.mxu0 %v1754
    %2163 = vmatpush.msra.mxu0 %v1750
    %2164 = vmatpush.msra.mxu0 %v1746
    %2165 = vmatpush.msra.mxu0 %v1742
    %2166 = vmatpush.msra.mxu0 %v1738
    %2167 = vmatpush.msra.mxu0 %v1734
    %2168 = vmatpush.msra.mxu0 %v1730
    %2169 = vmatpush.msra.mxu0 %v1726
    %2170 = vmatpush.msra.mxu0 %v1722
    %2171 = vmatpush.msra.mxu0 %v1718
    %2172 = vmatpush.msra.mxu0 %v1714
    %2173 = vmatpush.msra.mxu0 %v1710
    %2174 = vmatpush.msra.mxu0 %v1706
    %2175 = vmatmul.f32.gmra.mxu0 %v2134
    %v2176 = vpop.f32.mrf.mxu0
    %v2177 = vadd.f32 0.0, %v2176
    %2178 = vdwg.mxu0
    %2179 = vmatpush.msra.mxu0 %v1767
    %2180 = vmatpush.msra.mxu0 %v1763
    %2181 = vmatpush.msra.mxu0 %v1759
    %2182 = vmatpush.msra.mxu0 %v1755
    %2183 = vmatpush.msra.mxu0 %v1751
    %2184 = vmatpush.msra.mxu0 %v1747
    %2185 = vmatpush.msra.mxu0 %v1743
    %2186 = vmatpush.msra.mxu0 %v1739
    %2187 = vmatpush.msra.mxu0 %v1735
    %2188 = vmatpush.msra.mxu0 %v1731
    %2189 = vmatpush.msra.mxu0 %v1727
    %2190 = vmatpush.msra.mxu0 %v1723
    %2191 = vmatpush.msra.mxu0 %v1719
    %2192 = vmatpush.msra.mxu0 %v1715
    %2193 = vmatpush.msra.mxu0 %v1711
    %2194 = vmatpush.msra.mxu0 %v1707
    %2195 = vmatmul.f32.gmra.mxu0 %v2134
    %v2196 = vpop.f32.mrf.mxu0
    %v2197 = vadd.f32 0.0, %v2196
    %2198 = vdwg.mxu0
    %2199 = vmatpush.msra.mxu0 %v1768
    %2200 = vmatpush.msra.mxu0 %v1764
    %2201 = vmatpush.msra.mxu0 %v1760
    %2202 = vmatpush.msra.mxu0 %v1756
    %2203 = vmatpush.msra.mxu0 %v1752
    %2204 = vmatpush.msra.mxu0 %v1748
    %2205 = vmatpush.msra.mxu0 %v1744
    %2206 = vmatpush.msra.mxu0 %v1740
    %2207 = vmatpush.msra.mxu0 %v1736
    %2208 = vmatpush.msra.mxu0 %v1732
    %2209 = vmatpush.msra.mxu0 %v1728
    %2210 = vmatpush.msra.mxu0 %v1724
    %2211 = vmatpush.msra.mxu0 %v1720
    %2212 = vmatpush.msra.mxu0 %v1716
    %2213 = vmatpush.msra.mxu0 %v1712
    %2214 = vmatpush.msra.mxu0 %v1708
    %2215 = vmatmul.f32.gmra.mxu0 %v2134
    %v2216 = vpop.f32.mrf.mxu0
    %v2217 = vadd.f32 0.0, %v2216
    %2218 = vdwg.mxu0
    %v2219 = vadd.f32 %v2135, %v2157
    %v2220 = vadd.f32 %v2136, %v2177
    %v2221 = vadd.f32 %v2137, %v2197
    %v2222 = vadd.f32 %v2138, %v2217
    %v2223 = vxor.u32 %v2219, 2147483648
    %v2224 = vmul.f32 %v2223, 1.442695
    %v2225 = vpow.pop %v2224
    %v2226 = vadd.f32 %v2225, 1.0
    %v2227 = vrcp.pop %v2226
    %v2228 = vmul.f32 %v2226, %v2227
    %v2229 = vsub.f32 1.0, %v2228
    %v2230 = vmul.f32 %v2227, %v2229
    %v2231 = vadd.f32 %v2227, %v2230
    %vm2232 = vweird.f32 %v2226
    %vm2233 = vweird.f32 %v2227
    %vm2234 = vmor %vm2232, %vm2233
    %v2235 = vsel %vm2234, %v2227, %v2231
    %v2236 = vand.u32 2147483647, %v2226
    %vm2237 = vcmp.eq.f32.partialorder %v2236, 8.507059e+37
    %v2238 = vand.u32 %v2226, 2147483648
    %v2239 = vor.u32 1.1754944e-38, %v2238
    %v2240 = vsel %vm2237, %v2239, %v2235
    %v2241 = vmul.f32 1.0, %v2240
    %v2242 = vxor.u32 %v2220, 2147483648
    %v2243 = vmul.f32 %v2242, 1.442695
    %v2244 = vpow.pop %v2243
    %v2245 = vadd.f32 %v2244, 1.0
    %v2246 = vrcp.pop %v2245
    %v2247 = vmul.f32 %v2245, %v2246
    %v2248 = vsub.f32 1.0, %v2247
    %v2249 = vmul.f32 %v2246, %v2248
    %v2250 = vadd.f32 %v2246, %v2249
    %vm2251 = vweird.f32 %v2245
    %vm2252 = vweird.f32 %v2246
    %vm2253 = vmor %vm2251, %vm2252
    %v2254 = vsel %vm2253, %v2246, %v2250
    %v2255 = vand.u32 2147483647, %v2245
    %vm2256 = vcmp.eq.f32.partialorder %v2255, 8.507059e+37
    %v2257 = vand.u32 %v2245, 2147483648
    %v2258 = vor.u32 1.1754944e-38, %v2257
    %v2259 = vsel %vm2256, %v2258, %v2254
    %v2260 = vmul.f32 1.0, %v2259
    %v2261 = vtanh.pop %v2221
    %v2262 = vxor.u32 %v2222, 2147483648
    %v2263 = vmul.f32 %v2262, 1.442695
    %v2264 = vpow.pop %v2263
    %v2265 = vadd.f32 %v2264, 1.0
    %v2266 = vrcp.pop %v2265
    %v2267 = vmul.f32 %v2265, %v2266
    %v2268 = vsub.f32 1.0, %v2267
    %v2269 = vmul.f32 %v2266, %v2268
    %v2270 = vadd.f32 %v2266, %v2269
    %vm2271 = vweird.f32 %v2265
    %vm2272 = vweird.f32 %v2266
    %vm2273 = vmor %vm2271, %vm2272
    %v2274 = vsel %vm2273, %v2266, %v2270
    %v2275 = vand.u32 2147483647, %v2265
    %vm2276 = vcmp.eq.f32.partialorder %v2275, 8.507059e+37
    %v2277 = vand.u32 %v2265, 2147483648
    %v2278 = vor.u32 1.1754944e-38, %v2277
    %v2279 = vsel %vm2276, %v2278, %v2274
    %v2280 = vmul.f32 1.0, %v2279
    %v2281 = vmul.f32 %v2260, %v2132
    %v2282 = vmul.f32 %v2241, %v2261
    %v2283 = vadd.f32 %v2281, %v2282
    %v2284 = vtanh.pop %v2283
    %v2285 = vmul.f32 %v2280, %v2284
    %v2286 = vld [vmem:[#allocation3 + $0x40] sm:$0xff]
    %v2287 = vld [vmem:[#allocation3 + $0x48] sm:$0xff]
    %v2288 = vld [vmem:[#allocation3 + $0x50] sm:$0xff]
    %v2289 = vld [vmem:[#allocation3 + $0x58] sm:$0xff]
    %2290 = vmatpush.msra.mxu0 %v1765
    %2291 = vmatpush.msra.mxu0 %v1761
    %2292 = vmatpush.msra.mxu0 %v1757
    %2293 = vmatpush.msra.mxu0 %v1753
    %2294 = vmatpush.msra.mxu0 %v1749
    %2295 = vmatpush.msra.mxu0 %v1745
    %2296 = vmatpush.msra.mxu0 %v1741
    %2297 = vmatpush.msra.mxu0 %v1737
    %2298 = vmatpush.msra.mxu0 %v1733
    %2299 = vmatpush.msra.mxu0 %v1729
    %2300 = vmatpush.msra.mxu0 %v1725
    %2301 = vmatpush.msra.mxu0 %v1721
    %2302 = vmatpush.msra.mxu0 %v1717
    %2303 = vmatpush.msra.mxu0 %v1713
    %2304 = vmatpush.msra.mxu0 %v1709
    %2305 = vmatpush.msra.mxu0 %v1705
    %2306 = vmatmul.f32.gmra.mxu0 %v2285
    %v2307 = vpop.f32.mrf.mxu0
    %v2308 = vadd.f32 0.0, %v2307
    %2309 = vdwg.mxu0
    %2310 = vmatpush.msra.mxu0 %v1766
    %2311 = vmatpush.msra.mxu0 %v1762
    %2312 = vmatpush.msra.mxu0 %v1758
    %2313 = vmatpush.msra.mxu0 %v1754
    %2314 = vmatpush.msra.mxu0 %v1750
    %2315 = vmatpush.msra.mxu0 %v1746
    %2316 = vmatpush.msra.mxu0 %v1742
    %2317 = vmatpush.msra.mxu0 %v1738
    %2318 = vmatpush.msra.mxu0 %v1734
    %2319 = vmatpush.msra.mxu0 %v1730
    %2320 = vmatpush.msra.mxu0 %v1726
    %2321 = vmatpush.msra.mxu0 %v1722
    %2322 = vmatpush.msra.mxu0 %v1718
    %2323 = vmatpush.msra.mxu0 %v1714
    %2324 = vmatpush.msra.mxu0 %v1710
    %2325 = vmatpush.msra.mxu0 %v1706
    %2326 = vmatmul.f32.gmra.mxu0 %v2285
    %v2327 = vpop.f32.mrf.mxu0
    %v2328 = vadd.f32 0.0, %v2327
    %2329 = vdwg.mxu0
    %2330 = vmatpush.msra.mxu0 %v1767
    %2331 = vmatpush.msra.mxu0 %v1763
    %2332 = vmatpush.msra.mxu0 %v1759
    %2333 = vmatpush.msra.mxu0 %v1755
    %2334 = vmatpush.msra.mxu0 %v1751
    %2335 = vmatpush.msra.mxu0 %v1747
    %2336 = vmatpush.msra.mxu0 %v1743
    %2337 = vmatpush.msra.mxu0 %v1739
    %2338 = vmatpush.msra.mxu0 %v1735
    %2339 = vmatpush.msra.mxu0 %v1731
    %2340 = vmatpush.msra.mxu0 %v1727
    %2341 = vmatpush.msra.mxu0 %v1723
    %2342 = vmatpush.msra.mxu0 %v1719
    %2343 = vmatpush.msra.mxu0 %v1715
    %2344 = vmatpush.msra.mxu0 %v1711
    %2345 = vmatpush.msra.mxu0 %v1707
    %2346 = vmatmul.f32.gmra.mxu0 %v2285
    %v2347 = vpop.f32.mrf.mxu0
    %v2348 = vadd.f32 0.0, %v2347
    %2349 = vdwg.mxu0
    %2350 = vmatpush.msra.mxu0 %v1768
    %2351 = vmatpush.msra.mxu0 %v1764
    %2352 = vmatpush.msra.mxu0 %v1760
    %2353 = vmatpush.msra.mxu0 %v1756
    %2354 = vmatpush.msra.mxu0 %v1752
    %2355 = vmatpush.msra.mxu0 %v1748
    %2356 = vmatpush.msra.mxu0 %v1744
    %2357 = vmatpush.msra.mxu0 %v1740
    %2358 = vmatpush.msra.mxu0 %v1736
    %2359 = vmatpush.msra.mxu0 %v1732
    %2360 = vmatpush.msra.mxu0 %v1728
    %2361 = vmatpush.msra.mxu0 %v1724
    %2362 = vmatpush.msra.mxu0 %v1720
    %2363 = vmatpush.msra.mxu0 %v1716
    %2364 = vmatpush.msra.mxu0 %v1712
    %2365 = vmatpush.msra.mxu0 %v1708
    %2366 = vmatmul.f32.gmra.mxu0 %v2285
    %v2367 = vpop.f32.mrf.mxu0
    %v2368 = vadd.f32 0.0, %v2367
    %2369 = vdwg.mxu0
    %v2370 = vadd.f32 %v2286, %v2308
    %v2371 = vadd.f32 %v2287, %v2328
    %v2372 = vadd.f32 %v2288, %v2348
    %v2373 = vadd.f32 %v2289, %v2368
    %v2374 = vxor.u32 %v2370, 2147483648
    %v2375 = vmul.f32 %v2374, 1.442695
    %v2376 = vpow.pop %v2375
    %v2377 = vadd.f32 %v2376, 1.0
    %v2378 = vrcp.pop %v2377
    %v2379 = vmul.f32 %v2377, %v2378
    %v2380 = vsub.f32 1.0, %v2379
    %v2381 = vmul.f32 %v2378, %v2380
    %v2382 = vadd.f32 %v2378, %v2381
    %vm2383 = vweird.f32 %v2377
    %vm2384 = vweird.f32 %v2378
    %vm2385 = vmor %vm2383, %vm2384
    %v2386 = vsel %vm2385, %v2378, %v2382
    %v2387 = vand.u32 2147483647, %v2377
    %vm2388 = vcmp.eq.f32.partialorder %v2387, 8.507059e+37
    %v2389 = vand.u32 %v2377, 2147483648
    %v2390 = vor.u32 1.1754944e-38, %v2389
    %v2391 = vsel %vm2388, %v2390, %v2386
    %v2392 = vmul.f32 1.0, %v2391
    %v2393 = vxor.u32 %v2371, 2147483648
    %v2394 = vmul.f32 %v2393, 1.442695
    %v2395 = vpow.pop %v2394
    %v2396 = vadd.f32 %v2395, 1.0
    %v2397 = vrcp.pop %v2396
    %v2398 = vmul.f32 %v2396, %v2397
    %v2399 = vsub.f32 1.0, %v2398
    %v2400 = vmul.f32 %v2397, %v2399
    %v2401 = vadd.f32 %v2397, %v2400
    %vm2402 = vweird.f32 %v2396
    %vm2403 = vweird.f32 %v2397
    %vm2404 = vmor %vm2402, %vm2403
    %v2405 = vsel %vm2404, %v2397, %v2401
    %v2406 = vand.u32 2147483647, %v2396
    %vm2407 = vcmp.eq.f32.partialorder %v2406, 8.507059e+37
    %v2408 = vand.u32 %v2396, 2147483648
    %v2409 = vor.u32 1.1754944e-38, %v2408
    %v2410 = vsel %vm2407, %v2409, %v2405
    %v2411 = vmul.f32 1.0, %v2410
    %v2412 = vtanh.pop %v2372
    %v2413 = vxor.u32 %v2373, 2147483648
    %v2414 = vmul.f32 %v2413, 1.442695
    %v2415 = vpow.pop %v2414
    %v2416 = vadd.f32 %v2415, 1.0
    %v2417 = vrcp.pop %v2416
    %v2418 = vmul.f32 %v2416, %v2417
    %v2419 = vsub.f32 1.0, %v2418
    %v2420 = vmul.f32 %v2417, %v2419
    %v2421 = vadd.f32 %v2417, %v2420
    %vm2422 = vweird.f32 %v2416
    %vm2423 = vweird.f32 %v2417
    %vm2424 = vmor %vm2422, %vm2423
    %v2425 = vsel %vm2424, %v2417, %v2421
    %v2426 = vand.u32 2147483647, %v2416
    %vm2427 = vcmp.eq.f32.partialorder %v2426, 8.507059e+37
    %v2428 = vand.u32 %v2416, 2147483648
    %v2429 = vor.u32 1.1754944e-38, %v2428
    %v2430 = vsel %vm2427, %v2429, %v2425
    %v2431 = vmul.f32 1.0, %v2430
    %v2432 = vmul.f32 %v2411, %v2283
    %v2433 = vmul.f32 %v2392, %v2412
    %v2434 = vadd.f32 %v2432, %v2433
    %v2435 = vtanh.pop %v2434
    %v2436 = vmul.f32 %v2431, %v2435
    %v2437 = vld [vmem:[#allocation3 + $0x60] sm:$0xff]
    %v2438 = vld [vmem:[#allocation3 + $0x68] sm:$0xff]
    %v2439 = vld [vmem:[#allocation3 + $0x70] sm:$0xff]
    %v2440 = vld [vmem:[#allocation3 + $0x78] sm:$0xff]
    %2441 = vmatpush.msra.mxu0 %v1765
    %2442 = vmatpush.msra.mxu0 %v1761
    %2443 = vmatpush.msra.mxu0 %v1757
    %2444 = vmatpush.msra.mxu0 %v1753
    %2445 = vmatpush.msra.mxu0 %v1749
    %2446 = vmatpush.msra.mxu0 %v1745
    %2447 = vmatpush.msra.mxu0 %v1741
    %2448 = vmatpush.msra.mxu0 %v1737
    %2449 = vmatpush.msra.mxu0 %v1733
    %2450 = vmatpush.msra.mxu0 %v1729
    %2451 = vmatpush.msra.mxu0 %v1725
    %2452 = vmatpush.msra.mxu0 %v1721
    %2453 = vmatpush.msra.mxu0 %v1717
    %2454 = vmatpush.msra.mxu0 %v1713
    %2455 = vmatpush.msra.mxu0 %v1709
    %2456 = vmatpush.msra.mxu0 %v1705
    %2457 = vmatmul.f32.gmra.mxu0 %v2436
    %v2458 = vpop.f32.mrf.mxu0
    %v2459 = vadd.f32 0.0, %v2458
    %2460 = vdwg.mxu0
    %2461 = vmatpush.msra.mxu0 %v1766
    %2462 = vmatpush.msra.mxu0 %v1762
    %2463 = vmatpush.msra.mxu0 %v1758
    %2464 = vmatpush.msra.mxu0 %v1754
    %2465 = vmatpush.msra.mxu0 %v1750
    %2466 = vmatpush.msra.mxu0 %v1746
    %2467 = vmatpush.msra.mxu0 %v1742
    %2468 = vmatpush.msra.mxu0 %v1738
    %2469 = vmatpush.msra.mxu0 %v1734
    %2470 = vmatpush.msra.mxu0 %v1730
    %2471 = vmatpush.msra.mxu0 %v1726
    %2472 = vmatpush.msra.mxu0 %v1722
    %2473 = vmatpush.msra.mxu0 %v1718
    %2474 = vmatpush.msra.mxu0 %v1714
    %2475 = vmatpush.msra.mxu0 %v1710
    %2476 = vmatpush.msra.mxu0 %v1706
    %2477 = vmatmul.f32.gmra.mxu0 %v2436
    %v2478 = vpop.f32.mrf.mxu0
    %v2479 = vadd.f32 0.0, %v2478
    %2480 = vdwg.mxu0
    %2481 = vmatpush.msra.mxu0 %v1767
    %2482 = vmatpush.msra.mxu0 %v1763
    %2483 = vmatpush.msra.mxu0 %v1759
    %2484 = vmatpush.msra.mxu0 %v1755
    %2485 = vmatpush.msra.mxu0 %v1751
    %2486 = vmatpush.msra.mxu0 %v1747
    %2487 = vmatpush.msra.mxu0 %v1743
    %2488 = vmatpush.msra.mxu0 %v1739
    %2489 = vmatpush.msra.mxu0 %v1735
    %2490 = vmatpush.msra.mxu0 %v1731
    %2491 = vmatpush.msra.mxu0 %v1727
    %2492 = vmatpush.msra.mxu0 %v1723
    %2493 = vmatpush.msra.mxu0 %v1719
    %2494 = vmatpush.msra.mxu0 %v1715
    %2495 = vmatpush.msra.mxu0 %v1711
    %2496 = vmatpush.msra.mxu0 %v1707
    %2497 = vmatmul.f32.gmra.mxu0 %v2436
    %v2498 = vpop.f32.mrf.mxu0
    %v2499 = vadd.f32 0.0, %v2498
    %2500 = vdwg.mxu0
    %2501 = vmatpush.msra.mxu0 %v1768
    %2502 = vmatpush.msra.mxu0 %v1764
    %2503 = vmatpush.msra.mxu0 %v1760
    %2504 = vmatpush.msra.mxu0 %v1756
    %2505 = vmatpush.msra.mxu0 %v1752
    %2506 = vmatpush.msra.mxu0 %v1748
    %2507 = vmatpush.msra.mxu0 %v1744
    %2508 = vmatpush.msra.mxu0 %v1740
    %2509 = vmatpush.msra.mxu0 %v1736
    %2510 = vmatpush.msra.mxu0 %v1732
    %2511 = vmatpush.msra.mxu0 %v1728
    %2512 = vmatpush.msra.mxu0 %v1724
    %2513 = vmatpush.msra.mxu0 %v1720
    %2514 = vmatpush.msra.mxu0 %v1716
    %2515 = vmatpush.msra.mxu0 %v1712
    %2516 = vmatpush.msra.mxu0 %v1708
    %2517 = vmatmul.f32.gmra.mxu0 %v2436
    %v2518 = vpop.f32.mrf.mxu0
    %v2519 = vadd.f32 0.0, %v2518
    %2520 = vdwg.mxu0
    %v2521 = vadd.f32 %v2437, %v2459
    %v2522 = vadd.f32 %v2438, %v2479
    %v2523 = vadd.f32 %v2439, %v2499
    %v2524 = vadd.f32 %v2440, %v2519
    %v2525 = vxor.u32 %v2521, 2147483648
    %v2526 = vmul.f32 %v2525, 1.442695
    %v2527 = vpow.pop %v2526
    %v2528 = vadd.f32 %v2527, 1.0
    %v2529 = vrcp.pop %v2528
    %v2530 = vmul.f32 %v2528, %v2529
    %v2531 = vsub.f32 1.0, %v2530
    %v2532 = vmul.f32 %v2529, %v2531
    %v2533 = vadd.f32 %v2529, %v2532
    %vm2534 = vweird.f32 %v2528
    %vm2535 = vweird.f32 %v2529
    %vm2536 = vmor %vm2534, %vm2535
    %v2537 = vsel %vm2536, %v2529, %v2533
    %v2538 = vand.u32 2147483647, %v2528
    %vm2539 = vcmp.eq.f32.partialorder %v2538, 8.507059e+37
    %v2540 = vand.u32 %v2528, 2147483648
    %v2541 = vor.u32 1.1754944e-38, %v2540
    %v2542 = vsel %vm2539, %v2541, %v2537
    %v2543 = vmul.f32 1.0, %v2542
    %v2544 = vxor.u32 %v2522, 2147483648
    %v2545 = vmul.f32 %v2544, 1.442695
    %v2546 = vpow.pop %v2545
    %v2547 = vadd.f32 %v2546, 1.0
    %v2548 = vrcp.pop %v2547
    %v2549 = vmul.f32 %v2547, %v2548
    %v2550 = vsub.f32 1.0, %v2549
    %v2551 = vmul.f32 %v2548, %v2550
    %v2552 = vadd.f32 %v2548, %v2551
    %vm2553 = vweird.f32 %v2547
    %vm2554 = vweird.f32 %v2548
    %vm2555 = vmor %vm2553, %vm2554
    %v2556 = vsel %vm2555, %v2548, %v2552
    %v2557 = vand.u32 2147483647, %v2547
    %vm2558 = vcmp.eq.f32.partialorder %v2557, 8.507059e+37
    %v2559 = vand.u32 %v2547, 2147483648
    %v2560 = vor.u32 1.1754944e-38, %v2559
    %v2561 = vsel %vm2558, %v2560, %v2556
    %v2562 = vmul.f32 1.0, %v2561
    %v2563 = vtanh.pop %v2523
    %v2564 = vxor.u32 %v2524, 2147483648
    %v2565 = vmul.f32 %v2564, 1.442695
    %v2566 = vpow.pop %v2565
    %v2567 = vadd.f32 %v2566, 1.0
    %v2568 = vrcp.pop %v2567
    %v2569 = vmul.f32 %v2567, %v2568
    %v2570 = vsub.f32 1.0, %v2569
    %v2571 = vmul.f32 %v2568, %v2570
    %v2572 = vadd.f32 %v2568, %v2571
    %vm2573 = vweird.f32 %v2567
    %vm2574 = vweird.f32 %v2568
    %vm2575 = vmor %vm2573, %vm2574
    %v2576 = vsel %vm2575, %v2568, %v2572
    %v2577 = vand.u32 2147483647, %v2567
    %vm2578 = vcmp.eq.f32.partialorder %v2577, 8.507059e+37
    %v2579 = vand.u32 %v2567, 2147483648
    %v2580 = vor.u32 1.1754944e-38, %v2579
    %v2581 = vsel %vm2578, %v2580, %v2576
    %v2582 = vmul.f32 1.0, %v2581
    %v2583 = vmul.f32 %v2562, %v2434
    %v2584 = vmul.f32 %v2543, %v2563
    %v2585 = vadd.f32 %v2583, %v2584
    %v2586 = vtanh.pop %v2585
    %v2587 = vmul.f32 %v2582, %v2586
    %v2588 = vld [vmem:[#allocation3 + $0x80] sm:$0xff]
    %v2589 = vld [vmem:[#allocation3 + $0x88] sm:$0xff]
    %v2590 = vld [vmem:[#allocation3 + $0x90] sm:$0xff]
    %v2591 = vld [vmem:[#allocation3 + $0x98] sm:$0xff]
    %2592 = vmatpush.msra.mxu0 %v1765
    %2593 = vmatpush.msra.mxu0 %v1761
    %2594 = vmatpush.msra.mxu0 %v1757
    %2595 = vmatpush.msra.mxu0 %v1753
    %2596 = vmatpush.msra.mxu0 %v1749
    %2597 = vmatpush.msra.mxu0 %v1745
    %2598 = vmatpush.msra.mxu0 %v1741
    %2599 = vmatpush.msra.mxu0 %v1737
    %2600 = vmatpush.msra.mxu0 %v1733
    %2601 = vmatpush.msra.mxu0 %v1729
    %2602 = vmatpush.msra.mxu0 %v1725
    %2603 = vmatpush.msra.mxu0 %v1721
    %2604 = vmatpush.msra.mxu0 %v1717
    %2605 = vmatpush.msra.mxu0 %v1713
    %2606 = vmatpush.msra.mxu0 %v1709
    %2607 = vmatpush.msra.mxu0 %v1705
    %2608 = vmatmul.f32.gmra.mxu0 %v2587
    %v2609 = vpop.f32.mrf.mxu0
    %v2610 = vadd.f32 0.0, %v2609
    %2611 = vdwg.mxu0
    %2612 = vmatpush.msra.mxu0 %v1766
    %2613 = vmatpush.msra.mxu0 %v1762
    %2614 = vmatpush.msra.mxu0 %v1758
    %2615 = vmatpush.msra.mxu0 %v1754
    %2616 = vmatpush.msra.mxu0 %v1750
    %2617 = vmatpush.msra.mxu0 %v1746
    %2618 = vmatpush.msra.mxu0 %v1742
    %2619 = vmatpush.msra.mxu0 %v1738
    %2620 = vmatpush.msra.mxu0 %v1734
    %2621 = vmatpush.msra.mxu0 %v1730
    %2622 = vmatpush.msra.mxu0 %v1726
    %2623 = vmatpush.msra.mxu0 %v1722
    %2624 = vmatpush.msra.mxu0 %v1718
    %2625 = vmatpush.msra.mxu0 %v1714
    %2626 = vmatpush.msra.mxu0 %v1710
    %2627 = vmatpush.msra.mxu0 %v1706
    %2628 = vmatmul.f32.gmra.mxu0 %v2587
    %v2629 = vpop.f32.mrf.mxu0
    %v2630 = vadd.f32 0.0, %v2629
    %2631 = vdwg.mxu0
    %2632 = vmatpush.msra.mxu0 %v1767
    %2633 = vmatpush.msra.mxu0 %v1763
    %2634 = vmatpush.msra.mxu0 %v1759
    %2635 = vmatpush.msra.mxu0 %v1755
    %2636 = vmatpush.msra.mxu0 %v1751
    %2637 = vmatpush.msra.mxu0 %v1747
    %2638 = vmatpush.msra.mxu0 %v1743
    %2639 = vmatpush.msra.mxu0 %v1739
    %2640 = vmatpush.msra.mxu0 %v1735
    %2641 = vmatpush.msra.mxu0 %v1731
    %2642 = vmatpush.msra.mxu0 %v1727
    %2643 = vmatpush.msra.mxu0 %v1723
    %2644 = vmatpush.msra.mxu0 %v1719
    %2645 = vmatpush.msra.mxu0 %v1715
    %2646 = vmatpush.msra.mxu0 %v1711
    %2647 = vmatpush.msra.mxu0 %v1707
    %2648 = vmatmul.f32.gmra.mxu0 %v2587
    %v2649 = vpop.f32.mrf.mxu0
    %v2650 = vadd.f32 0.0, %v2649
    %2651 = vdwg.mxu0
    %2652 = vmatpush.msra.mxu0 %v1768
    %2653 = vmatpush.msra.mxu0 %v1764
    %2654 = vmatpush.msra.mxu0 %v1760
    %2655 = vmatpush.msra.mxu0 %v1756
    %2656 = vmatpush.msra.mxu0 %v1752
    %2657 = vmatpush.msra.mxu0 %v1748
    %2658 = vmatpush.msra.mxu0 %v1744
    %2659 = vmatpush.msra.mxu0 %v1740
    %2660 = vmatpush.msra.mxu0 %v1736
    %2661 = vmatpush.msra.mxu0 %v1732
    %2662 = vmatpush.msra.mxu0 %v1728
    %2663 = vmatpush.msra.mxu0 %v1724
    %2664 = vmatpush.msra.mxu0 %v1720
    %2665 = vmatpush.msra.mxu0 %v1716
    %2666 = vmatpush.msra.mxu0 %v1712
    %2667 = vmatpush.msra.mxu0 %v1708
    %2668 = vmatmul.f32.gmra.mxu0 %v2587
    %v2669 = vpop.f32.mrf.mxu0
    %v2670 = vadd.f32 0.0, %v2669
    %2671 = vdwg.mxu0
    %v2672 = vadd.f32 %v2588, %v2610
    %v2673 = vadd.f32 %v2589, %v2630
    %v2674 = vadd.f32 %v2590, %v2650
    %v2675 = vadd.f32 %v2591, %v2670
    %v2676 = vxor.u32 %v2672, 2147483648
    %v2677 = vmul.f32 %v2676, 1.442695
    %v2678 = vpow.pop %v2677
    %v2679 = vadd.f32 %v2678, 1.0
    %v2680 = vrcp.pop %v2679
    %v2681 = vmul.f32 %v2679, %v2680
    %v2682 = vsub.f32 1.0, %v2681
    %v2683 = vmul.f32 %v2680, %v2682
    %v2684 = vadd.f32 %v2680, %v2683
    %vm2685 = vweird.f32 %v2679
    %vm2686 = vweird.f32 %v2680
    %vm2687 = vmor %vm2685, %vm2686
    %v2688 = vsel %vm2687, %v2680, %v2684
    %v2689 = vand.u32 2147483647, %v2679
    %vm2690 = vcmp.eq.f32.partialorder %v2689, 8.507059e+37
    %v2691 = vand.u32 %v2679, 2147483648
    %v2692 = vor.u32 1.1754944e-38, %v2691
    %v2693 = vsel %vm2690, %v2692, %v2688
    %v2694 = vmul.f32 1.0, %v2693
    %v2695 = vxor.u32 %v2673, 2147483648
    %v2696 = vmul.f32 %v2695, 1.442695
    %v2697 = vpow.pop %v2696
    %v2698 = vadd.f32 %v2697, 1.0
    %v2699 = vrcp.pop %v2698
    %v2700 = vmul.f32 %v2698, %v2699
    %v2701 = vsub.f32 1.0, %v2700
    %v2702 = vmul.f32 %v2699, %v2701
    %v2703 = vadd.f32 %v2699, %v2702
    %vm2704 = vweird.f32 %v2698
    %vm2705 = vweird.f32 %v2699
    %vm2706 = vmor %vm2704, %vm2705
    %v2707 = vsel %vm2706, %v2699, %v2703
    %v2708 = vand.u32 2147483647, %v2698
    %vm2709 = vcmp.eq.f32.partialorder %v2708, 8.507059e+37
    %v2710 = vand.u32 %v2698, 2147483648
    %v2711 = vor.u32 1.1754944e-38, %v2710
    %v2712 = vsel %vm2709, %v2711, %v2707
    %v2713 = vmul.f32 1.0, %v2712
    %v2714 = vtanh.pop %v2674
    %v2715 = vxor.u32 %v2675, 2147483648
    %v2716 = vmul.f32 %v2715, 1.442695
    %v2717 = vpow.pop %v2716
    %v2718 = vadd.f32 %v2717, 1.0
    %v2719 = vrcp.pop %v2718
    %v2720 = vmul.f32 %v2718, %v2719
    %v2721 = vsub.f32 1.0, %v2720
    %v2722 = vmul.f32 %v2719, %v2721
    %v2723 = vadd.f32 %v2719, %v2722
    %vm2724 = vweird.f32 %v2718
    %vm2725 = vweird.f32 %v2719
    %vm2726 = vmor %vm2724, %vm2725
    %v2727 = vsel %vm2726, %v2719, %v2723
    %v2728 = vand.u32 2147483647, %v2718
    %vm2729 = vcmp.eq.f32.partialorder %v2728, 8.507059e+37
    %v2730 = vand.u32 %v2718, 2147483648
    %v2731 = vor.u32 1.1754944e-38, %v2730
    %v2732 = vsel %vm2729, %v2731, %v2727
    %v2733 = vmul.f32 1.0, %v2732
    %v2734 = vmul.f32 %v2713, %v2585
    %v2735 = vmul.f32 %v2694, %v2714
    %v2736 = vadd.f32 %v2734, %v2735
    %v2737 = vtanh.pop %v2736
    %v2738 = vmul.f32 %v2733, %v2737
    %v2739 = vld [vmem:[#allocation3 + $0xa0] sm:$0xff]
    %v2740 = vld [vmem:[#allocation3 + $0xa8] sm:$0xff]
    %v2741 = vld [vmem:[#allocation3 + $0xb0] sm:$0xff]
    %v2742 = vld [vmem:[#allocation3 + $0xb8] sm:$0xff]
    %2743 = vmatpush.msra.mxu0 %v1765
    %2744 = vmatpush.msra.mxu0 %v1761
    %2745 = vmatpush.msra.mxu0 %v1757
    %2746 = vmatpush.msra.mxu0 %v1753
    %2747 = vmatpush.msra.mxu0 %v1749
    %2748 = vmatpush.msra.mxu0 %v1745
    %2749 = vmatpush.msra.mxu0 %v1741
    %2750 = vmatpush.msra.mxu0 %v1737
    %2751 = vmatpush.msra.mxu0 %v1733
    %2752 = vmatpush.msra.mxu0 %v1729
    %2753 = vmatpush.msra.mxu0 %v1725
    %2754 = vmatpush.msra.mxu0 %v1721
    %2755 = vmatpush.msra.mxu0 %v1717
    %2756 = vmatpush.msra.mxu0 %v1713
    %2757 = vmatpush.msra.mxu0 %v1709
    %2758 = vmatpush.msra.mxu0 %v1705
    %2759 = vmatmul.f32.gmra.mxu0 %v2738
    %v2760 = vpop.f32.mrf.mxu0
    %v2761 = vadd.f32 0.0, %v2760
    %2762 = vdwg.mxu0
    %2763 = vmatpush.msra.mxu0 %v1766
    %2764 = vmatpush.msra.mxu0 %v1762
    %2765 = vmatpush.msra.mxu0 %v1758
    %2766 = vmatpush.msra.mxu0 %v1754
    %2767 = vmatpush.msra.mxu0 %v1750
    %2768 = vmatpush.msra.mxu0 %v1746
    %2769 = vmatpush.msra.mxu0 %v1742
    %2770 = vmatpush.msra.mxu0 %v1738
    %2771 = vmatpush.msra.mxu0 %v1734
    %2772 = vmatpush.msra.mxu0 %v1730
    %2773 = vmatpush.msra.mxu0 %v1726
    %2774 = vmatpush.msra.mxu0 %v1722
    %2775 = vmatpush.msra.mxu0 %v1718
    %2776 = vmatpush.msra.mxu0 %v1714
    %2777 = vmatpush.msra.mxu0 %v1710
    %2778 = vmatpush.msra.mxu0 %v1706
    %2779 = vmatmul.f32.gmra.mxu0 %v2738
    %v2780 = vpop.f32.mrf.mxu0
    %v2781 = vadd.f32 0.0, %v2780
    %2782 = vdwg.mxu0
    %2783 = vmatpush.msra.mxu0 %v1767
    %2784 = vmatpush.msra.mxu0 %v1763
    %2785 = vmatpush.msra.mxu0 %v1759
    %2786 = vmatpush.msra.mxu0 %v1755
    %2787 = vmatpush.msra.mxu0 %v1751
    %2788 = vmatpush.msra.mxu0 %v1747
    %2789 = vmatpush.msra.mxu0 %v1743
    %2790 = vmatpush.msra.mxu0 %v1739
    %2791 = vmatpush.msra.mxu0 %v1735
    %2792 = vmatpush.msra.mxu0 %v1731
    %2793 = vmatpush.msra.mxu0 %v1727
    %2794 = vmatpush.msra.mxu0 %v1723
    %2795 = vmatpush.msra.mxu0 %v1719
    %2796 = vmatpush.msra.mxu0 %v1715
    %2797 = vmatpush.msra.mxu0 %v1711
    %2798 = vmatpush.msra.mxu0 %v1707
    %2799 = vmatmul.f32.gmra.mxu0 %v2738
    %v2800 = vpop.f32.mrf.mxu0
    %v2801 = vadd.f32 0.0, %v2800
    %2802 = vdwg.mxu0
    %2803 = vmatpush.msra.mxu0 %v1768
    %2804 = vmatpush.msra.mxu0 %v1764
    %2805 = vmatpush.msra.mxu0 %v1760
    %2806 = vmatpush.msra.mxu0 %v1756
    %2807 = vmatpush.msra.mxu0 %v1752
    %2808 = vmatpush.msra.mxu0 %v1748
    %2809 = vmatpush.msra.mxu0 %v1744
    %2810 = vmatpush.msra.mxu0 %v1740
    %2811 = vmatpush.msra.mxu0 %v1736
    %2812 = vmatpush.msra.mxu0 %v1732
    %2813 = vmatpush.msra.mxu0 %v1728
    %2814 = vmatpush.msra.mxu0 %v1724
    %2815 = vmatpush.msra.mxu0 %v1720
    %2816 = vmatpush.msra.mxu0 %v1716
    %2817 = vmatpush.msra.mxu0 %v1712
    %2818 = vmatpush.msra.mxu0 %v1708
    %2819 = vmatmul.f32.gmra.mxu0 %v2738
    %v2820 = vpop.f32.mrf.mxu0
    %v2821 = vadd.f32 0.0, %v2820
    %2822 = vdwg.mxu0
    %v2823 = vadd.f32 %v2739, %v2761
    %v2824 = vadd.f32 %v2740, %v2781
    %v2825 = vadd.f32 %v2741, %v2801
    %v2826 = vadd.f32 %v2742, %v2821
    %v2827 = vxor.u32 %v2823, 2147483648
    %v2828 = vmul.f32 %v2827, 1.442695
    %v2829 = vpow.pop %v2828
    %v2830 = vadd.f32 %v2829, 1.0
    %v2831 = vrcp.pop %v2830
    %v2832 = vmul.f32 %v2830, %v2831
    %v2833 = vsub.f32 1.0, %v2832
    %v2834 = vmul.f32 %v2831, %v2833
    %v2835 = vadd.f32 %v2831, %v2834
    %vm2836 = vweird.f32 %v2830
    %vm2837 = vweird.f32 %v2831
    %vm2838 = vmor %vm2836, %vm2837
    %v2839 = vsel %vm2838, %v2831, %v2835
    %v2840 = vand.u32 2147483647, %v2830
    %vm2841 = vcmp.eq.f32.partialorder %v2840, 8.507059e+37
    %v2842 = vand.u32 %v2830, 2147483648
    %v2843 = vor.u32 1.1754944e-38, %v2842
    %v2844 = vsel %vm2841, %v2843, %v2839
    %v2845 = vmul.f32 1.0, %v2844
    %v2846 = vxor.u32 %v2824, 2147483648
    %v2847 = vmul.f32 %v2846, 1.442695
    %v2848 = vpow.pop %v2847
    %v2849 = vadd.f32 %v2848, 1.0
    %v2850 = vrcp.pop %v2849
    %v2851 = vmul.f32 %v2849, %v2850
    %v2852 = vsub.f32 1.0, %v2851
    %v2853 = vmul.f32 %v2850, %v2852
    %v2854 = vadd.f32 %v2850, %v2853
    %vm2855 = vweird.f32 %v2849
    %vm2856 = vweird.f32 %v2850
    %vm2857 = vmor %vm2855, %vm2856
    %v2858 = vsel %vm2857, %v2850, %v2854
    %v2859 = vand.u32 2147483647, %v2849
    %vm2860 = vcmp.eq.f32.partialorder %v2859, 8.507059e+37
    %v2861 = vand.u32 %v2849, 2147483648
    %v2862 = vor.u32 1.1754944e-38, %v2861
    %v2863 = vsel %vm2860, %v2862, %v2858
    %v2864 = vmul.f32 1.0, %v2863
    %v2865 = vtanh.pop %v2825
    %v2866 = vxor.u32 %v2826, 2147483648
    %v2867 = vmul.f32 %v2866, 1.442695
    %v2868 = vpow.pop %v2867
    %v2869 = vadd.f32 %v2868, 1.0
    %v2870 = vrcp.pop %v2869
    %v2871 = vmul.f32 %v2869, %v2870
    %v2872 = vsub.f32 1.0, %v2871
    %v2873 = vmul.f32 %v2870, %v2872
    %v2874 = vadd.f32 %v2870, %v2873
    %vm2875 = vweird.f32 %v2869
    %vm2876 = vweird.f32 %v2870
    %vm2877 = vmor %vm2875, %vm2876
    %v2878 = vsel %vm2877, %v2870, %v2874
    %v2879 = vand.u32 2147483647, %v2869
    %vm2880 = vcmp.eq.f32.partialorder %v2879, 8.507059e+37
    %v2881 = vand.u32 %v2869, 2147483648
    %v2882 = vor.u32 1.1754944e-38, %v2881
    %v2883 = vsel %vm2880, %v2882, %v2878
    %v2884 = vmul.f32 1.0, %v2883
    %v2885 = vmul.f32 %v2864, %v2736
    %v2886 = vmul.f32 %v2845, %v2865
    %v2887 = vadd.f32 %v2885, %v2886
    %v2888 = vtanh.pop %v2887
    %v2889 = vmul.f32 %v2884, %v2888
    %v2890 = vld [vmem:[#allocation3 + $0xc0] sm:$0xff]
    %v2891 = vld [vmem:[#allocation3 + $0xc8] sm:$0xff]
    %v2892 = vld [vmem:[#allocation3 + $0xd0] sm:$0xff]
    %v2893 = vld [vmem:[#allocation3 + $0xd8] sm:$0xff]
    %2894 = vmatpush.msra.mxu0 %v1765
    %2895 = vmatpush.msra.mxu0 %v1761
    %2896 = vmatpush.msra.mxu0 %v1757
    %2897 = vmatpush.msra.mxu0 %v1753
    %2898 = vmatpush.msra.mxu0 %v1749
    %2899 = vmatpush.msra.mxu0 %v1745
    %2900 = vmatpush.msra.mxu0 %v1741
    %2901 = vmatpush.msra.mxu0 %v1737
    %2902 = vmatpush.msra.mxu0 %v1733
    %2903 = vmatpush.msra.mxu0 %v1729
    %2904 = vmatpush.msra.mxu0 %v1725
    %2905 = vmatpush.msra.mxu0 %v1721
    %2906 = vmatpush.msra.mxu0 %v1717
    %2907 = vmatpush.msra.mxu0 %v1713
    %2908 = vmatpush.msra.mxu0 %v1709
    %2909 = vmatpush.msra.mxu0 %v1705
    %2910 = vmatmul.f32.gmra.mxu0 %v2889
    %v2911 = vpop.f32.mrf.mxu0
    %v2912 = vadd.f32 0.0, %v2911
    %2913 = vdwg.mxu0
    %2914 = vmatpush.msra.mxu0 %v1766
    %2915 = vmatpush.msra.mxu0 %v1762
    %2916 = vmatpush.msra.mxu0 %v1758
    %2917 = vmatpush.msra.mxu0 %v1754
    %2918 = vmatpush.msra.mxu0 %v1750
    %2919 = vmatpush.msra.mxu0 %v1746
    %2920 = vmatpush.msra.mxu0 %v1742
    %2921 = vmatpush.msra.mxu0 %v1738
    %2922 = vmatpush.msra.mxu0 %v1734
    %2923 = vmatpush.msra.mxu0 %v1730
    %2924 = vmatpush.msra.mxu0 %v1726
    %2925 = vmatpush.msra.mxu0 %v1722
    %2926 = vmatpush.msra.mxu0 %v1718
    %2927 = vmatpush.msra.mxu0 %v1714
    %2928 = vmatpush.msra.mxu0 %v1710
    %2929 = vmatpush.msra.mxu0 %v1706
    %2930 = vmatmul.f32.gmra.mxu0 %v2889
    %v2931 = vpop.f32.mrf.mxu0
    %v2932 = vadd.f32 0.0, %v2931
    %2933 = vdwg.mxu0
    %2934 = vmatpush.msra.mxu0 %v1767
    %2935 = vmatpush.msra.mxu0 %v1763
    %2936 = vmatpush.msra.mxu0 %v1759
    %2937 = vmatpush.msra.mxu0 %v1755
    %2938 = vmatpush.msra.mxu0 %v1751
    %2939 = vmatpush.msra.mxu0 %v1747
    %2940 = vmatpush.msra.mxu0 %v1743
    %2941 = vmatpush.msra.mxu0 %v1739
    %2942 = vmatpush.msra.mxu0 %v1735
    %2943 = vmatpush.msra.mxu0 %v1731
    %2944 = vmatpush.msra.mxu0 %v1727
    %2945 = vmatpush.msra.mxu0 %v1723
    %2946 = vmatpush.msra.mxu0 %v1719
    %2947 = vmatpush.msra.mxu0 %v1715
    %2948 = vmatpush.msra.mxu0 %v1711
    %2949 = vmatpush.msra.mxu0 %v1707
    %2950 = vmatmul.f32.gmra.mxu0 %v2889
    %v2951 = vpop.f32.mrf.mxu0
    %v2952 = vadd.f32 0.0, %v2951
    %2953 = vdwg.mxu0
    %2954 = vmatpush.msra.mxu0 %v1768
    %2955 = vmatpush.msra.mxu0 %v1764
    %2956 = vmatpush.msra.mxu0 %v1760
    %2957 = vmatpush.msra.mxu0 %v1756
    %2958 = vmatpush.msra.mxu0 %v1752
    %2959 = vmatpush.msra.mxu0 %v1748
    %2960 = vmatpush.msra.mxu0 %v1744
    %2961 = vmatpush.msra.mxu0 %v1740
    %2962 = vmatpush.msra.mxu0 %v1736
    %2963 = vmatpush.msra.mxu0 %v1732
    %2964 = vmatpush.msra.mxu0 %v1728
    %2965 = vmatpush.msra.mxu0 %v1724
    %2966 = vmatpush.msra.mxu0 %v1720
    %2967 = vmatpush.msra.mxu0 %v1716
    %2968 = vmatpush.msra.mxu0 %v1712
    %2969 = vmatpush.msra.mxu0 %v1708
    %2970 = vmatmul.f32.gmra.mxu0 %v2889
    %v2971 = vpop.f32.mrf.mxu0
    %v2972 = vadd.f32 0.0, %v2971
    %2973 = vdwg.mxu0
    %v2974 = vadd.f32 %v2890, %v2912
    %v2975 = vadd.f32 %v2891, %v2932
    %v2976 = vadd.f32 %v2892, %v2952
    %v2977 = vadd.f32 %v2893, %v2972
    %v2978 = vxor.u32 %v2974, 2147483648
    %v2979 = vmul.f32 %v2978, 1.442695
    %v2980 = vpow.pop %v2979
    %v2981 = vadd.f32 %v2980, 1.0
    %v2982 = vrcp.pop %v2981
    %v2983 = vmul.f32 %v2981, %v2982
    %v2984 = vsub.f32 1.0, %v2983
    %v2985 = vmul.f32 %v2982, %v2984
    %v2986 = vadd.f32 %v2982, %v2985
    %vm2987 = vweird.f32 %v2981
    %vm2988 = vweird.f32 %v2982
    %vm2989 = vmor %vm2987, %vm2988
    %v2990 = vsel %vm2989, %v2982, %v2986
    %v2991 = vand.u32 2147483647, %v2981
    %vm2992 = vcmp.eq.f32.partialorder %v2991, 8.507059e+37
    %v2993 = vand.u32 %v2981, 2147483648
    %v2994 = vor.u32 1.1754944e-38, %v2993
    %v2995 = vsel %vm2992, %v2994, %v2990
    %v2996 = vmul.f32 1.0, %v2995
    %v2997 = vxor.u32 %v2975, 2147483648
    %v2998 = vmul.f32 %v2997, 1.442695
    %v2999 = vpow.pop %v2998
    %v3000 = vadd.f32 %v2999, 1.0
    %v3001 = vrcp.pop %v3000
    %v3002 = vmul.f32 %v3000, %v3001
    %v3003 = vsub.f32 1.0, %v3002
    %v3004 = vmul.f32 %v3001, %v3003
    %v3005 = vadd.f32 %v3001, %v3004
    %vm3006 = vweird.f32 %v3000
    %vm3007 = vweird.f32 %v3001
    %vm3008 = vmor %vm3006, %vm3007
    %v3009 = vsel %vm3008, %v3001, %v3005
    %v3010 = vand.u32 2147483647, %v3000
    %vm3011 = vcmp.eq.f32.partialorder %v3010, 8.507059e+37
    %v3012 = vand.u32 %v3000, 2147483648
    %v3013 = vor.u32 1.1754944e-38, %v3012
    %v3014 = vsel %vm3011, %v3013, %v3009
    %v3015 = vmul.f32 1.0, %v3014
    %v3016 = vtanh.pop %v2976
    %v3017 = vxor.u32 %v2977, 2147483648
    %v3018 = vmul.f32 %v3017, 1.442695
    %v3019 = vpow.pop %v3018
    %v3020 = vadd.f32 %v3019, 1.0
    %v3021 = vrcp.pop %v3020
    %v3022 = vmul.f32 %v3020, %v3021
    %v3023 = vsub.f32 1.0, %v3022
    %v3024 = vmul.f32 %v3021, %v3023
    %v3025 = vadd.f32 %v3021, %v3024
    %vm3026 = vweird.f32 %v3020
    %vm3027 = vweird.f32 %v3021
    %vm3028 = vmor %vm3026, %vm3027
    %v3029 = vsel %vm3028, %v3021, %v3025
    %v3030 = vand.u32 2147483647, %v3020
    %vm3031 = vcmp.eq.f32.partialorder %v3030, 8.507059e+37
    %v3032 = vand.u32 %v3020, 2147483648
    %v3033 = vor.u32 1.1754944e-38, %v3032
    %v3034 = vsel %vm3031, %v3033, %v3029
    %v3035 = vmul.f32 1.0, %v3034
    %v3036 = vmul.f32 %v3015, %v2887
    %v3037 = vmul.f32 %v2996, %v3016
    %v3038 = vadd.f32 %v3036, %v3037
    %v3039 = vtanh.pop %v3038
    %v3040 = vmul.f32 %v3035, %v3039
    %v3041 = vld [vmem:[#allocation3 + $0xe0] sm:$0xff]
    %v3042 = vld [vmem:[#allocation3 + $0xe8] sm:$0xff]
    %v3043 = vld [vmem:[#allocation3 + $0xf0] sm:$0xff]
    %v3044 = vld [vmem:[#allocation3 + $0xf8] sm:$0xff]
    %3045 = vmatpush.msra.mxu0 %v1765
    %3046 = vmatpush.msra.mxu0 %v1761
    %3047 = vmatpush.msra.mxu0 %v1757
    %3048 = vmatpush.msra.mxu0 %v1753
    %3049 = vmatpush.msra.mxu0 %v1749
    %3050 = vmatpush.msra.mxu0 %v1745
    %3051 = vmatpush.msra.mxu0 %v1741
    %3052 = vmatpush.msra.mxu0 %v1737
    %3053 = vmatpush.msra.mxu0 %v1733
    %3054 = vmatpush.msra.mxu0 %v1729
    %3055 = vmatpush.msra.mxu0 %v1725
    %3056 = vmatpush.msra.mxu0 %v1721
    %3057 = vmatpush.msra.mxu0 %v1717
    %3058 = vmatpush.msra.mxu0 %v1713
    %3059 = vmatpush.msra.mxu0 %v1709
    %3060 = vmatpush.msra.mxu0 %v1705
    %3061 = vmatmul.f32.gmra.mxu0 %v3040
    %v3062 = vpop.f32.mrf.mxu0
    %v3063 = vadd.f32 0.0, %v3062
    %3064 = vdwg.mxu0
    %3065 = vmatpush.msra.mxu0 %v1766
    %3066 = vmatpush.msra.mxu0 %v1762
    %3067 = vmatpush.msra.mxu0 %v1758
    %3068 = vmatpush.msra.mxu0 %v1754
    %3069 = vmatpush.msra.mxu0 %v1750
    %3070 = vmatpush.msra.mxu0 %v1746
    %3071 = vmatpush.msra.mxu0 %v1742
    %3072 = vmatpush.msra.mxu0 %v1738
    %3073 = vmatpush.msra.mxu0 %v1734
    %3074 = vmatpush.msra.mxu0 %v1730
    %3075 = vmatpush.msra.mxu0 %v1726
    %3076 = vmatpush.msra.mxu0 %v1722
    %3077 = vmatpush.msra.mxu0 %v1718
    %3078 = vmatpush.msra.mxu0 %v1714
    %3079 = vmatpush.msra.mxu0 %v1710
    %3080 = vmatpush.msra.mxu0 %v1706
    %3081 = vmatmul.f32.gmra.mxu0 %v3040
    %v3082 = vpop.f32.mrf.mxu0
    %v3083 = vadd.f32 0.0, %v3082
    %3084 = vdwg.mxu0
    %3085 = vmatpush.msra.mxu0 %v1767
    %3086 = vmatpush.msra.mxu0 %v1763
    %3087 = vmatpush.msra.mxu0 %v1759
    %3088 = vmatpush.msra.mxu0 %v1755
    %3089 = vmatpush.msra.mxu0 %v1751
    %3090 = vmatpush.msra.mxu0 %v1747
    %3091 = vmatpush.msra.mxu0 %v1743
    %3092 = vmatpush.msra.mxu0 %v1739
    %3093 = vmatpush.msra.mxu0 %v1735
    %3094 = vmatpush.msra.mxu0 %v1731
    %3095 = vmatpush.msra.mxu0 %v1727
    %3096 = vmatpush.msra.mxu0 %v1723
    %3097 = vmatpush.msra.mxu0 %v1719
    %3098 = vmatpush.msra.mxu0 %v1715
    %3099 = vmatpush.msra.mxu0 %v1711
    %3100 = vmatpush.msra.mxu0 %v1707
    %3101 = vmatmul.f32.gmra.mxu0 %v3040
    %v3102 = vpop.f32.mrf.mxu0
    %v3103 = vadd.f32 0.0, %v3102
    %3104 = vdwg.mxu0
    %3105 = vmatpush.msra.mxu0 %v1768
    %3106 = vmatpush.msra.mxu0 %v1764
    %3107 = vmatpush.msra.mxu0 %v1760
    %3108 = vmatpush.msra.mxu0 %v1756
    %3109 = vmatpush.msra.mxu0 %v1752
    %3110 = vmatpush.msra.mxu0 %v1748
    %3111 = vmatpush.msra.mxu0 %v1744
    %3112 = vmatpush.msra.mxu0 %v1740
    %3113 = vmatpush.msra.mxu0 %v1736
    %3114 = vmatpush.msra.mxu0 %v1732
    %3115 = vmatpush.msra.mxu0 %v1728
    %3116 = vmatpush.msra.mxu0 %v1724
    %3117 = vmatpush.msra.mxu0 %v1720
    %3118 = vmatpush.msra.mxu0 %v1716
    %3119 = vmatpush.msra.mxu0 %v1712
    %3120 = vmatpush.msra.mxu0 %v1708
    %3121 = vmatmul.f32.gmra.mxu0 %v3040
    %v3122 = vpop.f32.mrf.mxu0
    %v3123 = vadd.f32 0.0, %v3122
    %3124 = vdwg.mxu0
    %v3125 = vadd.f32 %v3041, %v3063
    %v3126 = vadd.f32 %v3042, %v3083
    %v3127 = vadd.f32 %v3043, %v3103
    %v3128 = vadd.f32 %v3044, %v3123
    %v3129 = vxor.u32 %v3125, 2147483648
    %v3130 = vmul.f32 %v3129, 1.442695
    %v3131 = vpow.pop %v3130
    %v3132 = vadd.f32 %v3131, 1.0
    %v3133 = vrcp.pop %v3132
    %v3134 = vmul.f32 %v3132, %v3133
    %v3135 = vsub.f32 1.0, %v3134
    %v3136 = vmul.f32 %v3133, %v3135
    %v3137 = vadd.f32 %v3133, %v3136
    %vm3138 = vweird.f32 %v3132
    %vm3139 = vweird.f32 %v3133
    %vm3140 = vmor %vm3138, %vm3139
    %v3141 = vsel %vm3140, %v3133, %v3137
    %v3142 = vand.u32 2147483647, %v3132
    %vm3143 = vcmp.eq.f32.partialorder %v3142, 8.507059e+37
    %v3144 = vand.u32 %v3132, 2147483648
    %v3145 = vor.u32 1.1754944e-38, %v3144
    %v3146 = vsel %vm3143, %v3145, %v3141
    %v3147 = vmul.f32 1.0, %v3146
    %v3148 = vxor.u32 %v3126, 2147483648
    %v3149 = vmul.f32 %v3148, 1.442695
    %v3150 = vpow.pop %v3149
    %v3151 = vadd.f32 %v3150, 1.0
    %v3152 = vrcp.pop %v3151
    %v3153 = vmul.f32 %v3151, %v3152
    %v3154 = vsub.f32 1.0, %v3153
    %v3155 = vmul.f32 %v3152, %v3154
    %v3156 = vadd.f32 %v3152, %v3155
    %vm3157 = vweird.f32 %v3151
    %vm3158 = vweird.f32 %v3152
    %vm3159 = vmor %vm3157, %vm3158
    %v3160 = vsel %vm3159, %v3152, %v3156
    %v3161 = vand.u32 2147483647, %v3151
    %vm3162 = vcmp.eq.f32.partialorder %v3161, 8.507059e+37
    %v3163 = vand.u32 %v3151, 2147483648
    %v3164 = vor.u32 1.1754944e-38, %v3163
    %v3165 = vsel %vm3162, %v3164, %v3160
    %v3166 = vmul.f32 1.0, %v3165
    %v3167 = vtanh.pop %v3127
    %v3168 = vxor.u32 %v3128, 2147483648
    %v3169 = vmul.f32 %v3168, 1.442695
    %v3170 = vpow.pop %v3169
    %v3171 = vadd.f32 %v3170, 1.0
    %v3172 = vrcp.pop %v3171
    %v3173 = vmul.f32 %v3171, %v3172
    %v3174 = vsub.f32 1.0, %v3173
    %v3175 = vmul.f32 %v3172, %v3174
    %v3176 = vadd.f32 %v3172, %v3175
    %vm3177 = vweird.f32 %v3171
    %vm3178 = vweird.f32 %v3172
    %vm3179 = vmor %vm3177, %vm3178
    %v3180 = vsel %vm3179, %v3172, %v3176
    %v3181 = vand.u32 2147483647, %v3171
    %vm3182 = vcmp.eq.f32.partialorder %v3181, 8.507059e+37
    %v3183 = vand.u32 %v3171, 2147483648
    %v3184 = vor.u32 1.1754944e-38, %v3183
    %v3185 = vsel %vm3182, %v3184, %v3180
    %v3186 = vmul.f32 1.0, %v3185
    %v3187 = vmul.f32 %v3166, %v3038
    %v3188 = vmul.f32 %v3147, %v3167
    %v3189 = vadd.f32 %v3187, %v3188
    %v3190 = vtanh.pop %v3189
    %v3191 = vmul.f32 %v3186, %v3190
    %v3192 = vxor.u32 %v3191, 2147483648
    %v3193 = vmul.f32 %v3192, 1.442695
    %v3194 = vpow.pop %v3193
    %v3195 = vadd.f32 %v3194, 1.0
    %v3196 = vrcp.pop %v3195
    %v3197 = vmul.f32 %v3195, %v3196
    %v3198 = vsub.f32 1.0, %v3197
    %v3199 = vmul.f32 %v3196, %v3198
    %v3200 = vadd.f32 %v3196, %v3199
    %vm3201 = vweird.f32 %v3195
    %vm3202 = vweird.f32 %v3196
    %vm3203 = vmor %vm3201, %vm3202
    %v3204 = vsel %vm3203, %v3196, %v3200
    %v3205 = vand.u32 2147483647, %v3195
    %vm3206 = vcmp.eq.f32.partialorder %v3205, 8.507059e+37
    %v3207 = vand.u32 %v3195, 2147483648
    %v3208 = vor.u32 1.1754944e-38, %v3207
    %v3209 = vsel %vm3206, %v3208, %v3204
    %v3210 = vmul.f32 1.0, %v3209
    %3211 = vst [vmem:[#allocation12] sm:$0xff] %v3210
    // Predicated region
    $region34: #{tpu_custom_call.1} parent=1 // pred_check
      _
    $region35: #{tpu_custom_call.1} parent=1 // pred_check_branch
      %3213 = sbr.rel (0) target = $region37
    $region36: #{tpu_custom_call.1} parent=1 // pred_region
      %3215 = vsyncadd [#allocation6], 0
      %s3217 = sshll.u32 [#allocation12], 4
      %s3218 = int_to_ptr.vmem [resolvable:$true] %s3217
      %s3219 = sshll.u32 %s4, 4
      %s3220 = int_to_ptr.hbm [resolvable:$true] %s3219
      %3222 = dma.vmem_to_hbm [thread:$0]  %s3218, 128, %s3220, [#allocation6]
    $region37: #{tpu_custom_call.1} parent=1 // pred_fallthru
      _
    // Predicated region
    $region38: #{tpu_custom_call.1} parent=1 // pred_check
      _
    $region39: #{tpu_custom_call.1} parent=1 // pred_check_branch
      %3224 = sbr.rel (0) target = $region41
    $region40: #{tpu_custom_call.1} parent=1 // pred_region
      %3226 = dma.done [#allocation6], 128
    $region41: #{tpu_custom_call.1} parent=1 // pred_fallthru
      _
    %3227 = vsyncpa [#allocation5], 1
    %3228 = vsyncpa [#allocation8], 1
    %3229 = vsyncpa [#allocation11], 1
    %3230 = vsyncpa [#allocation6], 1

</llo_original>
